<compile_context>
chip_gen: v6e
topology: v6e:2x2x1
jax: 0.10.0
libtpu: 0.0.40
codegen_flags: <defaults>
</compile_context>

<pallas_src>
import jax
import jax.numpy as jnp
from jax.experimental import pallas as pl
from jax.experimental.pallas import tpu as pltpu  # noqa: F401

# Small, self-consistent versions of the module-level constants in DCGAN.py.
Z = 16             # latent size
IMG_CHANNELS = 3   # n_out
IMG_SIZE = 8       # feature_map
KSIZE = 4
BN_EPS = 1e-5

# (cin, cout, stride, padding, has_bn, activation) per ConvTranspose2d layer.
LAYER_CFG = (
    (Z,            IMG_SIZE * 8, 1, 0, True,  "relu"),
    (IMG_SIZE * 8, IMG_SIZE * 4, 2, 1, True,  "relu"),
    (IMG_SIZE * 4, IMG_SIZE * 2, 2, 1, True,  "relu"),
    (IMG_SIZE * 2, IMG_SIZE,     2, 1, True,  "relu"),
    (IMG_SIZE,     IMG_CHANNELS, 2, 1, False, "tanh"),
)


# ---------------------------------------------------------------- Pallas kernels
def _gemm_kernel(w_ref, x_ref, cols_ref):
    """First layer: cols = W_r @ z (no BN in front of it)."""
    acc = jnp.dot(w_ref[...], x_ref[...], preferred_element_type=jnp.float32)
    cols_ref[...] = acc.astype(cols_ref.dtype)


def _bn_relu_gemm_kernel(y_ref, gamma_ref, beta_ref, w_ref, cols_ref):
    """Fused BatchNorm(batch stats) + ReLU of the previous layer's pre-activation
    y, immediately followed by the next ConvTranspose GEMM.  y is read once and
    stays entirely in VMEM; the normalized activation never touches HBM."""
    y = y_ref[...]                                            # (C, M) f32
    m = y.shape[1]                                            # static
    mean = jnp.sum(y, axis=1, keepdims=True) * (1.0 / m)      # (C, 1)
    msq = jnp.sum(y * y, axis=1, keepdims=True) * (1.0 / m)
    var = jnp.maximum(msq - mean * mean, 0.0)                 # biased, as torch BN
    inv = gamma_ref[...] * jax.lax.rsqrt(var + BN_EPS)        # (C, 1)
    shift = beta_ref[...] - mean * inv
    x = jnp.maximum(y * inv + shift, 0.0).astype(jnp.bfloat16)
    acc = jnp.dot(w_ref[...], x, preferred_element_type=jnp.float32)
    cols_ref[...] = acc.astype(cols_ref.dtype)


def _pallas_gemm(wr, x):
    kk = wr.shape[0]
    m = x.shape[1]
    # Grid-less call: whole operands live in VMEM (largest ~400 KB), one step.
    return pl.pallas_call(
        _gemm_kernel,
        out_shape=jax.ShapeDtypeStruct((kk, m), jnp.float32),
    )(wr, x)


def _pallas_bn_relu_gemm(y, gamma, beta, wr):
    kk = wr.shape[0]
    m = y.shape[1]
    return pl.pallas_call(
        _bn_relu_gemm_kernel,
        out_shape=jax.ShapeDtypeStruct((kk, m), jnp.float32),
    )(y, gamma, beta, wr)


# ---------------------------------------------------------------- XLA col2im
def _col2im(cols, cout, n, h, w, stride, padding, ho, wo):
    """Overlap-add the per-tap GEMM results into the transposed-conv output.

    cols: (k*k*cout, n*h*w) with row index (kh*k + kw)*cout + co.
    Places cols[(kh,kw,co), (nb,hh,ww)] at output position
        (co, nb, hh*stride - padding + kh, ww*stride - padding + kw)
    and sums overlaps.  Implemented as 16 static dilated pads on an extended
    canvas (all pad amounts non-negative) + one final crop; XLA fuses it.
    Returns (cout, n*ho*wo) float32, channel-major.
    """
    k = KSIZE
    c6 = cols.reshape(k, k, cout, n, h, w).astype(jnp.float32)
    hc, wc = ho + 2 * padding, wo + 2 * padding
    dil_h, dil_w = (h - 1) * stride + 1, (w - 1) * stride + 1
    zero = jnp.zeros((), jnp.float32)
    acc = jnp.zeros((cout, n, hc, wc), jnp.float32)
    for kh in range(k):
        for kw in range(k):
            acc = acc + jax.lax.pad(
                c6[kh, kw], zero,
                ((0, 0, 0), (0, 0, 0),
                 (kh, hc - kh - dil_h, stride - 1),
                 (kw, wc - kw - dil_w, stride - 1)))
    y = acc[:, :, padding:padding + ho, padding:padding + wo]
    return y.reshape(cout, n * ho * wo)


# ---------------------------------------------------------------- parameters
def init_params(key):
    """PyTorch-layout params: ConvTranspose2d weight (Cin, Cout, k, k),
    BatchNorm2d gamma/beta (default init gamma=1, beta=0)."""
    params = []
    for cin, cout, _, _, has_bn, _ in LAYER_CFG:
        key, wk = jax.random.split(key)
        w = 0.02 * jax.random.normal(wk, (cin, cout, KSIZE, KSIZE), jnp.float32)
        gamma = jnp.ones((cout,), jnp.float32) if has_bn else None
        beta = jnp.zeros((cout,), jnp.float32) if has_bn else None
        params.append((w, gamma, beta))
    return params


def prepare_params(params):
    """One-time weight prep hoisted out of the forward path:
    W[ci, co, kh, kw] -> W_r[(kh*k + kw)*Cout + co, ci], cast to bf16."""
    prepped = []
    for (w, gamma, beta), (cin, cout, _, _, has_bn, _) in zip(params, LAYER_CFG):
        wr = (w.transpose(2, 3, 1, 0)
               .reshape(KSIZE * KSIZE * cout, cin)
               .astype(jnp.bfloat16))
        if has_bn:
            g = gamma.reshape(cout, 1).astype(jnp.float32)
            b = beta.reshape(cout, 1).astype(jnp.float32)
        else:
            g = b = None
        prepped.append((wr, g, b))
    return prepped


# ---------------------------------------------------------------- model
@jax.jit
def generator_forward(z, prepped):
    n = z.shape[0]
    # latent (N, Z, 1, 1) -> channel-major (Z, N); activations stay channel-
    # major (C, N*H*W) until the single NCHW transpose at the very end.
    x0 = z.reshape(n, Z).transpose(1, 0).astype(jnp.bfloat16)
    spatial = 1
    y = None
    for idx, (cin, cout, stride, padding, has_bn, act) in enumerate(LAYER_CFG):
        wr = prepped[idx][0]
        if idx == 0:
            cols = _pallas_gemm(wr, x0)
        else:
            g, b = prepped[idx - 1][1], prepped[idx - 1][2]
            cols = _pallas_bn_relu_gemm(y, g, b, wr)     # fused BN+ReLU+GEMM
        h = spatial
        ho = (h - 1) * stride - 2 * padding + KSIZE
        y = _col2im(cols, cout, n, h, h, stride, padding, ho, ho)
        spatial = ho
    out = jnp.tanh(y).reshape(IMG_CHANNELS, n, spatial, spatial)
    return out.transpose(1, 0, 2, 3)                      # NCHW, float32


# ---------------------------------------------------------------- reference
def _reference_forward(z, params):
    """Pure-XLA reference with the exact PyTorch module semantics
    (ConvTranspose2d bias=False; BatchNorm2d in train mode, biased variance)."""
    x = z
    for (w, gamma, beta), (cin, cout, stride, padding, has_bn, act) in zip(
            params, LAYER_CFG):
        pe = KSIZE - 1 - padding
        wf = jnp.flip(w, (2, 3)).transpose(1, 0, 2, 3)    # (Cout, Cin, k, k)
        x = jax.lax.conv_general_dilated(
            x, wf, window_strides=(1, 1), padding=[(pe, pe), (pe, pe)],
            lhs_dilation=(stride, stride),
            dimension_numbers=("NCHW", "OIHW", "NCHW"))
        if has_bn:
            mean = jnp.mean(x, axis=(0, 2, 3), keepdims=True)
            var = jnp.var(x, axis=(0, 2, 3), keepdims=True)
            xhat = (x - mean) * jax.lax.rsqrt(var + BN_EPS)
            x = gamma.reshape(1, -1, 1, 1) * xhat + beta.reshape(1, -1, 1, 1)
            x = jnp.maximum(x, 0.0)
        else:
            x = jnp.tanh(x)
    return x


if __name__ == "__main__":
    key = jax.random.PRNGKey(0)
    pkey, zkey = jax.random.split(key)
    params = init_params(pkey)
    prepped = prepare_params(params)
    z = jax.random.normal(zkey, (2, Z, 1, 1), jnp.float32)   # (N, Z, 1, 1)

    out = generator_forward(z, prepped)
    out = jax.block_until_ready(out)

    assert out.shape == (2, IMG_CHANNELS, 64, 64), out.shape
    assert bool(jnp.all(jnp.isfinite(out)))
    assert bool(jnp.all(jnp.abs(out) <= 1.0))                # tanh range

    # End-to-end numerical check vs a pure-XLA reference (f32); the Pallas path
    # uses bf16 matmul inputs, so allow a few % relative RMS.
    ref = _reference_forward(z, params)
    num = jnp.sqrt(jnp.mean((out - ref) ** 2))
    den = jnp.sqrt(jnp.mean(ref ** 2)) + 1e-12
    rel = float(num / den)
    assert rel < 5e-2, f"relative RMS error vs reference: {rel}"
    print("KERNEL_OK")
</pallas_src>

<mosaic_0001>
module attributes {stable_mosaic.version = 11 : i64} {
  func.func @_gemm_kernel(%arg0: memref<1024x16xbf16, #tpu.memory_space<vmem>>, %arg1: memref<16x2xbf16, #tpu.memory_space<vmem>>, %arg2: memref<1024x2xf32, #tpu.memory_space<vmem>>) attributes {dimension_semantics = [], scalar_prefetch = 0 : i64, scratch_operands = 0 : i64, tpu.core_type = #tpu.core_type<tc>} {
    %c0 = arith.constant 0 : index
    %c0_0 = arith.constant 0 : index
    %0 = vector.load %arg0[%c0, %c0_0] : memref<1024x16xbf16, #tpu.memory_space<vmem>>, vector<1024x16xbf16>
    %c0_1 = arith.constant 0 : index
    %c0_2 = arith.constant 0 : index
    %1 = vector.load %arg1[%c0_1, %c0_2] : memref<16x2xbf16, #tpu.memory_space<vmem>>, vector<16x2xbf16>
    %cst = arith.constant dense<0.000000e+00> : vector<1024x2xf32>
    %2 = tpu.matmul %0, %1, %cst {dimension_numbers = #tpu.dot_dimension_numbers<[1], [0], [0], [1], [0, 0, 1, 1], [], []>} : vector<1024x16xbf16>, vector<16x2xbf16>, vector<1024x2xf32> -> vector<1024x2xf32>
    %c0_3 = arith.constant 0 : index
    %c0_4 = arith.constant 0 : index
    %3 = vector.load %arg2[%c0_3, %c0_4] : memref<1024x2xf32, #tpu.memory_space<vmem>>, vector<1024x2xf32>
    tpu.vector_store %arg2[%c0_3, %c0_4], %2 {strides = array<i32>} : memref<1024x2xf32, #tpu.memory_space<vmem>>, vector<1024x2xf32>,
    return
  }
}

module attributes {stable_mosaic.version = 11 : i64} {
  func.func @_bn_relu_gemm_kernel(%arg0: memref<64x32xf32, #tpu.memory_space<vmem>>, %arg1: memref<64x1xf32, #tpu.memory_space<vmem>>, %arg2: memref<64x1xf32, #tpu.memory_space<vmem>>, %arg3: memref<512x64xbf16, #tpu.memory_space<vmem>>, %arg4: memref<512x32xf32, #tpu.memory_space<vmem>>) attributes {dimension_semantics = [], scalar_prefetch = 0 : i64, scratch_operands = 0 : i64, tpu.core_type = #tpu.core_type<tc>} {
    %c0 = arith.constant 0 : index
    %c0_0 = arith.constant 0 : index
    %0 = vector.load %arg0[%c0, %c0_0] : memref<64x32xf32, #tpu.memory_space<vmem>>, vector<64x32xf32>
    %cst = arith.constant dense<0.000000e+00> : vector<64xf32>
    %1 = vector.multi_reduction <add>, %0, %cst [1] : vector<64x32xf32> to vector<64xf32>
    %2 = vector.shape_cast %1 : vector<64xf32> to vector<64x1xf32>
    %cst_1 = arith.constant 3.125000e-02 : f32
    %3 = vector.broadcast %cst_1 : f32 to vector<64x1xf32>
    %4 = arith.mulf %2, %3 : vector<64x1xf32>
    %5 = arith.mulf %0, %0 : vector<64x32xf32>
    %cst_2 = arith.constant dense<0.000000e+00> : vector<64xf32>
    %6 = vector.multi_reduction <add>, %5, %cst_2 [1] : vector<64x32xf32> to vector<64xf32>
    %7 = vector.shape_cast %6 : vector<64xf32> to vector<64x1xf32>
    %cst_3 = arith.constant 3.125000e-02 : f32
    %8 = vector.broadcast %cst_3 : f32 to vector<64x1xf32>
    %9 = arith.mulf %7, %8 : vector<64x1xf32>
    %10 = arith.mulf %4, %4 : vector<64x1xf32>
    %11 = arith.subf %9, %10 : vector<64x1xf32>
    %cst_4 = arith.constant 0.000000e+00 : f32
    %12 = vector.broadcast %cst_4 : f32 to vector<64x1xf32>
    %13 = arith.maximumf %11, %12 : vector<64x1xf32>
    %c0_5 = arith.constant 0 : index
    %c0_6 = arith.constant 0 : index
    %14 = vector.load %arg1[%c0_5, %c0_6] : memref<64x1xf32, #tpu.memory_space<vmem>>, vector<64x1xf32>
    %cst_7 = arith.constant 9.99999974E-6 : f32
    %15 = vector.broadcast %cst_7 : f32 to vector<64x1xf32>
    %16 = arith.addf %13, %15 : vector<64x1xf32>
    %17 = math.rsqrt %16 : vector<64x1xf32>
    %18 = arith.mulf %14, %17 : vector<64x1xf32>
    %c0_8 = arith.constant 0 : index
    %c0_9 = arith.constant 0 : index
    %19 = vector.load %arg2[%c0_8, %c0_9] : memref<64x1xf32, #tpu.memory_space<vmem>>, vector<64x1xf32>
    %20 = arith.mulf %4, %18 : vector<64x1xf32>
    %21 = arith.subf %19, %20 : vector<64x1xf32>
    %22 = vector.broadcast %18 : vector<64x1xf32> to vector<64x32xf32>
    %23 = arith.mulf %0, %22 : vector<64x32xf32>
    %24 = vector.broadcast %21 : vector<64x1xf32> to vector<64x32xf32>
    %25 = arith.addf %23, %24 : vector<64x32xf32>
    %cst_10 = arith.constant 0.000000e+00 : f32
    %26 = vector.broadcast %cst_10 : f32 to vector<64x32xf32>
    %27 = arith.maximumf %25, %26 : vector<64x32xf32>
    %28 = arith.truncf %27 : vector<64x32xf32> to vector<64x32xbf16>
    %c0_11 = arith.constant 0 : index
    %c0_12 = arith.constant 0 : index
    %29 = vector.load %arg3[%c0_11, %c0_12] : memref<512x64xbf16, #tpu.memory_space<vmem>>, vector<512x64xbf16>
    %cst_13 = arith.constant dense<0.000000e+00> : vector<512x32xf32>
    %30 = tpu.matmul %29, %28, %cst_13 {dimension_numbers = #tpu.dot_dimension_numbers<[1], [0], [0], [1], [0, 0, 1, 1], [], []>} : vector<512x64xbf16>, vector<64x32xbf16>, vector<512x32xf32> -> vector<512x32xf32>
    %c0_14 = arith.constant 0 : index
    %c0_15 = arith.constant 0 : index
    %31 = vector.load %arg4[%c0_14, %c0_15] : memref<512x32xf32, #tpu.memory_space<vmem>>, vector<512x32xf32>
    tpu.vector_store %arg4[%c0_14, %c0_15], %30 {strides = array<i32>} : memref<512x32xf32, #tpu.memory_space<vmem>>, vector<512x32xf32>,
    return
  }
}

module attributes {stable_mosaic.version = 11 : i64} {
  func.func @_bn_relu_gemm_kernel(%arg0: memref<32x128xf32, #tpu.memory_space<vmem>>, %arg1: memref<32x1xf32, #tpu.memory_space<vmem>>, %arg2: memref<32x1xf32, #tpu.memory_space<vmem>>, %arg3: memref<256x32xbf16, #tpu.memory_space<vmem>>, %arg4: memref<256x128xf32, #tpu.memory_space<vmem>>) attributes {dimension_semantics = [], scalar_prefetch = 0 : i64, scratch_operands = 0 : i64, tpu.core_type = #tpu.core_type<tc>} {
    %c0 = arith.constant 0 : index
    %c0_0 = arith.constant 0 : index
    %0 = vector.load %arg0[%c0, %c0_0] : memref<32x128xf32, #tpu.memory_space<vmem>>, vector<32x128xf32>
    %cst = arith.constant dense<0.000000e+00> : vector<32xf32>
    %1 = vector.multi_reduction <add>, %0, %cst [1] : vector<32x128xf32> to vector<32xf32>
    %2 = vector.shape_cast %1 : vector<32xf32> to vector<32x1xf32>
    %cst_1 = arith.constant 7.812500e-03 : f32
    %3 = vector.broadcast %cst_1 : f32 to vector<32x1xf32>
    %4 = arith.mulf %2, %3 : vector<32x1xf32>
    %5 = arith.mulf %0, %0 : vector<32x128xf32>
    %cst_2 = arith.constant dense<0.000000e+00> : vector<32xf32>
    %6 = vector.multi_reduction <add>, %5, %cst_2 [1] : vector<32x128xf32> to vector<32xf32>
    %7 = vector.shape_cast %6 : vector<32xf32> to vector<32x1xf32>
    %cst_3 = arith.constant 7.812500e-03 : f32
    %8 = vector.broadcast %cst_3 : f32 to vector<32x1xf32>
    %9 = arith.mulf %7, %8 : vector<32x1xf32>
    %10 = arith.mulf %4, %4 : vector<32x1xf32>
    %11 = arith.subf %9, %10 : vector<32x1xf32>
    %cst_4 = arith.constant 0.000000e+00 : f32
    %12 = vector.broadcast %cst_4 : f32 to vector<32x1xf32>
    %13 = arith.maximumf %11, %12 : vector<32x1xf32>
    %c0_5 = arith.constant 0 : index
    %c0_6 = arith.constant 0 : index
    %14 = vector.load %arg1[%c0_5, %c0_6] : memref<32x1xf32, #tpu.memory_space<vmem>>, vector<32x1xf32>
    %cst_7 = arith.constant 9.99999974E-6 : f32
    %15 = vector.broadcast %cst_7 : f32 to vector<32x1xf32>
    %16 = arith.addf %13, %15 : vector<32x1xf32>
    %17 = math.rsqrt %16 : vector<32x1xf32>
    %18 = arith.mulf %14, %17 : vector<32x1xf32>
    %c0_8 = arith.constant 0 : index
    %c0_9 = arith.constant 0 : index
    %19 = vector.load %arg2[%c0_8, %c0_9] : memref<32x1xf32, #tpu.memory_space<vmem>>, vector<32x1xf32>
    %20 = arith.mulf %4, %18 : vector<32x1xf32>
    %21 = arith.subf %19, %20 : vector<32x1xf32>
    %22 = vector.broadcast %18 : vector<32x1xf32> to vector<32x128xf32>
    %23 = arith.mulf %0, %22 : vector<32x128xf32>
    %24 = vector.broadcast %21 : vector<32x1xf32> to vector<32x128xf32>
    %25 = arith.addf %23, %24 : vector<32x128xf32>
    %cst_10 = arith.constant 0.000000e+00 : f32
    %26 = vector.broadcast %cst_10 : f32 to vector<32x128xf32>
    %27 = arith.maximumf %25, %26 : vector<32x128xf32>
    %28 = arith.truncf %27 : vector<32x128xf32> to vector<32x128xbf16>
    %c0_11 = arith.constant 0 : index
    %c0_12 = arith.constant 0 : index
    %29 = vector.load %arg3[%c0_11, %c0_12] : memref<256x32xbf16, #tpu.memory_space<vmem>>, vector<256x32xbf16>
    %cst_13 = arith.constant dense<0.000000e+00> : vector<256x128xf32>
    %30 = tpu.matmul %29, %28, %cst_13 {dimension_numbers = #tpu.dot_dimension_numbers<[1], [0], [0], [1], [0, 0, 1, 1], [], []>} : vector<256x32xbf16>, vector<32x128xbf16>, vector<256x128xf32> -> vector<256x128xf32>
    %c0_14 = arith.constant 0 : index
    %c0_15 = arith.constant 0 : index
    %31 = vector.load %arg4[%c0_14, %c0_15] : memref<256x128xf32, #tpu.memory_space<vmem>>, vector<256x128xf32>
    tpu.vector_store %arg4[%c0_14, %c0_15], %30 {strides = array<i32>} : memref<256x128xf32, #tpu.memory_space<vmem>>, vector<256x128xf32>,
    return
  }
}

module attributes {stable_mosaic.version = 11 : i64} {
  func.func @_bn_relu_gemm_kernel(%arg0: memref<16x512xf32, #tpu.memory_space<vmem>>, %arg1: memref<16x1xf32, #tpu.memory_space<vmem>>, %arg2: memref<16x1xf32, #tpu.memory_space<vmem>>, %arg3: memref<128x16xbf16, #tpu.memory_space<vmem>>, %arg4: memref<128x512xf32, #tpu.memory_space<vmem>>) attributes {dimension_semantics = [], scalar_prefetch = 0 : i64, scratch_operands = 0 : i64, tpu.core_type = #tpu.core_type<tc>} {
    %c0 = arith.constant 0 : index
    %c0_0 = arith.constant 0 : index
    %0 = vector.load %arg0[%c0, %c0_0] : memref<16x512xf32, #tpu.memory_space<vmem>>, vector<16x512xf32>
    %cst = arith.constant dense<0.000000e+00> : vector<16xf32>
    %1 = vector.multi_reduction <add>, %0, %cst [1] : vector<16x512xf32> to vector<16xf32>
    %2 = vector.shape_cast %1 : vector<16xf32> to vector<16x1xf32>
    %cst_1 = arith.constant 0.001953125 : f32
    %3 = vector.broadcast %cst_1 : f32 to vector<16x1xf32>
    %4 = arith.mulf %2, %3 : vector<16x1xf32>
    %5 = arith.mulf %0, %0 : vector<16x512xf32>
    %cst_2 = arith.constant dense<0.000000e+00> : vector<16xf32>
    %6 = vector.multi_reduction <add>, %5, %cst_2 [1] : vector<16x512xf32> to vector<16xf32>
    %7 = vector.shape_cast %6 : vector<16xf32> to vector<16x1xf32>
    %cst_3 = arith.constant 0.001953125 : f32
    %8 = vector.broadcast %cst_3 : f32 to vector<16x1xf32>
    %9 = arith.mulf %7, %8 : vector<16x1xf32>
    %10 = arith.mulf %4, %4 : vector<16x1xf32>
    %11 = arith.subf %9, %10 : vector<16x1xf32>
    %cst_4 = arith.constant 0.000000e+00 : f32
    %12 = vector.broadcast %cst_4 : f32 to vector<16x1xf32>
    %13 = arith.maximumf %11, %12 : vector<16x1xf32>
    %c0_5 = arith.constant 0 : index
    %c0_6 = arith.constant 0 : index
    %14 = vector.load %arg1[%c0_5, %c0_6] : memref<16x1xf32, #tpu.memory_space<vmem>>, vector<16x1xf32>
    %cst_7 = arith.constant 9.99999974E-6 : f32
    %15 = vector.broadcast %cst_7 : f32 to vector<16x1xf32>
    %16 = arith.addf %13, %15 : vector<16x1xf32>
    %17 = math.rsqrt %16 : vector<16x1xf32>
    %18 = arith.mulf %14, %17 : vector<16x1xf32>
    %c0_8 = arith.constant 0 : index
    %c0_9 = arith.constant 0 : index
    %19 = vector.load %arg2[%c0_8, %c0_9] : memref<16x1xf32, #tpu.memory_space<vmem>>, vector<16x1xf32>
    %20 = arith.mulf %4, %18 : vector<16x1xf32>
    %21 = arith.subf %19, %20 : vector<16x1xf32>
    %22 = vector.broadcast %18 : vector<16x1xf32> to vector<16x512xf32>
    %23 = arith.mulf %0, %22 : vector<16x512xf32>
    %24 = vector.broadcast %21 : vector<16x1xf32> to vector<16x512xf32>
    %25 = arith.addf %23, %24 : vector<16x512xf32>
    %cst_10 = arith.constant 0.000000e+00 : f32
    %26 = vector.broadcast %cst_10 : f32 to vector<16x512xf32>
    %27 = arith.maximumf %25, %26 : vector<16x512xf32>
    %28 = arith.truncf %27 : vector<16x512xf32> to vector<16x512xbf16>
    %c0_11 = arith.constant 0 : index
    %c0_12 = arith.constant 0 : index
    %29 = vector.load %arg3[%c0_11, %c0_12] : memref<128x16xbf16, #tpu.memory_space<vmem>>, vector<128x16xbf16>
    %cst_13 = arith.constant dense<0.000000e+00> : vector<128x512xf32>
    %30 = tpu.matmul %29, %28, %cst_13 {dimension_numbers = #tpu.dot_dimension_numbers<[1], [0], [0], [1], [0, 0, 1, 1], [], []>} : vector<128x16xbf16>, vector<16x512xbf16>, vector<128x512xf32> -> vector<128x512xf32>
    %c0_14 = arith.constant 0 : index
    %c0_15 = arith.constant 0 : index
    %31 = vector.load %arg4[%c0_14, %c0_15] : memref<128x512xf32, #tpu.memory_space<vmem>>, vector<128x512xf32>
    tpu.vector_store %arg4[%c0_14, %c0_15], %30 {strides = array<i32>} : memref<128x512xf32, #tpu.memory_space<vmem>>, vector<128x512xf32>,
    return
  }
}

module attributes {stable_mosaic.version = 11 : i64} {
  func.func @_bn_relu_gemm_kernel(%arg0: memref<8x2048xf32, #tpu.memory_space<vmem>>, %arg1: memref<8x1xf32, #tpu.memory_space<vmem>>, %arg2: memref<8x1xf32, #tpu.memory_space<vmem>>, %arg3: memref<48x8xbf16, #tpu.memory_space<vmem>>, %arg4: memref<48x2048xf32, #tpu.memory_space<vmem>>) attributes {dimension_semantics = [], scalar_prefetch = 0 : i64, scratch_operands = 0 : i64, tpu.core_type = #tpu.core_type<tc>} {
    %c0 = arith.constant 0 : index
    %c0_0 = arith.constant 0 : index
    %0 = vector.load %arg0[%c0, %c0_0] : memref<8x2048xf32, #tpu.memory_space<vmem>>, vector<8x2048xf32>
    %cst = arith.constant dense<0.000000e+00> : vector<8xf32>
    %1 = vector.multi_reduction <add>, %0, %cst [1] : vector<8x2048xf32> to vector<8xf32>
    %2 = vector.shape_cast %1 : vector<8xf32> to vector<8x1xf32>
    %cst_1 = arith.constant 4.8828125E-4 : f32
    %3 = vector.broadcast %cst_1 : f32 to vector<8x1xf32>
    %4 = arith.mulf %2, %3 : vector<8x1xf32>
    %5 = arith.mulf %0, %0 : vector<8x2048xf32>
    %cst_2 = arith.constant dense<0.000000e+00> : vector<8xf32>
    %6 = vector.multi_reduction <add>, %5, %cst_2 [1] : vector<8x2048xf32> to vector<8xf32>
    %7 = vector.shape_cast %6 : vector<8xf32> to vector<8x1xf32>
    %cst_3 = arith.constant 4.8828125E-4 : f32
    %8 = vector.broadcast %cst_3 : f32 to vector<8x1xf32>
    %9 = arith.mulf %7, %8 : vector<8x1xf32>
    %10 = arith.mulf %4, %4 : vector<8x1xf32>
    %11 = arith.subf %9, %10 : vector<8x1xf32>
    %cst_4 = arith.constant 0.000000e+00 : f32
    %12 = vector.broadcast %cst_4 : f32 to vector<8x1xf32>
    %13 = arith.maximumf %11, %12 : vector<8x1xf32>
    %c0_5 = arith.constant 0 : index
    %c0_6 = arith.constant 0 : index
    %14 = vector.load %arg1[%c0_5, %c0_6] : memref<8x1xf32, #tpu.memory_space<vmem>>, vector<8x1xf32>
    %cst_7 = arith.constant 9.99999974E-6 : f32
    %15 = vector.broadcast %cst_7 : f32 to vector<8x1xf32>
    %16 = arith.addf %13, %15 : vector<8x1xf32>
    %17 = math.rsqrt %16 : vector<8x1xf32>
    %18 = arith.mulf %14, %17 : vector<8x1xf32>
    %c0_8 = arith.constant 0 : index
    %c0_9 = arith.constant 0 : index
    %19 = vector.load %arg2[%c0_8, %c0_9] : memref<8x1xf32, #tpu.memory_space<vmem>>, vector<8x1xf32>
    %20 = arith.mulf %4, %18 : vector<8x1xf32>
    %21 = arith.subf %19, %20 : vector<8x1xf32>
    %22 = vector.broadcast %18 : vector<8x1xf32> to vector<8x2048xf32>
    %23 = arith.mulf %0, %22 : vector<8x2048xf32>
    %24 = vector.broadcast %21 : vector<8x1xf32> to vector<8x2048xf32>
    %25 = arith.addf %23, %24 : vector<8x2048xf32>
    %cst_10 = arith.constant 0.000000e+00 : f32
    %26 = vector.broadcast %cst_10 : f32 to vector<8x2048xf32>
    %27 = arith.maximumf %25, %26 : vector<8x2048xf32>
    %28 = arith.truncf %27 : vector<8x2048xf32> to vector<8x2048xbf16>
    %c0_11 = arith.constant 0 : index
    %c0_12 = arith.constant 0 : index
    %29 = vector.load %arg3[%c0_11, %c0_12] : memref<48x8xbf16, #tpu.memory_space<vmem>>, vector<48x8xbf16>
    %cst_13 = arith.constant dense<0.000000e+00> : vector<48x2048xf32>
    %30 = tpu.matmul %29, %28, %cst_13 {dimension_numbers = #tpu.dot_dimension_numbers<[1], [0], [0], [1], [0, 0, 1, 1], [], []>} : vector<48x8xbf16>, vector<8x2048xbf16>, vector<48x2048xf32> -> vector<48x2048xf32>
    %c0_14 = arith.constant 0 : index
    %c0_15 = arith.constant 0 : index
    %31 = vector.load %arg4[%c0_14, %c0_15] : memref<48x2048xf32, #tpu.memory_space<vmem>>, vector<48x2048xf32>
    tpu.vector_store %arg4[%c0_14, %c0_15], %30 {strides = array<i32>} : memref<48x2048xf32, #tpu.memory_space<vmem>>, vector<48x2048xf32>,
    return
  }
}

</mosaic_0001>

<llo_original>
// kernel: generator_forward.5
$region0: #{generator_forward.5}
  #allocation0 [shape = 'u32[]', space=smem, size = 0x4, offset = 0x4, fixed_abs, tag = 'smem constant byte address 0x4 - core index']
  #allocation1 [shape = 'u32[144,128]{1,0:T(1,128)}', space=vmem, size = 0x12000, scoped, tag = 'internal scratch']
  %s0 = inlined_call_operand.vmem [shape: bf16[1024,16], index: 0, kind: input, shape index: {}]
  %s1 = inlined_call_operand.vmem [shape: bf16[16,2], index: 1, kind: input, shape index: {}]
  %s2 = inlined_call_operand.vmem [shape: f32[1024,2], index: 2, kind: output, shape index: {}]
  %s3 = sld [smem:[#allocation0]]
  $region18: #{generator_forward.5} parent=0
    _
  %s5 = ssub.s32 1, %s3
  %s6 = scalar_select 0, %s5, %s3
  // Predicated region
  $region2: #{generator_forward.5} parent=0 // pred_check
    _
  $region3: #{generator_forward.5} parent=0 // pred_check_branch
    %8 = sbr.rel (0) target = $region5
  $region4: #{generator_forward.5} parent=0 // pred_region
    _
  $region5: #{generator_forward.5} parent=0 // pred_fallthru
    _
  // Predicated region
  $region6: #{generator_forward.5} parent=0 // pred_check
    _
  $region7: #{generator_forward.5} parent=0 // pred_check_branch
    %10 = sbr.rel (0) target = $region9
  $region8: #{generator_forward.5} parent=0 // pred_region
    _
  $region9: #{generator_forward.5} parent=0 // pred_fallthru
    _
  %v12 = vld [vmem:[%s0] sm:$0xf]
  %v13 = vld [vmem:[%s0 + $0x4] sm:$0xf]
  %v14 = vld [vmem:[%s0 + $0x8] sm:$0xf]
  %v15 = vld [vmem:[%s0 + $0xc] sm:$0xf]
  %v16 = vld [vmem:[%s0 + $0x10] sm:$0xf]
  %v17 = vld [vmem:[%s0 + $0x14] sm:$0xf]
  %v18 = vld [vmem:[%s0 + $0x18] sm:$0xf]
  %v19 = vld [vmem:[%s0 + $0x1c] sm:$0xf]
  %v20 = vld [vmem:[%s0 + $0x20] sm:$0xf]
  %v21 = vld [vmem:[%s0 + $0x24] sm:$0xf]
  %v22 = vld [vmem:[%s0 + $0x28] sm:$0xf]
  %v23 = vld [vmem:[%s0 + $0x2c] sm:$0xf]
  %v24 = vld [vmem:[%s0 + $0x30] sm:$0xf]
  %v25 = vld [vmem:[%s0 + $0x34] sm:$0xf]
  %v26 = vld [vmem:[%s0 + $0x38] sm:$0xf]
  %v27 = vld [vmem:[%s0 + $0x3c] sm:$0xf]
  %v28 = vld [vmem:[%s0 + $0x40] sm:$0xf]
  %v29 = vld [vmem:[%s0 + $0x44] sm:$0xf]
  %v30 = vld [vmem:[%s0 + $0x48] sm:$0xf]
  %v31 = vld [vmem:[%s0 + $0x4c] sm:$0xf]
  %v32 = vld [vmem:[%s0 + $0x50] sm:$0xf]
  %v33 = vld [vmem:[%s0 + $0x54] sm:$0xf]
  %v34 = vld [vmem:[%s0 + $0x58] sm:$0xf]
  %v35 = vld [vmem:[%s0 + $0x5c] sm:$0xf]
  %v36 = vld [vmem:[%s0 + $0x60] sm:$0xf]
  %v37 = vld [vmem:[%s0 + $0x64] sm:$0xf]
  %v38 = vld [vmem:[%s0 + $0x68] sm:$0xf]
  %v39 = vld [vmem:[%s0 + $0x6c] sm:$0xf]
  %v40 = vld [vmem:[%s0 + $0x70] sm:$0xf]
  %v41 = vld [vmem:[%s0 + $0x74] sm:$0xf]
  %v42 = vld [vmem:[%s0 + $0x78] sm:$0xf]
  %v43 = vld [vmem:[%s0 + $0x7c] sm:$0xf]
  %v44 = vld [vmem:[%s0 + $0x80] sm:$0xf]
  %v45 = vld [vmem:[%s0 + $0x84] sm:$0xf]
  %v46 = vld [vmem:[%s0 + $0x88] sm:$0xf]
  %v47 = vld [vmem:[%s0 + $0x8c] sm:$0xf]
  %v48 = vld [vmem:[%s0 + $0x90] sm:$0xf]
  %v49 = vld [vmem:[%s0 + $0x94] sm:$0xf]
  %v50 = vld [vmem:[%s0 + $0x98] sm:$0xf]
  %v51 = vld [vmem:[%s0 + $0x9c] sm:$0xf]
  %v52 = vld [vmem:[%s0 + $0xa0] sm:$0xf]
  %v53 = vld [vmem:[%s0 + $0xa4] sm:$0xf]
  %v54 = vld [vmem:[%s0 + $0xa8] sm:$0xf]
  %v55 = vld [vmem:[%s0 + $0xac] sm:$0xf]
  %v56 = vld [vmem:[%s0 + $0xb0] sm:$0xf]
  %v57 = vld [vmem:[%s0 + $0xb4] sm:$0xf]
  %v58 = vld [vmem:[%s0 + $0xb8] sm:$0xf]
  %v59 = vld [vmem:[%s0 + $0xbc] sm:$0xf]
  %v60 = vld [vmem:[%s0 + $0xc0] sm:$0xf]
  %v61 = vld [vmem:[%s0 + $0xc4] sm:$0xf]
  %v62 = vld [vmem:[%s0 + $0xc8] sm:$0xf]
  %v63 = vld [vmem:[%s0 + $0xcc] sm:$0xf]
  %v64 = vld [vmem:[%s0 + $0xd0] sm:$0xf]
  %v65 = vld [vmem:[%s0 + $0xd4] sm:$0xf]
  %v66 = vld [vmem:[%s0 + $0xd8] sm:$0xf]
  %v67 = vld [vmem:[%s0 + $0xdc] sm:$0xf]
  %v68 = vld [vmem:[%s0 + $0xe0] sm:$0xf]
  %v69 = vld [vmem:[%s0 + $0xe4] sm:$0xf]
  %v70 = vld [vmem:[%s0 + $0xe8] sm:$0xf]
  %v71 = vld [vmem:[%s0 + $0xec] sm:$0xf]
  %v72 = vld [vmem:[%s0 + $0xf0] sm:$0xf]
  %v73 = vld [vmem:[%s0 + $0xf4] sm:$0xf]
  %v74 = vld [vmem:[%s0 + $0xf8] sm:$0xf]
  %v75 = vld [vmem:[%s0 + $0xfc] sm:$0xf]
  %v76 = vld [vmem:[%s0 + $0x100] sm:$0xf]
  %v77 = vld [vmem:[%s0 + $0x104] sm:$0xf]
  %v78 = vld [vmem:[%s0 + $0x108] sm:$0xf]
  %v79 = vld [vmem:[%s0 + $0x10c] sm:$0xf]
  %v80 = vld [vmem:[%s0 + $0x110] sm:$0xf]
  %v81 = vld [vmem:[%s0 + $0x114] sm:$0xf]
  %v82 = vld [vmem:[%s0 + $0x118] sm:$0xf]
  %v83 = vld [vmem:[%s0 + $0x11c] sm:$0xf]
  %v84 = vld [vmem:[%s0 + $0x120] sm:$0xf]
  %v85 = vld [vmem:[%s0 + $0x124] sm:$0xf]
  %v86 = vld [vmem:[%s0 + $0x128] sm:$0xf]
  %v87 = vld [vmem:[%s0 + $0x12c] sm:$0xf]
  %v88 = vld [vmem:[%s0 + $0x130] sm:$0xf]
  %v89 = vld [vmem:[%s0 + $0x134] sm:$0xf]
  %v90 = vld [vmem:[%s0 + $0x138] sm:$0xf]
  %v91 = vld [vmem:[%s0 + $0x13c] sm:$0xf]
  %v92 = vld [vmem:[%s0 + $0x140] sm:$0xf]
  %v93 = vld [vmem:[%s0 + $0x144] sm:$0xf]
  %v94 = vld [vmem:[%s0 + $0x148] sm:$0xf]
  %v95 = vld [vmem:[%s0 + $0x14c] sm:$0xf]
  %v96 = vld [vmem:[%s0 + $0x150] sm:$0xf]
  %v97 = vld [vmem:[%s0 + $0x154] sm:$0xf]
  %v98 = vld [vmem:[%s0 + $0x158] sm:$0xf]
  %v99 = vld [vmem:[%s0 + $0x15c] sm:$0xf]
  %v100 = vld [vmem:[%s0 + $0x160] sm:$0xf]
  %v101 = vld [vmem:[%s0 + $0x164] sm:$0xf]
  %v102 = vld [vmem:[%s0 + $0x168] sm:$0xf]
  %v103 = vld [vmem:[%s0 + $0x16c] sm:$0xf]
  %v104 = vld [vmem:[%s0 + $0x170] sm:$0xf]
  %v105 = vld [vmem:[%s0 + $0x174] sm:$0xf]
  %v106 = vld [vmem:[%s0 + $0x178] sm:$0xf]
  %v107 = vld [vmem:[%s0 + $0x17c] sm:$0xf]
  %v108 = vld [vmem:[%s0 + $0x180] sm:$0xf]
  %v109 = vld [vmem:[%s0 + $0x184] sm:$0xf]
  %v110 = vld [vmem:[%s0 + $0x188] sm:$0xf]
  %v111 = vld [vmem:[%s0 + $0x18c] sm:$0xf]
  %v112 = vld [vmem:[%s0 + $0x190] sm:$0xf]
  %v113 = vld [vmem:[%s0 + $0x194] sm:$0xf]
  %v114 = vld [vmem:[%s0 + $0x198] sm:$0xf]
  %v115 = vld [vmem:[%s0 + $0x19c] sm:$0xf]
  %v116 = vld [vmem:[%s0 + $0x1a0] sm:$0xf]
  %v117 = vld [vmem:[%s0 + $0x1a4] sm:$0xf]
  %v118 = vld [vmem:[%s0 + $0x1a8] sm:$0xf]
  %v119 = vld [vmem:[%s0 + $0x1ac] sm:$0xf]
  %v120 = vld [vmem:[%s0 + $0x1b0] sm:$0xf]
  %v121 = vld [vmem:[%s0 + $0x1b4] sm:$0xf]
  %v122 = vld [vmem:[%s0 + $0x1b8] sm:$0xf]
  %v123 = vld [vmem:[%s0 + $0x1bc] sm:$0xf]
  %v124 = vld [vmem:[%s0 + $0x1c0] sm:$0xf]
  %v125 = vld [vmem:[%s0 + $0x1c4] sm:$0xf]
  %v126 = vld [vmem:[%s0 + $0x1c8] sm:$0xf]
  %v127 = vld [vmem:[%s0 + $0x1cc] sm:$0xf]
  %v128 = vld [vmem:[%s0 + $0x1d0] sm:$0xf]
  %v129 = vld [vmem:[%s0 + $0x1d4] sm:$0xf]
  %v130 = vld [vmem:[%s0 + $0x1d8] sm:$0xf]
  %v131 = vld [vmem:[%s0 + $0x1dc] sm:$0xf]
  %v132 = vld [vmem:[%s0 + $0x1e0] sm:$0xf]
  %v133 = vld [vmem:[%s0 + $0x1e4] sm:$0xf]
  %v134 = vld [vmem:[%s0 + $0x1e8] sm:$0xf]
  %v135 = vld [vmem:[%s0 + $0x1ec] sm:$0xf]
  %v136 = vld [vmem:[%s0 + $0x1f0] sm:$0xf]
  %v137 = vld [vmem:[%s0 + $0x1f4] sm:$0xf]
  %v138 = vld [vmem:[%s0 + $0x1f8] sm:$0xf]
  %v139 = vld [vmem:[%s0 + $0x1fc] sm:$0xf]
  %v140 = vld [vmem:[%s1] sm:$0xf]
  %v141 = vld [vmem:[%s1 + $0x4] sm:$0xf]
  %v270 = vunpack.c.l.b16 %v12
  %v271 = vunpack.c.l.b16 %v13
  %v272 = vunpack.c.l.b16 %v14
  %v273 = vunpack.c.l.b16 %v15
  %v274 = vunpack.c.l.b16 %v16
  %v275 = vunpack.c.l.b16 %v17
  %v276 = vunpack.c.l.b16 %v18
  %v277 = vunpack.c.l.b16 %v19
  %v278 = vunpack.c.l.b16 %v20
  %v279 = vunpack.c.l.b16 %v21
  %v280 = vunpack.c.l.b16 %v22
  %v281 = vunpack.c.l.b16 %v23
  %v282 = vunpack.c.l.b16 %v24
  %v283 = vunpack.c.l.b16 %v25
  %v284 = vunpack.c.l.b16 %v26
  %v285 = vunpack.c.l.b16 %v27
  %v286 = vunpack.c.l.b16 %v28
  %v287 = vunpack.c.l.b16 %v29
  %v288 = vunpack.c.l.b16 %v30
  %v289 = vunpack.c.l.b16 %v31
  %v290 = vunpack.c.l.b16 %v32
  %v291 = vunpack.c.l.b16 %v33
  %v292 = vunpack.c.l.b16 %v34
  %v293 = vunpack.c.l.b16 %v35
  %v294 = vunpack.c.l.b16 %v36
  %v295 = vunpack.c.l.b16 %v37
  %v296 = vunpack.c.l.b16 %v38
  %v297 = vunpack.c.l.b16 %v39
  %v298 = vunpack.c.l.b16 %v40
  %v299 = vunpack.c.l.b16 %v41
  %v300 = vunpack.c.l.b16 %v42
  %v301 = vunpack.c.l.b16 %v43
  %v302 = vunpack.c.l.b16 %v44
  %v303 = vunpack.c.l.b16 %v45
  %v304 = vunpack.c.l.b16 %v46
  %v305 = vunpack.c.l.b16 %v47
  %v306 = vunpack.c.l.b16 %v48
  %v307 = vunpack.c.l.b16 %v49
  %v308 = vunpack.c.l.b16 %v50
  %v309 = vunpack.c.l.b16 %v51
  %v310 = vunpack.c.l.b16 %v52
  %v311 = vunpack.c.l.b16 %v53
  %v312 = vunpack.c.l.b16 %v54
  %v313 = vunpack.c.l.b16 %v55
  %v314 = vunpack.c.l.b16 %v56
  %v315 = vunpack.c.l.b16 %v57
  %v316 = vunpack.c.l.b16 %v58
  %v317 = vunpack.c.l.b16 %v59
  %v318 = vunpack.c.l.b16 %v60
  %v319 = vunpack.c.l.b16 %v61
  %v320 = vunpack.c.l.b16 %v62
  %v321 = vunpack.c.l.b16 %v63
  %v322 = vunpack.c.l.b16 %v64
  %v323 = vunpack.c.l.b16 %v65
  %v324 = vunpack.c.l.b16 %v66
  %v325 = vunpack.c.l.b16 %v67
  %v326 = vunpack.c.l.b16 %v68
  %v327 = vunpack.c.l.b16 %v69
  %v328 = vunpack.c.l.b16 %v70
  %v329 = vunpack.c.l.b16 %v71
  %v330 = vunpack.c.l.b16 %v72
  %v331 = vunpack.c.l.b16 %v73
  %v332 = vunpack.c.l.b16 %v74
  %v333 = vunpack.c.l.b16 %v75
  %v334 = vunpack.c.l.b16 %v76
  %v335 = vunpack.c.l.b16 %v77
  %v336 = vunpack.c.l.b16 %v78
  %v337 = vunpack.c.l.b16 %v79
  %v338 = vunpack.c.l.b16 %v80
  %v339 = vunpack.c.l.b16 %v81
  %v340 = vunpack.c.l.b16 %v82
  %v341 = vunpack.c.l.b16 %v83
  %v342 = vunpack.c.l.b16 %v84
  %v343 = vunpack.c.l.b16 %v85
  %v344 = vunpack.c.l.b16 %v86
  %v345 = vunpack.c.l.b16 %v87
  %v346 = vunpack.c.l.b16 %v88
  %v347 = vunpack.c.l.b16 %v89
  %v348 = vunpack.c.l.b16 %v90
  %v349 = vunpack.c.l.b16 %v91
  %v350 = vunpack.c.l.b16 %v92
  %v351 = vunpack.c.l.b16 %v93
  %v352 = vunpack.c.l.b16 %v94
  %v353 = vunpack.c.l.b16 %v95
  %v354 = vunpack.c.l.b16 %v96
  %v355 = vunpack.c.l.b16 %v97
  %v356 = vunpack.c.l.b16 %v98
  %v357 = vunpack.c.l.b16 %v99
  %v358 = vunpack.c.l.b16 %v100
  %v359 = vunpack.c.l.b16 %v101
  %v360 = vunpack.c.l.b16 %v102
  %v361 = vunpack.c.l.b16 %v103
  %v362 = vunpack.c.l.b16 %v104
  %v363 = vunpack.c.l.b16 %v105
  %v364 = vunpack.c.l.b16 %v106
  %v365 = vunpack.c.l.b16 %v107
  %v366 = vunpack.c.l.b16 %v108
  %v367 = vunpack.c.l.b16 %v109
  %v368 = vunpack.c.l.b16 %v110
  %v369 = vunpack.c.l.b16 %v111
  %v370 = vunpack.c.l.b16 %v112
  %v371 = vunpack.c.l.b16 %v113
  %v372 = vunpack.c.l.b16 %v114
  %v373 = vunpack.c.l.b16 %v115
  %v374 = vunpack.c.l.b16 %v116
  %v375 = vunpack.c.l.b16 %v117
  %v376 = vunpack.c.l.b16 %v118
  %v377 = vunpack.c.l.b16 %v119
  %v378 = vunpack.c.l.b16 %v120
  %v379 = vunpack.c.l.b16 %v121
  %v380 = vunpack.c.l.b16 %v122
  %v381 = vunpack.c.l.b16 %v123
  %v382 = vunpack.c.l.b16 %v124
  %v383 = vunpack.c.l.b16 %v125
  %v384 = vunpack.c.l.b16 %v126
  %v385 = vunpack.c.l.b16 %v127
  %v386 = vunpack.c.l.b16 %v128
  %v387 = vunpack.c.l.b16 %v129
  %v388 = vunpack.c.l.b16 %v130
  %v389 = vunpack.c.l.b16 %v131
  %v390 = vunpack.c.l.b16 %v132
  %v391 = vunpack.c.l.b16 %v133
  %v392 = vunpack.c.l.b16 %v134
  %v393 = vunpack.c.l.b16 %v135
  %v394 = vunpack.c.l.b16 %v136
  %v395 = vunpack.c.l.b16 %v137
  %v396 = vunpack.c.l.b16 %v138
  %v397 = vunpack.c.l.b16 %v139
  %v398 = vpack.c.b16 %v271, %v270
  %v399 = vpack.c.b16 %v273, %v272
  %v400 = vpack.c.b16 %v275, %v274
  %v401 = vpack.c.b16 %v277, %v276
  %v402 = vpack.c.b16 %v279, %v278
  %v403 = vpack.c.b16 %v281, %v280
  %v404 = vpack.c.b16 %v283, %v282
  %v405 = vpack.c.b16 %v285, %v284
  %v406 = vpack.c.b16 %v287, %v286
  %v407 = vpack.c.b16 %v289, %v288
  %v408 = vpack.c.b16 %v291, %v290
  %v409 = vpack.c.b16 %v293, %v292
  %v410 = vpack.c.b16 %v295, %v294
  %v411 = vpack.c.b16 %v297, %v296
  %v412 = vpack.c.b16 %v299, %v298
  %v413 = vpack.c.b16 %v301, %v300
  %v414 = vpack.c.b16 %v303, %v302
  %v415 = vpack.c.b16 %v305, %v304
  %v416 = vpack.c.b16 %v307, %v306
  %v417 = vpack.c.b16 %v309, %v308
  %v418 = vpack.c.b16 %v311, %v310
  %v419 = vpack.c.b16 %v313, %v312
  %v420 = vpack.c.b16 %v315, %v314
  %v421 = vpack.c.b16 %v317, %v316
  %v422 = vpack.c.b16 %v319, %v318
  %v423 = vpack.c.b16 %v321, %v320
  %v424 = vpack.c.b16 %v323, %v322
  %v425 = vpack.c.b16 %v325, %v324
  %v426 = vpack.c.b16 %v327, %v326
  %v427 = vpack.c.b16 %v329, %v328
  %v428 = vpack.c.b16 %v331, %v330
  %v429 = vpack.c.b16 %v333, %v332
  %v430 = vpack.c.b16 %v335, %v334
  %v431 = vpack.c.b16 %v337, %v336
  %v432 = vpack.c.b16 %v339, %v338
  %v433 = vpack.c.b16 %v341, %v340
  %v434 = vpack.c.b16 %v343, %v342
  %v435 = vpack.c.b16 %v345, %v344
  %v436 = vpack.c.b16 %v347, %v346
  %v437 = vpack.c.b16 %v349, %v348
  %v438 = vpack.c.b16 %v351, %v350
  %v439 = vpack.c.b16 %v353, %v352
  %v440 = vpack.c.b16 %v355, %v354
  %v441 = vpack.c.b16 %v357, %v356
  %v442 = vpack.c.b16 %v359, %v358
  %v443 = vpack.c.b16 %v361, %v360
  %v444 = vpack.c.b16 %v363, %v362
  %v445 = vpack.c.b16 %v365, %v364
  %v446 = vpack.c.b16 %v367, %v366
  %v447 = vpack.c.b16 %v369, %v368
  %v448 = vpack.c.b16 %v371, %v370
  %v449 = vpack.c.b16 %v373, %v372
  %v450 = vpack.c.b16 %v375, %v374
  %v451 = vpack.c.b16 %v377, %v376
  %v452 = vpack.c.b16 %v379, %v378
  %v453 = vpack.c.b16 %v381, %v380
  %v454 = vpack.c.b16 %v383, %v382
  %v455 = vpack.c.b16 %v385, %v384
  %v456 = vpack.c.b16 %v387, %v386
  %v457 = vpack.c.b16 %v389, %v388
  %v458 = vpack.c.b16 %v391, %v390
  %v459 = vpack.c.b16 %v393, %v392
  %v460 = vpack.c.b16 %v395, %v394
  %v461 = vpack.c.b16 %v397, %v396
  %v464 = vunpack.c.l.b16 %v140
  %v465 = vunpack.c.l.b16 %v141
  %v466 = vpack.c.b16 %v465, %v464
  %vm468 = vcmask 130048
  %v470 = vsel %vm468, %v398, 0
  %v473 = vsel %vm468, %v399, 0
  %v476 = vsel %vm468, %v400, 0
  %v479 = vsel %vm468, %v401, 0
  %v482 = vsel %vm468, %v402, 0
  %v485 = vsel %vm468, %v403, 0
  %v488 = vsel %vm468, %v404, 0
  %v491 = vsel %vm468, %v405, 0
  %v494 = vsel %vm468, %v406, 0
  %v497 = vsel %vm468, %v407, 0
  %v500 = vsel %vm468, %v408, 0
  %v503 = vsel %vm468, %v409, 0
  %v506 = vsel %vm468, %v410, 0
  %v509 = vsel %vm468, %v411, 0
  %v512 = vsel %vm468, %v412, 0
  %v515 = vsel %vm468, %v413, 0
  %v518 = vsel %vm468, %v414, 0
  %v521 = vsel %vm468, %v415, 0
  %v524 = vsel %vm468, %v416, 0
  %v527 = vsel %vm468, %v417, 0
  %v530 = vsel %vm468, %v418, 0
  %v533 = vsel %vm468, %v419, 0
  %v536 = vsel %vm468, %v420, 0
  %v539 = vsel %vm468, %v421, 0
  %v542 = vsel %vm468, %v422, 0
  %v545 = vsel %vm468, %v423, 0
  %v548 = vsel %vm468, %v424, 0
  %v551 = vsel %vm468, %v425, 0
  %v554 = vsel %vm468, %v426, 0
  %v557 = vsel %vm468, %v427, 0
  %v560 = vsel %vm468, %v428, 0
  %v563 = vsel %vm468, %v429, 0
  %v566 = vsel %vm468, %v430, 0
  %v569 = vsel %vm468, %v431, 0
  %v572 = vsel %vm468, %v432, 0
  %v575 = vsel %vm468, %v433, 0
  %v578 = vsel %vm468, %v434, 0
  %v581 = vsel %vm468, %v435, 0
  %v584 = vsel %vm468, %v436, 0
  %v587 = vsel %vm468, %v437, 0
  %v590 = vsel %vm468, %v438, 0
  %v593 = vsel %vm468, %v439, 0
  %v596 = vsel %vm468, %v440, 0
  %v599 = vsel %vm468, %v441, 0
  %v602 = vsel %vm468, %v442, 0
  %v605 = vsel %vm468, %v443, 0
  %v608 = vsel %vm468, %v444, 0
  %v611 = vsel %vm468, %v445, 0
  %v614 = vsel %vm468, %v446, 0
  %v617 = vsel %vm468, %v447, 0
  %v620 = vsel %vm468, %v448, 0
  %v623 = vsel %vm468, %v449, 0
  %v626 = vsel %vm468, %v450, 0
  %v629 = vsel %vm468, %v451, 0
  %v632 = vsel %vm468, %v452, 0
  %v635 = vsel %vm468, %v453, 0
  %v638 = vsel %vm468, %v454, 0
  %v641 = vsel %vm468, %v455, 0
  %v644 = vsel %vm468, %v456, 0
  %v647 = vsel %vm468, %v457, 0
  %v650 = vsel %vm468, %v458, 0
  %v653 = vsel %vm468, %v459, 0
  %v656 = vsel %vm468, %v460, 0
  %v659 = vsel %vm468, %v461, 0
  %661 = vmatprep.subr.bf16.mxu0 0
  %662 = vmatpush1.bf16.msra.mxu0 0
  %663 = vmatprep.subr.bf16.mxu0 0
  %664 = vmatpush1.bf16.msra.mxu0 0
  %665 = vmatprep.subr.bf16.mxu0 0
  %666 = vmatpush1.bf16.msra.mxu0 0
  %667 = vmatprep.subr.bf16.mxu0 0
  %668 = vmatpush1.bf16.msra.mxu0 0
  %669 = vmatprep.subr.bf16.mxu0 0
  %670 = vmatpush1.bf16.msra.mxu0 0
  %671 = vmatprep.subr.bf16.mxu0 0
  %672 = vmatpush1.bf16.msra.mxu0 0
  %673 = vmatprep.subr.bf16.mxu0 0
  %674 = vmatpush1.bf16.msra.mxu0 0
  %675 = vmatprep.subr.bf16.mxu0 0
  %676 = vmatpush1.bf16.msra.mxu0 %v466
  %677 = vmatprep.subr.bf16.mxu0 0
  %678 = vmatpush2.bf16.msra.mxu0 0
  %679 = vmatprep.subr.bf16.mxu0 0
  %680 = vmatpush2.bf16.msra.mxu0 0
  %681 = vmatprep.subr.bf16.mxu0 0
  %682 = vmatpush2.bf16.msra.mxu0 0
  %683 = vmatprep.subr.bf16.mxu0 0
  %684 = vmatpush2.bf16.msra.mxu0 0
  %685 = vmatprep.subr.bf16.mxu0 0
  %686 = vmatpush2.bf16.msra.mxu0 0
  %687 = vmatprep.subr.bf16.mxu0 0
  %688 = vmatpush2.bf16.msra.mxu0 0
  %689 = vmatprep.subr.bf16.mxu0 0
  %690 = vmatpush2.bf16.msra.mxu0 0
  %691 = vmatprep.subr.bf16.mxu0 0
  %692 = vmatpush2.bf16.msra.mxu0 0
  %693 = vmatprep.mubr.bf16.mxu0 0
  %694 = vmatmul.mubr.bf16.gmra.mxu0 %v470
  %v695 = vpop.f32.mrf.mxu0
  %v696 = vadd.f32 0.0, %v695
  %v697 = vpop.f32.mrf.mxu0
  %v698 = vpop.f32.mrf.mxu0
  %v699 = vadd.f32 0.0, %v698
  %v700 = vpop.f32.mrf.mxu0
  %701 = vmatprep.mubr.bf16.mxu0 0
  %702 = vmatmul.mubr.bf16.gmra.mxu0 %v473
  %v703 = vpop.f32.mrf.mxu0
  %v704 = vadd.f32 0.0, %v703
  %v705 = vpop.f32.mrf.mxu0
  %v706 = vpop.f32.mrf.mxu0
  %v707 = vadd.f32 0.0, %v706
  %v708 = vpop.f32.mrf.mxu0
  %709 = vmatprep.mubr.bf16.mxu0 0
  %710 = vmatmul.mubr.bf16.gmra.mxu0 %v476
  %v711 = vpop.f32.mrf.mxu0
  %v712 = vadd.f32 0.0, %v711
  %v713 = vpop.f32.mrf.mxu0
  %v714 = vpop.f32.mrf.mxu0
  %v715 = vadd.f32 0.0, %v714
  %v716 = vpop.f32.mrf.mxu0
  %717 = vmatprep.mubr.bf16.mxu0 0
  %718 = vmatmul.mubr.bf16.gmra.mxu0 %v479
  %v719 = vpop.f32.mrf.mxu0
  %v720 = vadd.f32 0.0, %v719
  %v721 = vpop.f32.mrf.mxu0
  %v722 = vpop.f32.mrf.mxu0
  %v723 = vadd.f32 0.0, %v722
  %v724 = vpop.f32.mrf.mxu0
  %725 = vmatprep.mubr.bf16.mxu0 0
  %726 = vmatmul.mubr.bf16.gmra.mxu0 %v482
  %v727 = vpop.f32.mrf.mxu0
  %v728 = vadd.f32 0.0, %v727
  %v729 = vpop.f32.mrf.mxu0
  %v730 = vpop.f32.mrf.mxu0
  %v731 = vadd.f32 0.0, %v730
  %v732 = vpop.f32.mrf.mxu0
  %733 = vmatprep.mubr.bf16.mxu0 0
  %734 = vmatmul.mubr.bf16.gmra.mxu0 %v485
  %v735 = vpop.f32.mrf.mxu0
  %v736 = vadd.f32 0.0, %v735
  %v737 = vpop.f32.mrf.mxu0
  %v738 = vpop.f32.mrf.mxu0
  %v739 = vadd.f32 0.0, %v738
  %v740 = vpop.f32.mrf.mxu0
  %741 = vmatprep.mubr.bf16.mxu0 0
  %742 = vmatmul.mubr.bf16.gmra.mxu0 %v488
  %v743 = vpop.f32.mrf.mxu0
  %v744 = vadd.f32 0.0, %v743
  %v745 = vpop.f32.mrf.mxu0
  %v746 = vpop.f32.mrf.mxu0
  %v747 = vadd.f32 0.0, %v746
  %v748 = vpop.f32.mrf.mxu0
  %749 = vmatprep.mubr.bf16.mxu0 0
  %750 = vmatmul.mubr.bf16.gmra.mxu0 %v491
  %v751 = vpop.f32.mrf.mxu0
  %v752 = vadd.f32 0.0, %v751
  %v753 = vpop.f32.mrf.mxu0
  %v754 = vpop.f32.mrf.mxu0
  %v755 = vadd.f32 0.0, %v754
  %v756 = vpop.f32.mrf.mxu0
  %757 = vmatprep.mubr.bf16.mxu0 0
  %758 = vmatmul.mubr.bf16.gmra.mxu0 %v494
  %v759 = vpop.f32.mrf.mxu0
  %v760 = vadd.f32 0.0, %v759
  %v761 = vpop.f32.mrf.mxu0
  %v762 = vpop.f32.mrf.mxu0
  %v763 = vadd.f32 0.0, %v762
  %v764 = vpop.f32.mrf.mxu0
  %765 = vmatprep.mubr.bf16.mxu0 0
  %766 = vmatmul.mubr.bf16.gmra.mxu0 %v497
  %v767 = vpop.f32.mrf.mxu0
  %v768 = vadd.f32 0.0, %v767
  %v769 = vpop.f32.mrf.mxu0
  %v770 = vpop.f32.mrf.mxu0
  %v771 = vadd.f32 0.0, %v770
  %v772 = vpop.f32.mrf.mxu0
  %773 = vmatprep.mubr.bf16.mxu0 0
  %774 = vmatmul.mubr.bf16.gmra.mxu0 %v500
  %v775 = vpop.f32.mrf.mxu0
  %v776 = vadd.f32 0.0, %v775
  %v777 = vpop.f32.mrf.mxu0
  %v778 = vpop.f32.mrf.mxu0
  %v779 = vadd.f32 0.0, %v778
  %v780 = vpop.f32.mrf.mxu0
  %781 = vmatprep.mubr.bf16.mxu0 0
  %782 = vmatmul.mubr.bf16.gmra.mxu0 %v503
  %v783 = vpop.f32.mrf.mxu0
  %v784 = vadd.f32 0.0, %v783
  %v785 = vpop.f32.mrf.mxu0
  %v786 = vpop.f32.mrf.mxu0
  %v787 = vadd.f32 0.0, %v786
  %v788 = vpop.f32.mrf.mxu0
  %789 = vmatprep.mubr.bf16.mxu0 0
  %790 = vmatmul.mubr.bf16.gmra.mxu0 %v506
  %v791 = vpop.f32.mrf.mxu0
  %v792 = vadd.f32 0.0, %v791
  %v793 = vpop.f32.mrf.mxu0
  %v794 = vpop.f32.mrf.mxu0
  %v795 = vadd.f32 0.0, %v794
  %v796 = vpop.f32.mrf.mxu0
  %797 = vmatprep.mubr.bf16.mxu0 0
  %798 = vmatmul.mubr.bf16.gmra.mxu0 %v509
  %v799 = vpop.f32.mrf.mxu0
  %v800 = vadd.f32 0.0, %v799
  %v801 = vpop.f32.mrf.mxu0
  %v802 = vpop.f32.mrf.mxu0
  %v803 = vadd.f32 0.0, %v802
  %v804 = vpop.f32.mrf.mxu0
  %805 = vmatprep.mubr.bf16.mxu0 0
  %806 = vmatmul.mubr.bf16.gmra.mxu0 %v512
  %v807 = vpop.f32.mrf.mxu0
  %v808 = vadd.f32 0.0, %v807
  %v809 = vpop.f32.mrf.mxu0
  %v810 = vpop.f32.mrf.mxu0
  %v811 = vadd.f32 0.0, %v810
  %v812 = vpop.f32.mrf.mxu0
  %813 = vmatprep.mubr.bf16.mxu0 0
  %814 = vmatmul.mubr.bf16.gmra.mxu0 %v515
  %v815 = vpop.f32.mrf.mxu0
  %v816 = vadd.f32 0.0, %v815
  %v817 = vpop.f32.mrf.mxu0
  %v818 = vpop.f32.mrf.mxu0
  %v819 = vadd.f32 0.0, %v818
  %v820 = vpop.f32.mrf.mxu0
  %821 = vmatprep.mubr.bf16.mxu0 0
  %822 = vmatmul.mubr.bf16.gmra.mxu0 %v518
  %v823 = vpop.f32.mrf.mxu0
  %v824 = vadd.f32 0.0, %v823
  %v825 = vpop.f32.mrf.mxu0
  %v826 = vpop.f32.mrf.mxu0
  %v827 = vadd.f32 0.0, %v826
  %v828 = vpop.f32.mrf.mxu0
  %829 = vmatprep.mubr.bf16.mxu0 0
  %830 = vmatmul.mubr.bf16.gmra.mxu0 %v521
  %v831 = vpop.f32.mrf.mxu0
  %v832 = vadd.f32 0.0, %v831
  %v833 = vpop.f32.mrf.mxu0
  %v834 = vpop.f32.mrf.mxu0
  %v835 = vadd.f32 0.0, %v834
  %v836 = vpop.f32.mrf.mxu0
  %837 = vmatprep.mubr.bf16.mxu0 0
  %838 = vmatmul.mubr.bf16.gmra.mxu0 %v524
  %v839 = vpop.f32.mrf.mxu0
  %v840 = vadd.f32 0.0, %v839
  %v841 = vpop.f32.mrf.mxu0
  %v842 = vpop.f32.mrf.mxu0
  %v843 = vadd.f32 0.0, %v842
  %v844 = vpop.f32.mrf.mxu0
  %845 = vmatprep.mubr.bf16.mxu0 0
  %846 = vmatmul.mubr.bf16.gmra.mxu0 %v527
  %v847 = vpop.f32.mrf.mxu0
  %v848 = vadd.f32 0.0, %v847
  %v849 = vpop.f32.mrf.mxu0
  %v850 = vpop.f32.mrf.mxu0
  %v851 = vadd.f32 0.0, %v850
  %v852 = vpop.f32.mrf.mxu0
  %853 = vmatprep.mubr.bf16.mxu0 0
  %854 = vmatmul.mubr.bf16.gmra.mxu0 %v530
  %v855 = vpop.f32.mrf.mxu0
  %v856 = vadd.f32 0.0, %v855
  %v857 = vpop.f32.mrf.mxu0
  %v858 = vpop.f32.mrf.mxu0
  %v859 = vadd.f32 0.0, %v858
  %v860 = vpop.f32.mrf.mxu0
  %861 = vmatprep.mubr.bf16.mxu0 0
  %862 = vmatmul.mubr.bf16.gmra.mxu0 %v533
  %v863 = vpop.f32.mrf.mxu0
  %v864 = vadd.f32 0.0, %v863
  %v865 = vpop.f32.mrf.mxu0
  %v866 = vpop.f32.mrf.mxu0
  %v867 = vadd.f32 0.0, %v866
  %v868 = vpop.f32.mrf.mxu0
  %869 = vmatprep.mubr.bf16.mxu0 0
  %870 = vmatmul.mubr.bf16.gmra.mxu0 %v536
  %v871 = vpop.f32.mrf.mxu0
  %v872 = vadd.f32 0.0, %v871
  %v873 = vpop.f32.mrf.mxu0
  %v874 = vpop.f32.mrf.mxu0
  %v875 = vadd.f32 0.0, %v874
  %v876 = vpop.f32.mrf.mxu0
  %877 = vmatprep.mubr.bf16.mxu0 0
  %878 = vmatmul.mubr.bf16.gmra.mxu0 %v539
  %v879 = vpop.f32.mrf.mxu0
  %v880 = vadd.f32 0.0, %v879
  %v881 = vpop.f32.mrf.mxu0
  %v882 = vpop.f32.mrf.mxu0
  %v883 = vadd.f32 0.0, %v882
  %v884 = vpop.f32.mrf.mxu0
  %885 = vmatprep.mubr.bf16.mxu0 0
  %886 = vmatmul.mubr.bf16.gmra.mxu0 %v542
  %v887 = vpop.f32.mrf.mxu0
  %v888 = vadd.f32 0.0, %v887
  %v889 = vpop.f32.mrf.mxu0
  %v890 = vpop.f32.mrf.mxu0
  %v891 = vadd.f32 0.0, %v890
  %v892 = vpop.f32.mrf.mxu0
  %893 = vmatprep.mubr.bf16.mxu0 0
  %894 = vmatmul.mubr.bf16.gmra.mxu0 %v545
  %v895 = vpop.f32.mrf.mxu0
  %v896 = vadd.f32 0.0, %v895
  %v897 = vpop.f32.mrf.mxu0
  %v898 = vpop.f32.mrf.mxu0
  %v899 = vadd.f32 0.0, %v898
  %v900 = vpop.f32.mrf.mxu0
  %901 = vmatprep.mubr.bf16.mxu0 0
  %902 = vmatmul.mubr.bf16.gmra.mxu0 %v548
  %v903 = vpop.f32.mrf.mxu0
  %v904 = vadd.f32 0.0, %v903
  %v905 = vpop.f32.mrf.mxu0
  %v906 = vpop.f32.mrf.mxu0
  %v907 = vadd.f32 0.0, %v906
  %v908 = vpop.f32.mrf.mxu0
  %909 = vmatprep.mubr.bf16.mxu0 0
  %910 = vmatmul.mubr.bf16.gmra.mxu0 %v551
  %v911 = vpop.f32.mrf.mxu0
  %v912 = vadd.f32 0.0, %v911
  %v913 = vpop.f32.mrf.mxu0
  %v914 = vpop.f32.mrf.mxu0
  %v915 = vadd.f32 0.0, %v914
  %v916 = vpop.f32.mrf.mxu0
  %917 = vmatprep.mubr.bf16.mxu0 0
  %918 = vmatmul.mubr.bf16.gmra.mxu0 %v554
  %v919 = vpop.f32.mrf.mxu0
  %v920 = vadd.f32 0.0, %v919
  %v921 = vpop.f32.mrf.mxu0
  %v922 = vpop.f32.mrf.mxu0
  %v923 = vadd.f32 0.0, %v922
  %v924 = vpop.f32.mrf.mxu0
  %925 = vmatprep.mubr.bf16.mxu0 0
  %926 = vmatmul.mubr.bf16.gmra.mxu0 %v557
  %v927 = vpop.f32.mrf.mxu0
  %v928 = vadd.f32 0.0, %v927
  %v929 = vpop.f32.mrf.mxu0
  %v930 = vpop.f32.mrf.mxu0
  %v931 = vadd.f32 0.0, %v930
  %v932 = vpop.f32.mrf.mxu0
  %933 = vmatprep.mubr.bf16.mxu0 0
  %934 = vmatmul.mubr.bf16.gmra.mxu0 %v560
  %v935 = vpop.f32.mrf.mxu0
  %v936 = vadd.f32 0.0, %v935
  %v937 = vpop.f32.mrf.mxu0
  %v938 = vpop.f32.mrf.mxu0
  %v939 = vadd.f32 0.0, %v938
  %v940 = vpop.f32.mrf.mxu0
  %941 = vmatprep.mubr.bf16.mxu0 0
  %942 = vmatmul.mubr.bf16.gmra.mxu0 %v563
  %v943 = vpop.f32.mrf.mxu0
  %v944 = vadd.f32 0.0, %v943
  %v945 = vpop.f32.mrf.mxu0
  %v946 = vpop.f32.mrf.mxu0
  %v947 = vadd.f32 0.0, %v946
  %v948 = vpop.f32.mrf.mxu0
  %949 = vmatprep.mubr.bf16.mxu0 0
  %950 = vmatmul.mubr.bf16.gmra.mxu0 %v566
  %v951 = vpop.f32.mrf.mxu0
  %v952 = vadd.f32 0.0, %v951
  %v953 = vpop.f32.mrf.mxu0
  %v954 = vpop.f32.mrf.mxu0
  %v955 = vadd.f32 0.0, %v954
  %v956 = vpop.f32.mrf.mxu0
  %957 = vmatprep.mubr.bf16.mxu0 0
  %958 = vmatmul.mubr.bf16.gmra.mxu0 %v569
  %v959 = vpop.f32.mrf.mxu0
  %v960 = vadd.f32 0.0, %v959
  %v961 = vpop.f32.mrf.mxu0
  %v962 = vpop.f32.mrf.mxu0
  %v963 = vadd.f32 0.0, %v962
  %v964 = vpop.f32.mrf.mxu0
  %965 = vmatprep.mubr.bf16.mxu0 0
  %966 = vmatmul.mubr.bf16.gmra.mxu0 %v572
  %v967 = vpop.f32.mrf.mxu0
  %v968 = vadd.f32 0.0, %v967
  %v969 = vpop.f32.mrf.mxu0
  %v970 = vpop.f32.mrf.mxu0
  %v971 = vadd.f32 0.0, %v970
  %v972 = vpop.f32.mrf.mxu0
  %973 = vmatprep.mubr.bf16.mxu0 0
  %974 = vmatmul.mubr.bf16.gmra.mxu0 %v575
  %v975 = vpop.f32.mrf.mxu0
  %v976 = vadd.f32 0.0, %v975
  %v977 = vpop.f32.mrf.mxu0
  %v978 = vpop.f32.mrf.mxu0
  %v979 = vadd.f32 0.0, %v978
  %v980 = vpop.f32.mrf.mxu0
  %981 = vmatprep.mubr.bf16.mxu0 0
  %982 = vmatmul.mubr.bf16.gmra.mxu0 %v578
  %v983 = vpop.f32.mrf.mxu0
  %v984 = vadd.f32 0.0, %v983
  %v985 = vpop.f32.mrf.mxu0
  %v986 = vpop.f32.mrf.mxu0
  %v987 = vadd.f32 0.0, %v986
  %v988 = vpop.f32.mrf.mxu0
  %989 = vmatprep.mubr.bf16.mxu0 0
  %990 = vmatmul.mubr.bf16.gmra.mxu0 %v581
  %v991 = vpop.f32.mrf.mxu0
  %v992 = vadd.f32 0.0, %v991
  %v993 = vpop.f32.mrf.mxu0
  %v994 = vpop.f32.mrf.mxu0
  %v995 = vadd.f32 0.0, %v994
  %v996 = vpop.f32.mrf.mxu0
  %997 = vmatprep.mubr.bf16.mxu0 0
  %998 = vmatmul.mubr.bf16.gmra.mxu0 %v584
  %v999 = vpop.f32.mrf.mxu0
  %v1000 = vadd.f32 0.0, %v999
  %v1001 = vpop.f32.mrf.mxu0
  %v1002 = vpop.f32.mrf.mxu0
  %v1003 = vadd.f32 0.0, %v1002
  %v1004 = vpop.f32.mrf.mxu0
  %1005 = vmatprep.mubr.bf16.mxu0 0
  %1006 = vmatmul.mubr.bf16.gmra.mxu0 %v587
  %v1007 = vpop.f32.mrf.mxu0
  %v1008 = vadd.f32 0.0, %v1007
  %v1009 = vpop.f32.mrf.mxu0
  %v1010 = vpop.f32.mrf.mxu0
  %v1011 = vadd.f32 0.0, %v1010
  %v1012 = vpop.f32.mrf.mxu0
  %1013 = vmatprep.mubr.bf16.mxu0 0
  %1014 = vmatmul.mubr.bf16.gmra.mxu0 %v590
  %v1015 = vpop.f32.mrf.mxu0
  %v1016 = vadd.f32 0.0, %v1015
  %v1017 = vpop.f32.mrf.mxu0
  %v1018 = vpop.f32.mrf.mxu0
  %v1019 = vadd.f32 0.0, %v1018
  %v1020 = vpop.f32.mrf.mxu0
  %1021 = vmatprep.mubr.bf16.mxu0 0
  %1022 = vmatmul.mubr.bf16.gmra.mxu0 %v593
  %v1023 = vpop.f32.mrf.mxu0
  %v1024 = vadd.f32 0.0, %v1023
  %v1025 = vpop.f32.mrf.mxu0
  %v1026 = vpop.f32.mrf.mxu0
  %v1027 = vadd.f32 0.0, %v1026
  %v1028 = vpop.f32.mrf.mxu0
  %1029 = vmatprep.mubr.bf16.mxu0 0
  %1030 = vmatmul.mubr.bf16.gmra.mxu0 %v596
  %v1031 = vpop.f32.mrf.mxu0
  %v1032 = vadd.f32 0.0, %v1031
  %v1033 = vpop.f32.mrf.mxu0
  %v1034 = vpop.f32.mrf.mxu0
  %v1035 = vadd.f32 0.0, %v1034
  %v1036 = vpop.f32.mrf.mxu0
  %1037 = vmatprep.mubr.bf16.mxu0 0
  %1038 = vmatmul.mubr.bf16.gmra.mxu0 %v599
  %v1039 = vpop.f32.mrf.mxu0
  %v1040 = vadd.f32 0.0, %v1039
  %v1041 = vpop.f32.mrf.mxu0
  %v1042 = vpop.f32.mrf.mxu0
  %v1043 = vadd.f32 0.0, %v1042
  %v1044 = vpop.f32.mrf.mxu0
  %1045 = vmatprep.mubr.bf16.mxu0 0
  %1046 = vmatmul.mubr.bf16.gmra.mxu0 %v602
  %v1047 = vpop.f32.mrf.mxu0
  %v1048 = vadd.f32 0.0, %v1047
  %v1049 = vpop.f32.mrf.mxu0
  %v1050 = vpop.f32.mrf.mxu0
  %v1051 = vadd.f32 0.0, %v1050
  %v1052 = vpop.f32.mrf.mxu0
  %1053 = vmatprep.mubr.bf16.mxu0 0
  %1054 = vmatmul.mubr.bf16.gmra.mxu0 %v605
  %v1055 = vpop.f32.mrf.mxu0
  %v1056 = vadd.f32 0.0, %v1055
  %v1057 = vpop.f32.mrf.mxu0
  %v1058 = vpop.f32.mrf.mxu0
  %v1059 = vadd.f32 0.0, %v1058
  %v1060 = vpop.f32.mrf.mxu0
  %1061 = vmatprep.mubr.bf16.mxu0 0
  %1062 = vmatmul.mubr.bf16.gmra.mxu0 %v608
  %v1063 = vpop.f32.mrf.mxu0
  %v1064 = vadd.f32 0.0, %v1063
  %v1065 = vpop.f32.mrf.mxu0
  %v1066 = vpop.f32.mrf.mxu0
  %v1067 = vadd.f32 0.0, %v1066
  %v1068 = vpop.f32.mrf.mxu0
  %1069 = vmatprep.mubr.bf16.mxu0 0
  %1070 = vmatmul.mubr.bf16.gmra.mxu0 %v611
  %v1071 = vpop.f32.mrf.mxu0
  %v1072 = vadd.f32 0.0, %v1071
  %v1073 = vpop.f32.mrf.mxu0
  %v1074 = vpop.f32.mrf.mxu0
  %v1075 = vadd.f32 0.0, %v1074
  %v1076 = vpop.f32.mrf.mxu0
  %1077 = vmatprep.mubr.bf16.mxu0 0
  %1078 = vmatmul.mubr.bf16.gmra.mxu0 %v614
  %v1079 = vpop.f32.mrf.mxu0
  %v1080 = vadd.f32 0.0, %v1079
  %v1081 = vpop.f32.mrf.mxu0
  %v1082 = vpop.f32.mrf.mxu0
  %v1083 = vadd.f32 0.0, %v1082
  %v1084 = vpop.f32.mrf.mxu0
  %1085 = vmatprep.mubr.bf16.mxu0 0
  %1086 = vmatmul.mubr.bf16.gmra.mxu0 %v617
  %v1087 = vpop.f32.mrf.mxu0
  %v1088 = vadd.f32 0.0, %v1087
  %v1089 = vpop.f32.mrf.mxu0
  %v1090 = vpop.f32.mrf.mxu0
  %v1091 = vadd.f32 0.0, %v1090
  %v1092 = vpop.f32.mrf.mxu0
  %1093 = vmatprep.mubr.bf16.mxu0 0
  %1094 = vmatmul.mubr.bf16.gmra.mxu0 %v620
  %v1095 = vpop.f32.mrf.mxu0
  %v1096 = vadd.f32 0.0, %v1095
  %v1097 = vpop.f32.mrf.mxu0
  %v1098 = vpop.f32.mrf.mxu0
  %v1099 = vadd.f32 0.0, %v1098
  %v1100 = vpop.f32.mrf.mxu0
  %1101 = vmatprep.mubr.bf16.mxu0 0
  %1102 = vmatmul.mubr.bf16.gmra.mxu0 %v623
  %v1103 = vpop.f32.mrf.mxu0
  %v1104 = vadd.f32 0.0, %v1103
  %v1105 = vpop.f32.mrf.mxu0
  %v1106 = vpop.f32.mrf.mxu0
  %v1107 = vadd.f32 0.0, %v1106
  %v1108 = vpop.f32.mrf.mxu0
  %1109 = vmatprep.mubr.bf16.mxu0 0
  %1110 = vmatmul.mubr.bf16.gmra.mxu0 %v626
  %v1111 = vpop.f32.mrf.mxu0
  %v1112 = vadd.f32 0.0, %v1111
  %v1113 = vpop.f32.mrf.mxu0
  %v1114 = vpop.f32.mrf.mxu0
  %v1115 = vadd.f32 0.0, %v1114
  %v1116 = vpop.f32.mrf.mxu0
  %1117 = vmatprep.mubr.bf16.mxu0 0
  %1118 = vmatmul.mubr.bf16.gmra.mxu0 %v629
  %v1119 = vpop.f32.mrf.mxu0
  %v1120 = vadd.f32 0.0, %v1119
  %v1121 = vpop.f32.mrf.mxu0
  %v1122 = vpop.f32.mrf.mxu0
  %v1123 = vadd.f32 0.0, %v1122
  %v1124 = vpop.f32.mrf.mxu0
  %1125 = vmatprep.mubr.bf16.mxu0 0
  %1126 = vmatmul.mubr.bf16.gmra.mxu0 %v632
  %v1127 = vpop.f32.mrf.mxu0
  %v1128 = vadd.f32 0.0, %v1127
  %v1129 = vpop.f32.mrf.mxu0
  %v1130 = vpop.f32.mrf.mxu0
  %v1131 = vadd.f32 0.0, %v1130
  %v1132 = vpop.f32.mrf.mxu0
  %1133 = vmatprep.mubr.bf16.mxu0 0
  %1134 = vmatmul.mubr.bf16.gmra.mxu0 %v635
  %v1135 = vpop.f32.mrf.mxu0
  %v1136 = vadd.f32 0.0, %v1135
  %v1137 = vpop.f32.mrf.mxu0
  %v1138 = vpop.f32.mrf.mxu0
  %v1139 = vadd.f32 0.0, %v1138
  %v1140 = vpop.f32.mrf.mxu0
  %1141 = vmatprep.mubr.bf16.mxu0 0
  %1142 = vmatmul.mubr.bf16.gmra.mxu0 %v638
  %v1143 = vpop.f32.mrf.mxu0
  %v1144 = vadd.f32 0.0, %v1143
  %v1145 = vpop.f32.mrf.mxu0
  %v1146 = vpop.f32.mrf.mxu0
  %v1147 = vadd.f32 0.0, %v1146
  %v1148 = vpop.f32.mrf.mxu0
  %1149 = vmatprep.mubr.bf16.mxu0 0
  %1150 = vmatmul.mubr.bf16.gmra.mxu0 %v641
  %v1151 = vpop.f32.mrf.mxu0
  %v1152 = vadd.f32 0.0, %v1151
  %v1153 = vpop.f32.mrf.mxu0
  %v1154 = vpop.f32.mrf.mxu0
  %v1155 = vadd.f32 0.0, %v1154
  %v1156 = vpop.f32.mrf.mxu0
  %1157 = vmatprep.mubr.bf16.mxu0 0
  %1158 = vmatmul.mubr.bf16.gmra.mxu0 %v644
  %v1159 = vpop.f32.mrf.mxu0
  %v1160 = vadd.f32 0.0, %v1159
  %v1161 = vpop.f32.mrf.mxu0
  %v1162 = vpop.f32.mrf.mxu0
  %v1163 = vadd.f32 0.0, %v1162
  %v1164 = vpop.f32.mrf.mxu0
  %1165 = vmatprep.mubr.bf16.mxu0 0
  %1166 = vmatmul.mubr.bf16.gmra.mxu0 %v647
  %v1167 = vpop.f32.mrf.mxu0
  %v1168 = vadd.f32 0.0, %v1167
  %v1169 = vpop.f32.mrf.mxu0
  %v1170 = vpop.f32.mrf.mxu0
  %v1171 = vadd.f32 0.0, %v1170
  %v1172 = vpop.f32.mrf.mxu0
  %1173 = vmatprep.mubr.bf16.mxu0 0
  %1174 = vmatmul.mubr.bf16.gmra.mxu0 %v650
  %v1175 = vpop.f32.mrf.mxu0
  %v1176 = vadd.f32 0.0, %v1175
  %v1177 = vpop.f32.mrf.mxu0
  %v1178 = vpop.f32.mrf.mxu0
  %v1179 = vadd.f32 0.0, %v1178
  %v1180 = vpop.f32.mrf.mxu0
  %1181 = vmatprep.mubr.bf16.mxu0 0
  %1182 = vmatmul.mubr.bf16.gmra.mxu0 %v653
  %v1183 = vpop.f32.mrf.mxu0
  %v1184 = vadd.f32 0.0, %v1183
  %v1185 = vpop.f32.mrf.mxu0
  %v1186 = vpop.f32.mrf.mxu0
  %v1187 = vadd.f32 0.0, %v1186
  %v1188 = vpop.f32.mrf.mxu0
  %1189 = vmatprep.mubr.bf16.mxu0 0
  %1190 = vmatmul.mubr.bf16.gmra.mxu0 %v656
  %v1191 = vpop.f32.mrf.mxu0
  %v1192 = vadd.f32 0.0, %v1191
  %v1193 = vpop.f32.mrf.mxu0
  %v1194 = vpop.f32.mrf.mxu0
  %v1195 = vadd.f32 0.0, %v1194
  %v1196 = vpop.f32.mrf.mxu0
  %1197 = vmatprep.mubr.bf16.mxu0 0
  %1198 = vmatmul.mubr.bf16.gmra.mxu0 %v659
  %v1199 = vpop.f32.mrf.mxu0
  %v1200 = vadd.f32 0.0, %v1199
  %v1201 = vpop.f32.mrf.mxu0
  %v1202 = vpop.f32.mrf.mxu0
  %v1203 = vadd.f32 0.0, %v1202
  %v1204 = vpop.f32.mrf.mxu0
  %1205 = vdwg.mxu0
  %vm1206 = vcmask 15360
  %1207 = vst.msk [vmem:[%s2] sm:$0xff] %vm1206, %v696
  %1208 = vst.msk [vmem:[%s2 + $0x8] sm:$0xff] %vm1206, %v699
  %1209 = vst.msk [vmem:[%s2 + $0x10] sm:$0xff] %vm1206, %v704
  %1210 = vst.msk [vmem:[%s2 + $0x18] sm:$0xff] %vm1206, %v707
  %1211 = vst.msk [vmem:[%s2 + $0x20] sm:$0xff] %vm1206, %v712
  %1212 = vst.msk [vmem:[%s2 + $0x28] sm:$0xff] %vm1206, %v715
  %1213 = vst.msk [vmem:[%s2 + $0x30] sm:$0xff] %vm1206, %v720
  %1214 = vst.msk [vmem:[%s2 + $0x38] sm:$0xff] %vm1206, %v723
  %1215 = vst.msk [vmem:[%s2 + $0x40] sm:$0xff] %vm1206, %v728
  %1216 = vst.msk [vmem:[%s2 + $0x48] sm:$0xff] %vm1206, %v731
  %1217 = vst.msk [vmem:[%s2 + $0x50] sm:$0xff] %vm1206, %v736
  %1218 = vst.msk [vmem:[%s2 + $0x58] sm:$0xff] %vm1206, %v739
  %1219 = vst.msk [vmem:[%s2 + $0x60] sm:$0xff] %vm1206, %v744
  %1220 = vst.msk [vmem:[%s2 + $0x68] sm:$0xff] %vm1206, %v747
  %1221 = vst.msk [vmem:[%s2 + $0x70] sm:$0xff] %vm1206, %v752
  %1222 = vst.msk [vmem:[%s2 + $0x78] sm:$0xff] %vm1206, %v755
  %1223 = vst.msk [vmem:[%s2 + $0x80] sm:$0xff] %vm1206, %v760
  %1224 = vst.msk [vmem:[%s2 + $0x88] sm:$0xff] %vm1206, %v763
  %1225 = vst.msk [vmem:[%s2 + $0x90] sm:$0xff] %vm1206, %v768
  %1226 = vst.msk [vmem:[%s2 + $0x98] sm:$0xff] %vm1206, %v771
  %1227 = vst.msk [vmem:[%s2 + $0xa0] sm:$0xff] %vm1206, %v776
  %1228 = vst.msk [vmem:[%s2 + $0xa8] sm:$0xff] %vm1206, %v779
  %1229 = vst.msk [vmem:[%s2 + $0xb0] sm:$0xff] %vm1206, %v784
  %1230 = vst.msk [vmem:[%s2 + $0xb8] sm:$0xff] %vm1206, %v787
  %1231 = vst.msk [vmem:[%s2 + $0xc0] sm:$0xff] %vm1206, %v792
  %1232 = vst.msk [vmem:[%s2 + $0xc8] sm:$0xff] %vm1206, %v795
  %1233 = vst.msk [vmem:[%s2 + $0xd0] sm:$0xff] %vm1206, %v800
  %1234 = vst.msk [vmem:[%s2 + $0xd8] sm:$0xff] %vm1206, %v803
  %1235 = vst.msk [vmem:[%s2 + $0xe0] sm:$0xff] %vm1206, %v808
  %1236 = vst.msk [vmem:[%s2 + $0xe8] sm:$0xff] %vm1206, %v811
  %1237 = vst.msk [vmem:[%s2 + $0xf0] sm:$0xff] %vm1206, %v816
  %1238 = vst.msk [vmem:[%s2 + $0xf8] sm:$0xff] %vm1206, %v819
  %1239 = vst.msk [vmem:[%s2 + $0x100] sm:$0xff] %vm1206, %v824
  %1240 = vst.msk [vmem:[%s2 + $0x108] sm:$0xff] %vm1206, %v827
  %1241 = vst.msk [vmem:[%s2 + $0x110] sm:$0xff] %vm1206, %v832
  %1242 = vst.msk [vmem:[%s2 + $0x118] sm:$0xff] %vm1206, %v835
  %1243 = vst.msk [vmem:[%s2 + $0x120] sm:$0xff] %vm1206, %v840
  %1244 = vst.msk [vmem:[%s2 + $0x128] sm:$0xff] %vm1206, %v843
  %1245 = vst.msk [vmem:[%s2 + $0x130] sm:$0xff] %vm1206, %v848
  %1246 = vst.msk [vmem:[%s2 + $0x138] sm:$0xff] %vm1206, %v851
  %1247 = vst.msk [vmem:[%s2 + $0x140] sm:$0xff] %vm1206, %v856
  %1248 = vst.msk [vmem:[%s2 + $0x148] sm:$0xff] %vm1206, %v859
  %1249 = vst.msk [vmem:[%s2 + $0x150] sm:$0xff] %vm1206, %v864
  %1250 = vst.msk [vmem:[%s2 + $0x158] sm:$0xff] %vm1206, %v867
  %1251 = vst.msk [vmem:[%s2 + $0x160] sm:$0xff] %vm1206, %v872
  %1252 = vst.msk [vmem:[%s2 + $0x168] sm:$0xff] %vm1206, %v875
  %1253 = vst.msk [vmem:[%s2 + $0x170] sm:$0xff] %vm1206, %v880
  %1254 = vst.msk [vmem:[%s2 + $0x178] sm:$0xff] %vm1206, %v883
  %1255 = vst.msk [vmem:[%s2 + $0x180] sm:$0xff] %vm1206, %v888
  %1256 = vst.msk [vmem:[%s2 + $0x188] sm:$0xff] %vm1206, %v891
  %1257 = vst.msk [vmem:[%s2 + $0x190] sm:$0xff] %vm1206, %v896
  %1258 = vst.msk [vmem:[%s2 + $0x198] sm:$0xff] %vm1206, %v899
  %1259 = vst.msk [vmem:[%s2 + $0x1a0] sm:$0xff] %vm1206, %v904
  %1260 = vst.msk [vmem:[%s2 + $0x1a8] sm:$0xff] %vm1206, %v907
  %1261 = vst.msk [vmem:[%s2 + $0x1b0] sm:$0xff] %vm1206, %v912
  %1262 = vst.msk [vmem:[%s2 + $0x1b8] sm:$0xff] %vm1206, %v915
  %1263 = vst.msk [vmem:[%s2 + $0x1c0] sm:$0xff] %vm1206, %v920
  %1264 = vst.msk [vmem:[%s2 + $0x1c8] sm:$0xff] %vm1206, %v923
  %1265 = vst.msk [vmem:[%s2 + $0x1d0] sm:$0xff] %vm1206, %v928
  %1266 = vst.msk [vmem:[%s2 + $0x1d8] sm:$0xff] %vm1206, %v931
  %1267 = vst.msk [vmem:[%s2 + $0x1e0] sm:$0xff] %vm1206, %v936
  %1268 = vst.msk [vmem:[%s2 + $0x1e8] sm:$0xff] %vm1206, %v939
  %1269 = vst.msk [vmem:[%s2 + $0x1f0] sm:$0xff] %vm1206, %v944
  %1270 = vst.msk [vmem:[%s2 + $0x1f8] sm:$0xff] %vm1206, %v947
  %1271 = vst.msk [vmem:[%s2 + $0x200] sm:$0xff] %vm1206, %v952
  %1272 = vst.msk [vmem:[%s2 + $0x208] sm:$0xff] %vm1206, %v955
  %1273 = vst.msk [vmem:[%s2 + $0x210] sm:$0xff] %vm1206, %v960
  %1274 = vst.msk [vmem:[%s2 + $0x218] sm:$0xff] %vm1206, %v963
  %1275 = vst.msk [vmem:[%s2 + $0x220] sm:$0xff] %vm1206, %v968
  %1276 = vst.msk [vmem:[%s2 + $0x228] sm:$0xff] %vm1206, %v971
  %1277 = vst.msk [vmem:[%s2 + $0x230] sm:$0xff] %vm1206, %v976
  %1278 = vst.msk [vmem:[%s2 + $0x238] sm:$0xff] %vm1206, %v979
  %1279 = vst.msk [vmem:[%s2 + $0x240] sm:$0xff] %vm1206, %v984
  %1280 = vst.msk [vmem:[%s2 + $0x248] sm:$0xff] %vm1206, %v987
  %1281 = vst.msk [vmem:[%s2 + $0x250] sm:$0xff] %vm1206, %v992
  %1282 = vst.msk [vmem:[%s2 + $0x258] sm:$0xff] %vm1206, %v995
  %1283 = vst.msk [vmem:[%s2 + $0x260] sm:$0xff] %vm1206, %v1000
  %1284 = vst.msk [vmem:[%s2 + $0x268] sm:$0xff] %vm1206, %v1003
  %1285 = vst.msk [vmem:[%s2 + $0x270] sm:$0xff] %vm1206, %v1008
  %1286 = vst.msk [vmem:[%s2 + $0x278] sm:$0xff] %vm1206, %v1011
  %1287 = vst.msk [vmem:[%s2 + $0x280] sm:$0xff] %vm1206, %v1016
  %1288 = vst.msk [vmem:[%s2 + $0x288] sm:$0xff] %vm1206, %v1019
  %1289 = vst.msk [vmem:[%s2 + $0x290] sm:$0xff] %vm1206, %v1024
  %1290 = vst.msk [vmem:[%s2 + $0x298] sm:$0xff] %vm1206, %v1027
  %1291 = vst.msk [vmem:[%s2 + $0x2a0] sm:$0xff] %vm1206, %v1032
  %1292 = vst.msk [vmem:[%s2 + $0x2a8] sm:$0xff] %vm1206, %v1035
  %1293 = vst.msk [vmem:[%s2 + $0x2b0] sm:$0xff] %vm1206, %v1040
  %1294 = vst.msk [vmem:[%s2 + $0x2b8] sm:$0xff] %vm1206, %v1043
  %1295 = vst.msk [vmem:[%s2 + $0x2c0] sm:$0xff] %vm1206, %v1048
  %1296 = vst.msk [vmem:[%s2 + $0x2c8] sm:$0xff] %vm1206, %v1051
  %1297 = vst.msk [vmem:[%s2 + $0x2d0] sm:$0xff] %vm1206, %v1056
  %1298 = vst.msk [vmem:[%s2 + $0x2d8] sm:$0xff] %vm1206, %v1059
  %1299 = vst.msk [vmem:[%s2 + $0x2e0] sm:$0xff] %vm1206, %v1064
  %1300 = vst.msk [vmem:[%s2 + $0x2e8] sm:$0xff] %vm1206, %v1067
  %1301 = vst.msk [vmem:[%s2 + $0x2f0] sm:$0xff] %vm1206, %v1072
  %1302 = vst.msk [vmem:[%s2 + $0x2f8] sm:$0xff] %vm1206, %v1075
  %1303 = vst.msk [vmem:[%s2 + $0x300] sm:$0xff] %vm1206, %v1080
  %1304 = vst.msk [vmem:[%s2 + $0x308] sm:$0xff] %vm1206, %v1083
  %1305 = vst.msk [vmem:[%s2 + $0x310] sm:$0xff] %vm1206, %v1088
  %1306 = vst.msk [vmem:[%s2 + $0x318] sm:$0xff] %vm1206, %v1091
  %1307 = vst.msk [vmem:[%s2 + $0x320] sm:$0xff] %vm1206, %v1096
  %1308 = vst.msk [vmem:[%s2 + $0x328] sm:$0xff] %vm1206, %v1099
  %1309 = vst.msk [vmem:[%s2 + $0x330] sm:$0xff] %vm1206, %v1104
  %1310 = vst.msk [vmem:[%s2 + $0x338] sm:$0xff] %vm1206, %v1107
  %1311 = vst.msk [vmem:[%s2 + $0x340] sm:$0xff] %vm1206, %v1112
  %1312 = vst.msk [vmem:[%s2 + $0x348] sm:$0xff] %vm1206, %v1115
  %1313 = vst.msk [vmem:[%s2 + $0x350] sm:$0xff] %vm1206, %v1120
  %1314 = vst.msk [vmem:[%s2 + $0x358] sm:$0xff] %vm1206, %v1123
  %1315 = vst.msk [vmem:[%s2 + $0x360] sm:$0xff] %vm1206, %v1128
  %1316 = vst.msk [vmem:[%s2 + $0x368] sm:$0xff] %vm1206, %v1131
  %1317 = vst.msk [vmem:[%s2 + $0x370] sm:$0xff] %vm1206, %v1136
  %1318 = vst.msk [vmem:[%s2 + $0x378] sm:$0xff] %vm1206, %v1139
  %1319 = vst.msk [vmem:[%s2 + $0x380] sm:$0xff] %vm1206, %v1144
  %1320 = vst.msk [vmem:[%s2 + $0x388] sm:$0xff] %vm1206, %v1147
  %1321 = vst.msk [vmem:[%s2 + $0x390] sm:$0xff] %vm1206, %v1152
  %1322 = vst.msk [vmem:[%s2 + $0x398] sm:$0xff] %vm1206, %v1155
  %1323 = vst.msk [vmem:[%s2 + $0x3a0] sm:$0xff] %vm1206, %v1160
  %1324 = vst.msk [vmem:[%s2 + $0x3a8] sm:$0xff] %vm1206, %v1163
  %1325 = vst.msk [vmem:[%s2 + $0x3b0] sm:$0xff] %vm1206, %v1168
  %1326 = vst.msk [vmem:[%s2 + $0x3b8] sm:$0xff] %vm1206, %v1171
  %1327 = vst.msk [vmem:[%s2 + $0x3c0] sm:$0xff] %vm1206, %v1176
  %1328 = vst.msk [vmem:[%s2 + $0x3c8] sm:$0xff] %vm1206, %v1179
  %1329 = vst.msk [vmem:[%s2 + $0x3d0] sm:$0xff] %vm1206, %v1184
  %1330 = vst.msk [vmem:[%s2 + $0x3d8] sm:$0xff] %vm1206, %v1187
  %1331 = vst.msk [vmem:[%s2 + $0x3e0] sm:$0xff] %vm1206, %v1192
  %1332 = vst.msk [vmem:[%s2 + $0x3e8] sm:$0xff] %vm1206, %v1195
  %1333 = vst.msk [vmem:[%s2 + $0x3f0] sm:$0xff] %vm1206, %v1200
  %1334 = vst.msk [vmem:[%s2 + $0x3f8] sm:$0xff] %vm1206, %v1203
  // Predicated region
  $region10: #{generator_forward.5} parent=0 // pred_check
    _
  $region11: #{generator_forward.5} parent=0 // pred_check_branch
    %1336 = sbr.rel (0) target = $region13
  $region12: #{generator_forward.5} parent=0 // pred_region
    _
  $region13: #{generator_forward.5} parent=0 // pred_fallthru
    _
  // Predicated region
  $region14: #{generator_forward.5} parent=0 // pred_check
    _
  $region15: #{generator_forward.5} parent=0 // pred_check_branch
    %1338 = sbr.rel (0) target = $region17
  $region16: #{generator_forward.5} parent=0 // pred_region
    _
  $region17: #{generator_forward.5} parent=0 // pred_fallthru
    _

// kernel: generator_forward.6
$region0: #{generator_forward.6}
  #allocation0 [shape = 'u32[]', space=smem, size = 0x4, offset = 0x4, fixed_abs, tag = 'smem constant byte address 0x4 - core index']
  #allocation1 [shape = 'u32[144,128]{1,0:T(1,128)}', space=vmem, size = 0x12000, scoped, tag = 'internal scratch']
  %s0 = inlined_call_operand.vmem [shape: f32[64,32], index: 0, kind: input, shape index: {}]
  %s1 = inlined_call_operand.vmem [shape: f32[64,1], index: 1, kind: input, shape index: {}]
  %s2 = inlined_call_operand.vmem [shape: f32[64,1], index: 2, kind: input, shape index: {}]
  %s3 = inlined_call_operand.vmem [shape: bf16[512,64], index: 3, kind: input, shape index: {}]
  %s4 = inlined_call_operand.vmem [shape: f32[512,32], index: 4, kind: output, shape index: {}]
  %s5 = sld [smem:[#allocation0]]
  $region26: #{generator_forward.6} parent=0
    _
  %s7 = ssub.s32 1, %s5
  %s8 = scalar_select 0, %s7, %s5
  // Predicated region
  $region2: #{generator_forward.6} parent=0 // pred_check
    _
  $region3: #{generator_forward.6} parent=0 // pred_check_branch
    %10 = sbr.rel (0) target = $region5
  $region4: #{generator_forward.6} parent=0 // pred_region
    _
  $region5: #{generator_forward.6} parent=0 // pred_fallthru
    _
  // Predicated region
  $region6: #{generator_forward.6} parent=0 // pred_check
    _
  $region7: #{generator_forward.6} parent=0 // pred_check_branch
    %12 = sbr.rel (0) target = $region9
  $region8: #{generator_forward.6} parent=0 // pred_region
    _
  $region9: #{generator_forward.6} parent=0 // pred_fallthru
    _
  // Predicated region
  $region10: #{generator_forward.6} parent=0 // pred_check
    _
  $region11: #{generator_forward.6} parent=0 // pred_check_branch
    %14 = sbr.rel (0) target = $region13
  $region12: #{generator_forward.6} parent=0 // pred_region
    _
  $region13: #{generator_forward.6} parent=0 // pred_fallthru
    _
  // Predicated region
  $region14: #{generator_forward.6} parent=0 // pred_check
    _
  $region15: #{generator_forward.6} parent=0 // pred_check_branch
    %16 = sbr.rel (0) target = $region17
  $region16: #{generator_forward.6} parent=0 // pred_region
    _
  $region17: #{generator_forward.6} parent=0 // pred_fallthru
    _
  %v18 = vld [vmem:[%s0] sm:$0xff]
  %v19 = vld [vmem:[%s0 + $0x8] sm:$0xff]
  %v20 = vld [vmem:[%s0 + $0x10] sm:$0xff]
  %v21 = vld [vmem:[%s0 + $0x18] sm:$0xff]
  %v22 = vld [vmem:[%s0 + $0x20] sm:$0xff]
  %v23 = vld [vmem:[%s0 + $0x28] sm:$0xff]
  %v24 = vld [vmem:[%s0 + $0x30] sm:$0xff]
  %v25 = vld [vmem:[%s0 + $0x38] sm:$0xff]
  %vm26 = vcmask 261120
  %v27 = vsel %vm26, %v18, 0.0
  %28 = vadd.xlane.f32.xlu0 %v27
  %v29 = vpop.xlane.xlu0 %28
  %v30 = vsel %vm26, %v19, 0.0
  %31 = vadd.xlane.f32.xlu0 %v30
  %v32 = vpop.xlane.xlu0 %31
  %v33 = vsel %vm26, %v20, 0.0
  %34 = vadd.xlane.f32.xlu0 %v33
  %v35 = vpop.xlane.xlu0 %34
  %v36 = vsel %vm26, %v21, 0.0
  %37 = vadd.xlane.f32.xlu0 %v36
  %v38 = vpop.xlane.xlu0 %37
  %v39 = vsel %vm26, %v22, 0.0
  %40 = vadd.xlane.f32.xlu0 %v39
  %v41 = vpop.xlane.xlu0 %40
  %v42 = vsel %vm26, %v23, 0.0
  %43 = vadd.xlane.f32.xlu0 %v42
  %v44 = vpop.xlane.xlu0 %43
  %v45 = vsel %vm26, %v24, 0.0
  %46 = vadd.xlane.f32.xlu0 %v45
  %v47 = vpop.xlane.xlu0 %46
  %v48 = vsel %vm26, %v25, 0.0
  %49 = vadd.xlane.f32.xlu0 %v48
  %v50 = vpop.xlane.xlu0 %49
  %v51 = vmul.f32 %v29, 0.03125
  %v52 = vmul.f32 %v32, 0.03125
  %v53 = vmul.f32 %v35, 0.03125
  %v54 = vmul.f32 %v38, 0.03125
  %v55 = vmul.f32 %v41, 0.03125
  %v56 = vmul.f32 %v44, 0.03125
  %v57 = vmul.f32 %v47, 0.03125
  %v58 = vmul.f32 %v50, 0.03125
  %v59 = vmul.f32 %v18, %v18
  %v60 = vmul.f32 %v19, %v19
  %v61 = vmul.f32 %v20, %v20
  %v62 = vmul.f32 %v21, %v21
  %v63 = vmul.f32 %v22, %v22
  %v64 = vmul.f32 %v23, %v23
  %v65 = vmul.f32 %v24, %v24
  %v66 = vmul.f32 %v25, %v25
  %v67 = vsel %vm26, %v59, 0.0
  %68 = vadd.xlane.f32.xlu0 %v67
  %v69 = vpop.xlane.xlu0 %68
  %v70 = vsel %vm26, %v60, 0.0
  %71 = vadd.xlane.f32.xlu0 %v70
  %v72 = vpop.xlane.xlu0 %71
  %v73 = vsel %vm26, %v61, 0.0
  %74 = vadd.xlane.f32.xlu0 %v73
  %v75 = vpop.xlane.xlu0 %74
  %v76 = vsel %vm26, %v62, 0.0
  %77 = vadd.xlane.f32.xlu0 %v76
  %v78 = vpop.xlane.xlu0 %77
  %v79 = vsel %vm26, %v63, 0.0
  %80 = vadd.xlane.f32.xlu0 %v79
  %v81 = vpop.xlane.xlu0 %80
  %v82 = vsel %vm26, %v64, 0.0
  %83 = vadd.xlane.f32.xlu0 %v82
  %v84 = vpop.xlane.xlu0 %83
  %v85 = vsel %vm26, %v65, 0.0
  %86 = vadd.xlane.f32.xlu0 %v85
  %v87 = vpop.xlane.xlu0 %86
  %v88 = vsel %vm26, %v66, 0.0
  %89 = vadd.xlane.f32.xlu0 %v88
  %v90 = vpop.xlane.xlu0 %89
  %v91 = vmul.f32 %v69, 0.03125
  %v92 = vmul.f32 %v72, 0.03125
  %v93 = vmul.f32 %v75, 0.03125
  %v94 = vmul.f32 %v78, 0.03125
  %v95 = vmul.f32 %v81, 0.03125
  %v96 = vmul.f32 %v84, 0.03125
  %v97 = vmul.f32 %v87, 0.03125
  %v98 = vmul.f32 %v90, 0.03125
  %v99 = vmul.f32 %v51, %v51
  %v100 = vmul.f32 %v52, %v52
  %v101 = vmul.f32 %v53, %v53
  %v102 = vmul.f32 %v54, %v54
  %v103 = vmul.f32 %v55, %v55
  %v104 = vmul.f32 %v56, %v56
  %v105 = vmul.f32 %v57, %v57
  %v106 = vmul.f32 %v58, %v58
  %v107 = vsub.f32 %v91, %v99
  %v108 = vsub.f32 %v92, %v100
  %v109 = vsub.f32 %v93, %v101
  %v110 = vsub.f32 %v94, %v102
  %v111 = vsub.f32 %v95, %v103
  %v112 = vsub.f32 %v96, %v104
  %v113 = vsub.f32 %v97, %v105
  %v114 = vsub.f32 %v98, %v106
  %v115 = vmax.f32 %v107, 0.0
  %v116 = vmax.f32 %v108, 0.0
  %v117 = vmax.f32 %v109, 0.0
  %v118 = vmax.f32 %v110, 0.0
  %v119 = vmax.f32 %v111, 0.0
  %v120 = vmax.f32 %v112, 0.0
  %v121 = vmax.f32 %v113, 0.0
  %v122 = vmax.f32 %v114, 0.0
  %v123 = vld [vmem:[%s1] sm:$0xff]
  %v124 = vld [vmem:[%s1 + $0x8] sm:$0xff]
  %v125 = vld [vmem:[%s1 + $0x10] sm:$0xff]
  %v126 = vld [vmem:[%s1 + $0x18] sm:$0xff]
  %v127 = vld [vmem:[%s1 + $0x20] sm:$0xff]
  %v128 = vld [vmem:[%s1 + $0x28] sm:$0xff]
  %v129 = vld [vmem:[%s1 + $0x30] sm:$0xff]
  %v130 = vld [vmem:[%s1 + $0x38] sm:$0xff]
  %v131 = vadd.f32 %v115, 1e-05
  %v132 = vadd.f32 %v116, 1e-05
  %v133 = vadd.f32 %v117, 1e-05
  %v134 = vadd.f32 %v118, 1e-05
  %v135 = vadd.f32 %v119, 1e-05
  %v136 = vadd.f32 %v120, 1e-05
  %v137 = vadd.f32 %v121, 1e-05
  %v138 = vadd.f32 %v122, 1e-05
  %v139 = vrsqrt.pop %v131
  %v140 = vrsqrt.pop %v132
  %v141 = vrsqrt.pop %v133
  %v142 = vrsqrt.pop %v134
  %v143 = vrsqrt.pop %v135
  %v144 = vrsqrt.pop %v136
  %v145 = vrsqrt.pop %v137
  %v146 = vrsqrt.pop %v138
  %v147 = vmul.f32 %v123, %v139
  %v148 = vmul.f32 %v124, %v140
  %v149 = vmul.f32 %v125, %v141
  %v150 = vmul.f32 %v126, %v142
  %v151 = vmul.f32 %v127, %v143
  %v152 = vmul.f32 %v128, %v144
  %v153 = vmul.f32 %v129, %v145
  %v154 = vmul.f32 %v130, %v146
  %v155 = vld [vmem:[%s2] sm:$0xff]
  %v156 = vld [vmem:[%s2 + $0x8] sm:$0xff]
  %v157 = vld [vmem:[%s2 + $0x10] sm:$0xff]
  %v158 = vld [vmem:[%s2 + $0x18] sm:$0xff]
  %v159 = vld [vmem:[%s2 + $0x20] sm:$0xff]
  %v160 = vld [vmem:[%s2 + $0x28] sm:$0xff]
  %v161 = vld [vmem:[%s2 + $0x30] sm:$0xff]
  %v162 = vld [vmem:[%s2 + $0x38] sm:$0xff]
  %v163 = vmul.f32 %v51, %v147
  %v164 = vmul.f32 %v52, %v148
  %v165 = vmul.f32 %v53, %v149
  %v166 = vmul.f32 %v54, %v150
  %v167 = vmul.f32 %v55, %v151
  %v168 = vmul.f32 %v56, %v152
  %v169 = vmul.f32 %v57, %v153
  %v170 = vmul.f32 %v58, %v154
  %v171 = vsub.f32 %v155, %v163
  %v172 = vsub.f32 %v156, %v164
  %v173 = vsub.f32 %v157, %v165
  %v174 = vsub.f32 %v158, %v166
  %v175 = vsub.f32 %v159, %v167
  %v176 = vsub.f32 %v160, %v168
  %v177 = vsub.f32 %v161, %v169
  %v178 = vsub.f32 %v162, %v170
  %180 = vset.pattern.permute.xlu0 0
  %181 = vperm.xlu0 %180, %v147
  %v182 = vpop.permute.xlu0 %181
  %185 = vset.pattern.permute.xlu0 0
  %186 = vperm.xlu0 %185, %v148
  %v187 = vpop.permute.xlu0 %186
  %190 = vset.pattern.permute.xlu0 0
  %191 = vperm.xlu0 %190, %v149
  %v192 = vpop.permute.xlu0 %191
  %195 = vset.pattern.permute.xlu0 0
  %196 = vperm.xlu0 %195, %v150
  %v197 = vpop.permute.xlu0 %196
  %200 = vset.pattern.permute.xlu0 0
  %201 = vperm.xlu0 %200, %v151
  %v202 = vpop.permute.xlu0 %201
  %205 = vset.pattern.permute.xlu0 0
  %206 = vperm.xlu0 %205, %v152
  %v207 = vpop.permute.xlu0 %206
  %210 = vset.pattern.permute.xlu0 0
  %211 = vperm.xlu0 %210, %v153
  %v212 = vpop.permute.xlu0 %211
  %215 = vset.pattern.permute.xlu0 0
  %216 = vperm.xlu0 %215, %v154
  %v217 = vpop.permute.xlu0 %216
  %v219 = vmul.f32 %v18, %v182
  %v220 = vmul.f32 %v19, %v187
  %v221 = vmul.f32 %v20, %v192
  %v222 = vmul.f32 %v21, %v197
  %v223 = vmul.f32 %v22, %v202
  %v224 = vmul.f32 %v23, %v207
  %v225 = vmul.f32 %v24, %v212
  %v226 = vmul.f32 %v25, %v217
  %228 = vset.pattern.permute.xlu0 0
  %229 = vperm.xlu0 %228, %v171
  %v230 = vpop.permute.xlu0 %229
  %233 = vset.pattern.permute.xlu0 0
  %234 = vperm.xlu0 %233, %v172
  %v235 = vpop.permute.xlu0 %234
  %238 = vset.pattern.permute.xlu0 0
  %239 = vperm.xlu0 %238, %v173
  %v240 = vpop.permute.xlu0 %239
  %243 = vset.pattern.permute.xlu0 0
  %244 = vperm.xlu0 %243, %v174
  %v245 = vpop.permute.xlu0 %244
  %248 = vset.pattern.permute.xlu0 0
  %249 = vperm.xlu0 %248, %v175
  %v250 = vpop.permute.xlu0 %249
  %253 = vset.pattern.permute.xlu0 0
  %254 = vperm.xlu0 %253, %v176
  %v255 = vpop.permute.xlu0 %254
  %258 = vset.pattern.permute.xlu0 0
  %259 = vperm.xlu0 %258, %v177
  %v260 = vpop.permute.xlu0 %259
  %263 = vset.pattern.permute.xlu0 0
  %264 = vperm.xlu0 %263, %v178
  %v265 = vpop.permute.xlu0 %264
  %v267 = vadd.f32 %v219, %v230
  %v268 = vadd.f32 %v220, %v235
  %v269 = vadd.f32 %v221, %v240
  %v270 = vadd.f32 %v222, %v245
  %v271 = vadd.f32 %v223, %v250
  %v272 = vadd.f32 %v224, %v255
  %v273 = vadd.f32 %v225, %v260
  %v274 = vadd.f32 %v226, %v265
  %v275 = vmax.f32 %v267, 0.0
  %v276 = vmax.f32 %v268, 0.0
  %v277 = vmax.f32 %v269, 0.0
  %v278 = vmax.f32 %v270, 0.0
  %v279 = vmax.f32 %v271, 0.0
  %v280 = vmax.f32 %v272, 0.0
  %v281 = vmax.f32 %v273, 0.0
  %v282 = vmax.f32 %v274, 0.0
  %v283 = vpack.c.bf16 %v276, %v275
  %v284 = vpack.c.bf16 %v278, %v277
  %v285 = vpack.c.bf16 %v280, %v279
  %v286 = vpack.c.bf16 %v282, %v281
  %v287 = vld [vmem:[%s3] sm:$0xf]
  %v288 = vld [vmem:[%s3 + $0x4] sm:$0xf]
  %v289 = vld [vmem:[%s3 + $0x8] sm:$0xf]
  %v290 = vld [vmem:[%s3 + $0xc] sm:$0xf]
  %v291 = vld [vmem:[%s3 + $0x10] sm:$0xf]
  %v292 = vld [vmem:[%s3 + $0x14] sm:$0xf]
  %v293 = vld [vmem:[%s3 + $0x18] sm:$0xf]
  %v294 = vld [vmem:[%s3 + $0x1c] sm:$0xf]
  %v295 = vld [vmem:[%s3 + $0x20] sm:$0xf]
  %v296 = vld [vmem:[%s3 + $0x24] sm:$0xf]
  %v297 = vld [vmem:[%s3 + $0x28] sm:$0xf]
  %v298 = vld [vmem:[%s3 + $0x2c] sm:$0xf]
  %v299 = vld [vmem:[%s3 + $0x30] sm:$0xf]
  %v300 = vld [vmem:[%s3 + $0x34] sm:$0xf]
  %v301 = vld [vmem:[%s3 + $0x38] sm:$0xf]
  %v302 = vld [vmem:[%s3 + $0x3c] sm:$0xf]
  %v303 = vld [vmem:[%s3 + $0x40] sm:$0xf]
  %v304 = vld [vmem:[%s3 + $0x44] sm:$0xf]
  %v305 = vld [vmem:[%s3 + $0x48] sm:$0xf]
  %v306 = vld [vmem:[%s3 + $0x4c] sm:$0xf]
  %v307 = vld [vmem:[%s3 + $0x50] sm:$0xf]
  %v308 = vld [vmem:[%s3 + $0x54] sm:$0xf]
  %v309 = vld [vmem:[%s3 + $0x58] sm:$0xf]
  %v310 = vld [vmem:[%s3 + $0x5c] sm:$0xf]
  %v311 = vld [vmem:[%s3 + $0x60] sm:$0xf]
  %v312 = vld [vmem:[%s3 + $0x64] sm:$0xf]
  %v313 = vld [vmem:[%s3 + $0x68] sm:$0xf]
  %v314 = vld [vmem:[%s3 + $0x6c] sm:$0xf]
  %v315 = vld [vmem:[%s3 + $0x70] sm:$0xf]
  %v316 = vld [vmem:[%s3 + $0x74] sm:$0xf]
  %v317 = vld [vmem:[%s3 + $0x78] sm:$0xf]
  %v318 = vld [vmem:[%s3 + $0x7c] sm:$0xf]
  %v319 = vld [vmem:[%s3 + $0x80] sm:$0xf]
  %v320 = vld [vmem:[%s3 + $0x84] sm:$0xf]
  %v321 = vld [vmem:[%s3 + $0x88] sm:$0xf]
  %v322 = vld [vmem:[%s3 + $0x8c] sm:$0xf]
  %v323 = vld [vmem:[%s3 + $0x90] sm:$0xf]
  %v324 = vld [vmem:[%s3 + $0x94] sm:$0xf]
  %v325 = vld [vmem:[%s3 + $0x98] sm:$0xf]
  %v326 = vld [vmem:[%s3 + $0x9c] sm:$0xf]
  %v327 = vld [vmem:[%s3 + $0xa0] sm:$0xf]
  %v328 = vld [vmem:[%s3 + $0xa4] sm:$0xf]
  %v329 = vld [vmem:[%s3 + $0xa8] sm:$0xf]
  %v330 = vld [vmem:[%s3 + $0xac] sm:$0xf]
  %v331 = vld [vmem:[%s3 + $0xb0] sm:$0xf]
  %v332 = vld [vmem:[%s3 + $0xb4] sm:$0xf]
  %v333 = vld [vmem:[%s3 + $0xb8] sm:$0xf]
  %v334 = vld [vmem:[%s3 + $0xbc] sm:$0xf]
  %v335 = vld [vmem:[%s3 + $0xc0] sm:$0xf]
  %v336 = vld [vmem:[%s3 + $0xc4] sm:$0xf]
  %v337 = vld [vmem:[%s3 + $0xc8] sm:$0xf]
  %v338 = vld [vmem:[%s3 + $0xcc] sm:$0xf]
  %v339 = vld [vmem:[%s3 + $0xd0] sm:$0xf]
  %v340 = vld [vmem:[%s3 + $0xd4] sm:$0xf]
  %v341 = vld [vmem:[%s3 + $0xd8] sm:$0xf]
  %v342 = vld [vmem:[%s3 + $0xdc] sm:$0xf]
  %v343 = vld [vmem:[%s3 + $0xe0] sm:$0xf]
  %v344 = vld [vmem:[%s3 + $0xe4] sm:$0xf]
  %v345 = vld [vmem:[%s3 + $0xe8] sm:$0xf]
  %v346 = vld [vmem:[%s3 + $0xec] sm:$0xf]
  %v347 = vld [vmem:[%s3 + $0xf0] sm:$0xf]
  %v348 = vld [vmem:[%s3 + $0xf4] sm:$0xf]
  %v349 = vld [vmem:[%s3 + $0xf8] sm:$0xf]
  %v350 = vld [vmem:[%s3 + $0xfc] sm:$0xf]
  %v415 = vunpack.c.l.b16 %v287
  %v416 = vunpack.c.l.b16 %v288
  %v417 = vunpack.c.l.b16 %v289
  %v418 = vunpack.c.l.b16 %v290
  %v419 = vunpack.c.l.b16 %v291
  %v420 = vunpack.c.l.b16 %v292
  %v421 = vunpack.c.l.b16 %v293
  %v422 = vunpack.c.l.b16 %v294
  %v423 = vunpack.c.l.b16 %v295
  %v424 = vunpack.c.l.b16 %v296
  %v425 = vunpack.c.l.b16 %v297
  %v426 = vunpack.c.l.b16 %v298
  %v427 = vunpack.c.l.b16 %v299
  %v428 = vunpack.c.l.b16 %v300
  %v429 = vunpack.c.l.b16 %v301
  %v430 = vunpack.c.l.b16 %v302
  %v431 = vunpack.c.l.b16 %v303
  %v432 = vunpack.c.l.b16 %v304
  %v433 = vunpack.c.l.b16 %v305
  %v434 = vunpack.c.l.b16 %v306
  %v435 = vunpack.c.l.b16 %v307
  %v436 = vunpack.c.l.b16 %v308
  %v437 = vunpack.c.l.b16 %v309
  %v438 = vunpack.c.l.b16 %v310
  %v439 = vunpack.c.l.b16 %v311
  %v440 = vunpack.c.l.b16 %v312
  %v441 = vunpack.c.l.b16 %v313
  %v442 = vunpack.c.l.b16 %v314
  %v443 = vunpack.c.l.b16 %v315
  %v444 = vunpack.c.l.b16 %v316
  %v445 = vunpack.c.l.b16 %v317
  %v446 = vunpack.c.l.b16 %v318
  %v447 = vunpack.c.l.b16 %v319
  %v448 = vunpack.c.l.b16 %v320
  %v449 = vunpack.c.l.b16 %v321
  %v450 = vunpack.c.l.b16 %v322
  %v451 = vunpack.c.l.b16 %v323
  %v452 = vunpack.c.l.b16 %v324
  %v453 = vunpack.c.l.b16 %v325
  %v454 = vunpack.c.l.b16 %v326
  %v455 = vunpack.c.l.b16 %v327
  %v456 = vunpack.c.l.b16 %v328
  %v457 = vunpack.c.l.b16 %v329
  %v458 = vunpack.c.l.b16 %v330
  %v459 = vunpack.c.l.b16 %v331
  %v460 = vunpack.c.l.b16 %v332
  %v461 = vunpack.c.l.b16 %v333
  %v462 = vunpack.c.l.b16 %v334
  %v463 = vunpack.c.l.b16 %v335
  %v464 = vunpack.c.l.b16 %v336
  %v465 = vunpack.c.l.b16 %v337
  %v466 = vunpack.c.l.b16 %v338
  %v467 = vunpack.c.l.b16 %v339
  %v468 = vunpack.c.l.b16 %v340
  %v469 = vunpack.c.l.b16 %v341
  %v470 = vunpack.c.l.b16 %v342
  %v471 = vunpack.c.l.b16 %v343
  %v472 = vunpack.c.l.b16 %v344
  %v473 = vunpack.c.l.b16 %v345
  %v474 = vunpack.c.l.b16 %v346
  %v475 = vunpack.c.l.b16 %v347
  %v476 = vunpack.c.l.b16 %v348
  %v477 = vunpack.c.l.b16 %v349
  %v478 = vunpack.c.l.b16 %v350
  %v479 = vpack.c.b16 %v416, %v415
  %v480 = vpack.c.b16 %v418, %v417
  %v481 = vpack.c.b16 %v420, %v419
  %v482 = vpack.c.b16 %v422, %v421
  %v483 = vpack.c.b16 %v424, %v423
  %v484 = vpack.c.b16 %v426, %v425
  %v485 = vpack.c.b16 %v428, %v427
  %v486 = vpack.c.b16 %v430, %v429
  %v487 = vpack.c.b16 %v432, %v431
  %v488 = vpack.c.b16 %v434, %v433
  %v489 = vpack.c.b16 %v436, %v435
  %v490 = vpack.c.b16 %v438, %v437
  %v491 = vpack.c.b16 %v440, %v439
  %v492 = vpack.c.b16 %v442, %v441
  %v493 = vpack.c.b16 %v444, %v443
  %v494 = vpack.c.b16 %v446, %v445
  %v495 = vpack.c.b16 %v448, %v447
  %v496 = vpack.c.b16 %v450, %v449
  %v497 = vpack.c.b16 %v452, %v451
  %v498 = vpack.c.b16 %v454, %v453
  %v499 = vpack.c.b16 %v456, %v455
  %v500 = vpack.c.b16 %v458, %v457
  %v501 = vpack.c.b16 %v460, %v459
  %v502 = vpack.c.b16 %v462, %v461
  %v503 = vpack.c.b16 %v464, %v463
  %v504 = vpack.c.b16 %v466, %v465
  %v505 = vpack.c.b16 %v468, %v467
  %v506 = vpack.c.b16 %v470, %v469
  %v507 = vpack.c.b16 %v472, %v471
  %v508 = vpack.c.b16 %v474, %v473
  %v509 = vpack.c.b16 %v476, %v475
  %v510 = vpack.c.b16 %v478, %v477
  %vm511 = vcmask 523264
  %v513 = vsel %vm511, %v479, 0
  %v516 = vsel %vm511, %v480, 0
  %v519 = vsel %vm511, %v481, 0
  %v522 = vsel %vm511, %v482, 0
  %v525 = vsel %vm511, %v483, 0
  %v528 = vsel %vm511, %v484, 0
  %v531 = vsel %vm511, %v485, 0
  %v534 = vsel %vm511, %v486, 0
  %v537 = vsel %vm511, %v487, 0
  %v540 = vsel %vm511, %v488, 0
  %v543 = vsel %vm511, %v489, 0
  %v546 = vsel %vm511, %v490, 0
  %v549 = vsel %vm511, %v491, 0
  %v552 = vsel %vm511, %v492, 0
  %v555 = vsel %vm511, %v493, 0
  %v558 = vsel %vm511, %v494, 0
  %v561 = vsel %vm511, %v495, 0
  %v564 = vsel %vm511, %v496, 0
  %v567 = vsel %vm511, %v497, 0
  %v570 = vsel %vm511, %v498, 0
  %v573 = vsel %vm511, %v499, 0
  %v576 = vsel %vm511, %v500, 0
  %v579 = vsel %vm511, %v501, 0
  %v582 = vsel %vm511, %v502, 0
  %v585 = vsel %vm511, %v503, 0
  %v588 = vsel %vm511, %v504, 0
  %v591 = vsel %vm511, %v505, 0
  %v594 = vsel %vm511, %v506, 0
  %v597 = vsel %vm511, %v507, 0
  %v600 = vsel %vm511, %v508, 0
  %v603 = vsel %vm511, %v509, 0
  %v606 = vsel %vm511, %v510, 0
  %608 = vmatprep.subr.bf16.mxu0 0
  %609 = vmatpush1.bf16.msra.mxu0 0
  %610 = vmatprep.subr.bf16.mxu0 0
  %611 = vmatpush1.bf16.msra.mxu0 0
  %612 = vmatprep.subr.bf16.mxu0 0
  %613 = vmatpush1.bf16.msra.mxu0 0
  %614 = vmatprep.subr.bf16.mxu0 0
  %615 = vmatpush1.bf16.msra.mxu0 0
  %616 = vmatprep.subr.bf16.mxu0 0
  %617 = vmatpush1.bf16.msra.mxu0 %v286
  %618 = vmatprep.subr.bf16.mxu0 0
  %619 = vmatpush1.bf16.msra.mxu0 %v285
  %620 = vmatprep.subr.bf16.mxu0 0
  %621 = vmatpush1.bf16.msra.mxu0 %v284
  %622 = vmatprep.subr.bf16.mxu0 0
  %623 = vmatpush1.bf16.msra.mxu0 %v283
  %624 = vmatprep.subr.bf16.mxu0 0
  %625 = vmatpush2.bf16.msra.mxu0 0
  %626 = vmatprep.subr.bf16.mxu0 0
  %627 = vmatpush2.bf16.msra.mxu0 0
  %628 = vmatprep.subr.bf16.mxu0 0
  %629 = vmatpush2.bf16.msra.mxu0 0
  %630 = vmatprep.subr.bf16.mxu0 0
  %631 = vmatpush2.bf16.msra.mxu0 0
  %632 = vmatprep.subr.bf16.mxu0 0
  %633 = vmatpush2.bf16.msra.mxu0 0
  %634 = vmatprep.subr.bf16.mxu0 0
  %635 = vmatpush2.bf16.msra.mxu0 0
  %636 = vmatprep.subr.bf16.mxu0 0
  %637 = vmatpush2.bf16.msra.mxu0 0
  %638 = vmatprep.subr.bf16.mxu0 0
  %639 = vmatpush2.bf16.msra.mxu0 0
  %640 = vmatprep.mubr.bf16.mxu0 0
  %641 = vmatmul.mubr.bf16.gmra.mxu0 %v513
  %v642 = vpop.f32.mrf.mxu0
  %v643 = vadd.f32 0.0, %v642
  %v644 = vpop.f32.mrf.mxu0
  %v645 = vpop.f32.mrf.mxu0
  %v646 = vadd.f32 0.0, %v645
  %v647 = vpop.f32.mrf.mxu0
  %648 = vmatprep.mubr.bf16.mxu0 0
  %649 = vmatmul.mubr.bf16.gmra.mxu0 %v516
  %v650 = vpop.f32.mrf.mxu0
  %v651 = vadd.f32 0.0, %v650
  %v652 = vpop.f32.mrf.mxu0
  %v653 = vpop.f32.mrf.mxu0
  %v654 = vadd.f32 0.0, %v653
  %v655 = vpop.f32.mrf.mxu0
  %656 = vmatprep.mubr.bf16.mxu0 0
  %657 = vmatmul.mubr.bf16.gmra.mxu0 %v519
  %v658 = vpop.f32.mrf.mxu0
  %v659 = vadd.f32 0.0, %v658
  %v660 = vpop.f32.mrf.mxu0
  %v661 = vpop.f32.mrf.mxu0
  %v662 = vadd.f32 0.0, %v661
  %v663 = vpop.f32.mrf.mxu0
  %664 = vmatprep.mubr.bf16.mxu0 0
  %665 = vmatmul.mubr.bf16.gmra.mxu0 %v522
  %v666 = vpop.f32.mrf.mxu0
  %v667 = vadd.f32 0.0, %v666
  %v668 = vpop.f32.mrf.mxu0
  %v669 = vpop.f32.mrf.mxu0
  %v670 = vadd.f32 0.0, %v669
  %v671 = vpop.f32.mrf.mxu0
  %672 = vmatprep.mubr.bf16.mxu0 0
  %673 = vmatmul.mubr.bf16.gmra.mxu0 %v525
  %v674 = vpop.f32.mrf.mxu0
  %v675 = vadd.f32 0.0, %v674
  %v676 = vpop.f32.mrf.mxu0
  %v677 = vpop.f32.mrf.mxu0
  %v678 = vadd.f32 0.0, %v677
  %v679 = vpop.f32.mrf.mxu0
  %680 = vmatprep.mubr.bf16.mxu0 0
  %681 = vmatmul.mubr.bf16.gmra.mxu0 %v528
  %v682 = vpop.f32.mrf.mxu0
  %v683 = vadd.f32 0.0, %v682
  %v684 = vpop.f32.mrf.mxu0
  %v685 = vpop.f32.mrf.mxu0
  %v686 = vadd.f32 0.0, %v685
  %v687 = vpop.f32.mrf.mxu0
  %688 = vmatprep.mubr.bf16.mxu0 0
  %689 = vmatmul.mubr.bf16.gmra.mxu0 %v531
  %v690 = vpop.f32.mrf.mxu0
  %v691 = vadd.f32 0.0, %v690
  %v692 = vpop.f32.mrf.mxu0
  %v693 = vpop.f32.mrf.mxu0
  %v694 = vadd.f32 0.0, %v693
  %v695 = vpop.f32.mrf.mxu0
  %696 = vmatprep.mubr.bf16.mxu0 0
  %697 = vmatmul.mubr.bf16.gmra.mxu0 %v534
  %v698 = vpop.f32.mrf.mxu0
  %v699 = vadd.f32 0.0, %v698
  %v700 = vpop.f32.mrf.mxu0
  %v701 = vpop.f32.mrf.mxu0
  %v702 = vadd.f32 0.0, %v701
  %v703 = vpop.f32.mrf.mxu0
  %704 = vmatprep.mubr.bf16.mxu0 0
  %705 = vmatmul.mubr.bf16.gmra.mxu0 %v537
  %v706 = vpop.f32.mrf.mxu0
  %v707 = vadd.f32 0.0, %v706
  %v708 = vpop.f32.mrf.mxu0
  %v709 = vpop.f32.mrf.mxu0
  %v710 = vadd.f32 0.0, %v709
  %v711 = vpop.f32.mrf.mxu0
  %712 = vmatprep.mubr.bf16.mxu0 0
  %713 = vmatmul.mubr.bf16.gmra.mxu0 %v540
  %v714 = vpop.f32.mrf.mxu0
  %v715 = vadd.f32 0.0, %v714
  %v716 = vpop.f32.mrf.mxu0
  %v717 = vpop.f32.mrf.mxu0
  %v718 = vadd.f32 0.0, %v717
  %v719 = vpop.f32.mrf.mxu0
  %720 = vmatprep.mubr.bf16.mxu0 0
  %721 = vmatmul.mubr.bf16.gmra.mxu0 %v543
  %v722 = vpop.f32.mrf.mxu0
  %v723 = vadd.f32 0.0, %v722
  %v724 = vpop.f32.mrf.mxu0
  %v725 = vpop.f32.mrf.mxu0
  %v726 = vadd.f32 0.0, %v725
  %v727 = vpop.f32.mrf.mxu0
  %728 = vmatprep.mubr.bf16.mxu0 0
  %729 = vmatmul.mubr.bf16.gmra.mxu0 %v546
  %v730 = vpop.f32.mrf.mxu0
  %v731 = vadd.f32 0.0, %v730
  %v732 = vpop.f32.mrf.mxu0
  %v733 = vpop.f32.mrf.mxu0
  %v734 = vadd.f32 0.0, %v733
  %v735 = vpop.f32.mrf.mxu0
  %736 = vmatprep.mubr.bf16.mxu0 0
  %737 = vmatmul.mubr.bf16.gmra.mxu0 %v549
  %v738 = vpop.f32.mrf.mxu0
  %v739 = vadd.f32 0.0, %v738
  %v740 = vpop.f32.mrf.mxu0
  %v741 = vpop.f32.mrf.mxu0
  %v742 = vadd.f32 0.0, %v741
  %v743 = vpop.f32.mrf.mxu0
  %744 = vmatprep.mubr.bf16.mxu0 0
  %745 = vmatmul.mubr.bf16.gmra.mxu0 %v552
  %v746 = vpop.f32.mrf.mxu0
  %v747 = vadd.f32 0.0, %v746
  %v748 = vpop.f32.mrf.mxu0
  %v749 = vpop.f32.mrf.mxu0
  %v750 = vadd.f32 0.0, %v749
  %v751 = vpop.f32.mrf.mxu0
  %752 = vmatprep.mubr.bf16.mxu0 0
  %753 = vmatmul.mubr.bf16.gmra.mxu0 %v555
  %v754 = vpop.f32.mrf.mxu0
  %v755 = vadd.f32 0.0, %v754
  %v756 = vpop.f32.mrf.mxu0
  %v757 = vpop.f32.mrf.mxu0
  %v758 = vadd.f32 0.0, %v757
  %v759 = vpop.f32.mrf.mxu0
  %760 = vmatprep.mubr.bf16.mxu0 0
  %761 = vmatmul.mubr.bf16.gmra.mxu0 %v558
  %v762 = vpop.f32.mrf.mxu0
  %v763 = vadd.f32 0.0, %v762
  %v764 = vpop.f32.mrf.mxu0
  %v765 = vpop.f32.mrf.mxu0
  %v766 = vadd.f32 0.0, %v765
  %v767 = vpop.f32.mrf.mxu0
  %768 = vmatprep.mubr.bf16.mxu0 0
  %769 = vmatmul.mubr.bf16.gmra.mxu0 %v561
  %v770 = vpop.f32.mrf.mxu0
  %v771 = vadd.f32 0.0, %v770
  %v772 = vpop.f32.mrf.mxu0
  %v773 = vpop.f32.mrf.mxu0
  %v774 = vadd.f32 0.0, %v773
  %v775 = vpop.f32.mrf.mxu0
  %776 = vmatprep.mubr.bf16.mxu0 0
  %777 = vmatmul.mubr.bf16.gmra.mxu0 %v564
  %v778 = vpop.f32.mrf.mxu0
  %v779 = vadd.f32 0.0, %v778
  %v780 = vpop.f32.mrf.mxu0
  %v781 = vpop.f32.mrf.mxu0
  %v782 = vadd.f32 0.0, %v781
  %v783 = vpop.f32.mrf.mxu0
  %784 = vmatprep.mubr.bf16.mxu0 0
  %785 = vmatmul.mubr.bf16.gmra.mxu0 %v567
  %v786 = vpop.f32.mrf.mxu0
  %v787 = vadd.f32 0.0, %v786
  %v788 = vpop.f32.mrf.mxu0
  %v789 = vpop.f32.mrf.mxu0
  %v790 = vadd.f32 0.0, %v789
  %v791 = vpop.f32.mrf.mxu0
  %792 = vmatprep.mubr.bf16.mxu0 0
  %793 = vmatmul.mubr.bf16.gmra.mxu0 %v570
  %v794 = vpop.f32.mrf.mxu0
  %v795 = vadd.f32 0.0, %v794
  %v796 = vpop.f32.mrf.mxu0
  %v797 = vpop.f32.mrf.mxu0
  %v798 = vadd.f32 0.0, %v797
  %v799 = vpop.f32.mrf.mxu0
  %800 = vmatprep.mubr.bf16.mxu0 0
  %801 = vmatmul.mubr.bf16.gmra.mxu0 %v573
  %v802 = vpop.f32.mrf.mxu0
  %v803 = vadd.f32 0.0, %v802
  %v804 = vpop.f32.mrf.mxu0
  %v805 = vpop.f32.mrf.mxu0
  %v806 = vadd.f32 0.0, %v805
  %v807 = vpop.f32.mrf.mxu0
  %808 = vmatprep.mubr.bf16.mxu0 0
  %809 = vmatmul.mubr.bf16.gmra.mxu0 %v576
  %v810 = vpop.f32.mrf.mxu0
  %v811 = vadd.f32 0.0, %v810
  %v812 = vpop.f32.mrf.mxu0
  %v813 = vpop.f32.mrf.mxu0
  %v814 = vadd.f32 0.0, %v813
  %v815 = vpop.f32.mrf.mxu0
  %816 = vmatprep.mubr.bf16.mxu0 0
  %817 = vmatmul.mubr.bf16.gmra.mxu0 %v579
  %v818 = vpop.f32.mrf.mxu0
  %v819 = vadd.f32 0.0, %v818
  %v820 = vpop.f32.mrf.mxu0
  %v821 = vpop.f32.mrf.mxu0
  %v822 = vadd.f32 0.0, %v821
  %v823 = vpop.f32.mrf.mxu0
  %824 = vmatprep.mubr.bf16.mxu0 0
  %825 = vmatmul.mubr.bf16.gmra.mxu0 %v582
  %v826 = vpop.f32.mrf.mxu0
  %v827 = vadd.f32 0.0, %v826
  %v828 = vpop.f32.mrf.mxu0
  %v829 = vpop.f32.mrf.mxu0
  %v830 = vadd.f32 0.0, %v829
  %v831 = vpop.f32.mrf.mxu0
  %832 = vmatprep.mubr.bf16.mxu0 0
  %833 = vmatmul.mubr.bf16.gmra.mxu0 %v585
  %v834 = vpop.f32.mrf.mxu0
  %v835 = vadd.f32 0.0, %v834
  %v836 = vpop.f32.mrf.mxu0
  %v837 = vpop.f32.mrf.mxu0
  %v838 = vadd.f32 0.0, %v837
  %v839 = vpop.f32.mrf.mxu0
  %840 = vmatprep.mubr.bf16.mxu0 0
  %841 = vmatmul.mubr.bf16.gmra.mxu0 %v588
  %v842 = vpop.f32.mrf.mxu0
  %v843 = vadd.f32 0.0, %v842
  %v844 = vpop.f32.mrf.mxu0
  %v845 = vpop.f32.mrf.mxu0
  %v846 = vadd.f32 0.0, %v845
  %v847 = vpop.f32.mrf.mxu0
  %848 = vmatprep.mubr.bf16.mxu0 0
  %849 = vmatmul.mubr.bf16.gmra.mxu0 %v591
  %v850 = vpop.f32.mrf.mxu0
  %v851 = vadd.f32 0.0, %v850
  %v852 = vpop.f32.mrf.mxu0
  %v853 = vpop.f32.mrf.mxu0
  %v854 = vadd.f32 0.0, %v853
  %v855 = vpop.f32.mrf.mxu0
  %856 = vmatprep.mubr.bf16.mxu0 0
  %857 = vmatmul.mubr.bf16.gmra.mxu0 %v594
  %v858 = vpop.f32.mrf.mxu0
  %v859 = vadd.f32 0.0, %v858
  %v860 = vpop.f32.mrf.mxu0
  %v861 = vpop.f32.mrf.mxu0
  %v862 = vadd.f32 0.0, %v861
  %v863 = vpop.f32.mrf.mxu0
  %864 = vmatprep.mubr.bf16.mxu0 0
  %865 = vmatmul.mubr.bf16.gmra.mxu0 %v597
  %v866 = vpop.f32.mrf.mxu0
  %v867 = vadd.f32 0.0, %v866
  %v868 = vpop.f32.mrf.mxu0
  %v869 = vpop.f32.mrf.mxu0
  %v870 = vadd.f32 0.0, %v869
  %v871 = vpop.f32.mrf.mxu0
  %872 = vmatprep.mubr.bf16.mxu0 0
  %873 = vmatmul.mubr.bf16.gmra.mxu0 %v600
  %v874 = vpop.f32.mrf.mxu0
  %v875 = vadd.f32 0.0, %v874
  %v876 = vpop.f32.mrf.mxu0
  %v877 = vpop.f32.mrf.mxu0
  %v878 = vadd.f32 0.0, %v877
  %v879 = vpop.f32.mrf.mxu0
  %880 = vmatprep.mubr.bf16.mxu0 0
  %881 = vmatmul.mubr.bf16.gmra.mxu0 %v603
  %v882 = vpop.f32.mrf.mxu0
  %v883 = vadd.f32 0.0, %v882
  %v884 = vpop.f32.mrf.mxu0
  %v885 = vpop.f32.mrf.mxu0
  %v886 = vadd.f32 0.0, %v885
  %v887 = vpop.f32.mrf.mxu0
  %888 = vmatprep.mubr.bf16.mxu0 0
  %889 = vmatmul.mubr.bf16.gmra.mxu0 %v606
  %v890 = vpop.f32.mrf.mxu0
  %v891 = vadd.f32 0.0, %v890
  %v892 = vpop.f32.mrf.mxu0
  %v893 = vpop.f32.mrf.mxu0
  %v894 = vadd.f32 0.0, %v893
  %v895 = vpop.f32.mrf.mxu0
  %896 = vdwg.mxu0
  %897 = vst.msk [vmem:[%s4] sm:$0xff] %vm26, %v643
  %898 = vst.msk [vmem:[%s4 + $0x8] sm:$0xff] %vm26, %v646
  %899 = vst.msk [vmem:[%s4 + $0x10] sm:$0xff] %vm26, %v651
  %900 = vst.msk [vmem:[%s4 + $0x18] sm:$0xff] %vm26, %v654
  %901 = vst.msk [vmem:[%s4 + $0x20] sm:$0xff] %vm26, %v659
  %902 = vst.msk [vmem:[%s4 + $0x28] sm:$0xff] %vm26, %v662
  %903 = vst.msk [vmem:[%s4 + $0x30] sm:$0xff] %vm26, %v667
  %904 = vst.msk [vmem:[%s4 + $0x38] sm:$0xff] %vm26, %v670
  %905 = vst.msk [vmem:[%s4 + $0x40] sm:$0xff] %vm26, %v675
  %906 = vst.msk [vmem:[%s4 + $0x48] sm:$0xff] %vm26, %v678
  %907 = vst.msk [vmem:[%s4 + $0x50] sm:$0xff] %vm26, %v683
  %908 = vst.msk [vmem:[%s4 + $0x58] sm:$0xff] %vm26, %v686
  %909 = vst.msk [vmem:[%s4 + $0x60] sm:$0xff] %vm26, %v691
  %910 = vst.msk [vmem:[%s4 + $0x68] sm:$0xff] %vm26, %v694
  %911 = vst.msk [vmem:[%s4 + $0x70] sm:$0xff] %vm26, %v699
  %912 = vst.msk [vmem:[%s4 + $0x78] sm:$0xff] %vm26, %v702
  %913 = vst.msk [vmem:[%s4 + $0x80] sm:$0xff] %vm26, %v707
  %914 = vst.msk [vmem:[%s4 + $0x88] sm:$0xff] %vm26, %v710
  %915 = vst.msk [vmem:[%s4 + $0x90] sm:$0xff] %vm26, %v715
  %916 = vst.msk [vmem:[%s4 + $0x98] sm:$0xff] %vm26, %v718
  %917 = vst.msk [vmem:[%s4 + $0xa0] sm:$0xff] %vm26, %v723
  %918 = vst.msk [vmem:[%s4 + $0xa8] sm:$0xff] %vm26, %v726
  %919 = vst.msk [vmem:[%s4 + $0xb0] sm:$0xff] %vm26, %v731
  %920 = vst.msk [vmem:[%s4 + $0xb8] sm:$0xff] %vm26, %v734
  %921 = vst.msk [vmem:[%s4 + $0xc0] sm:$0xff] %vm26, %v739
  %922 = vst.msk [vmem:[%s4 + $0xc8] sm:$0xff] %vm26, %v742
  %923 = vst.msk [vmem:[%s4 + $0xd0] sm:$0xff] %vm26, %v747
  %924 = vst.msk [vmem:[%s4 + $0xd8] sm:$0xff] %vm26, %v750
  %925 = vst.msk [vmem:[%s4 + $0xe0] sm:$0xff] %vm26, %v755
  %926 = vst.msk [vmem:[%s4 + $0xe8] sm:$0xff] %vm26, %v758
  %927 = vst.msk [vmem:[%s4 + $0xf0] sm:$0xff] %vm26, %v763
  %928 = vst.msk [vmem:[%s4 + $0xf8] sm:$0xff] %vm26, %v766
  %929 = vst.msk [vmem:[%s4 + $0x100] sm:$0xff] %vm26, %v771
  %930 = vst.msk [vmem:[%s4 + $0x108] sm:$0xff] %vm26, %v774
  %931 = vst.msk [vmem:[%s4 + $0x110] sm:$0xff] %vm26, %v779
  %932 = vst.msk [vmem:[%s4 + $0x118] sm:$0xff] %vm26, %v782
  %933 = vst.msk [vmem:[%s4 + $0x120] sm:$0xff] %vm26, %v787
  %934 = vst.msk [vmem:[%s4 + $0x128] sm:$0xff] %vm26, %v790
  %935 = vst.msk [vmem:[%s4 + $0x130] sm:$0xff] %vm26, %v795
  %936 = vst.msk [vmem:[%s4 + $0x138] sm:$0xff] %vm26, %v798
  %937 = vst.msk [vmem:[%s4 + $0x140] sm:$0xff] %vm26, %v803
  %938 = vst.msk [vmem:[%s4 + $0x148] sm:$0xff] %vm26, %v806
  %939 = vst.msk [vmem:[%s4 + $0x150] sm:$0xff] %vm26, %v811
  %940 = vst.msk [vmem:[%s4 + $0x158] sm:$0xff] %vm26, %v814
  %941 = vst.msk [vmem:[%s4 + $0x160] sm:$0xff] %vm26, %v819
  %942 = vst.msk [vmem:[%s4 + $0x168] sm:$0xff] %vm26, %v822
  %943 = vst.msk [vmem:[%s4 + $0x170] sm:$0xff] %vm26, %v827
  %944 = vst.msk [vmem:[%s4 + $0x178] sm:$0xff] %vm26, %v830
  %945 = vst.msk [vmem:[%s4 + $0x180] sm:$0xff] %vm26, %v835
  %946 = vst.msk [vmem:[%s4 + $0x188] sm:$0xff] %vm26, %v838
  %947 = vst.msk [vmem:[%s4 + $0x190] sm:$0xff] %vm26, %v843
  %948 = vst.msk [vmem:[%s4 + $0x198] sm:$0xff] %vm26, %v846
  %949 = vst.msk [vmem:[%s4 + $0x1a0] sm:$0xff] %vm26, %v851
  %950 = vst.msk [vmem:[%s4 + $0x1a8] sm:$0xff] %vm26, %v854
  %951 = vst.msk [vmem:[%s4 + $0x1b0] sm:$0xff] %vm26, %v859
  %952 = vst.msk [vmem:[%s4 + $0x1b8] sm:$0xff] %vm26, %v862
  %953 = vst.msk [vmem:[%s4 + $0x1c0] sm:$0xff] %vm26, %v867
  %954 = vst.msk [vmem:[%s4 + $0x1c8] sm:$0xff] %vm26, %v870
  %955 = vst.msk [vmem:[%s4 + $0x1d0] sm:$0xff] %vm26, %v875
  %956 = vst.msk [vmem:[%s4 + $0x1d8] sm:$0xff] %vm26, %v878
  %957 = vst.msk [vmem:[%s4 + $0x1e0] sm:$0xff] %vm26, %v883
  %958 = vst.msk [vmem:[%s4 + $0x1e8] sm:$0xff] %vm26, %v886
  %959 = vst.msk [vmem:[%s4 + $0x1f0] sm:$0xff] %vm26, %v891
  %960 = vst.msk [vmem:[%s4 + $0x1f8] sm:$0xff] %vm26, %v894
  // Predicated region
  $region18: #{generator_forward.6} parent=0 // pred_check
    _
  $region19: #{generator_forward.6} parent=0 // pred_check_branch
    %962 = sbr.rel (0) target = $region21
  $region20: #{generator_forward.6} parent=0 // pred_region
    _
  $region21: #{generator_forward.6} parent=0 // pred_fallthru
    _
  // Predicated region
  $region22: #{generator_forward.6} parent=0 // pred_check
    _
  $region23: #{generator_forward.6} parent=0 // pred_check_branch
    %964 = sbr.rel (0) target = $region25
  $region24: #{generator_forward.6} parent=0 // pred_region
    _
  $region25: #{generator_forward.6} parent=0 // pred_fallthru
    _

// kernel: generator_forward.7
$region0: #{generator_forward.7}
  #allocation0 [shape = 'u32[]', space=smem, size = 0x4, offset = 0x4, fixed_abs, tag = 'smem constant byte address 0x4 - core index']
  #allocation1 [shape = 'u32[144,128]{1,0:T(1,128)}', space=vmem, size = 0x12000, scoped, tag = 'internal scratch']
  %s0 = inlined_call_operand.vmem [shape: f32[32,128], index: 0, kind: input, shape index: {}]
  %s1 = inlined_call_operand.vmem [shape: f32[32,1], index: 1, kind: input, shape index: {}]
  %s2 = inlined_call_operand.vmem [shape: f32[32,1], index: 2, kind: input, shape index: {}]
  %s3 = inlined_call_operand.vmem [shape: bf16[256,32], index: 3, kind: input, shape index: {}]
  %s4 = inlined_call_operand.vmem [shape: f32[256,128], index: 4, kind: output, shape index: {}]
  %s5 = sld [smem:[#allocation0]]
  $region26: #{generator_forward.7} parent=0
    _
  %s7 = ssub.s32 1, %s5
  %s8 = scalar_select 0, %s7, %s5
  // Predicated region
  $region2: #{generator_forward.7} parent=0 // pred_check
    _
  $region3: #{generator_forward.7} parent=0 // pred_check_branch
    %10 = sbr.rel (0) target = $region5
  $region4: #{generator_forward.7} parent=0 // pred_region
    _
  $region5: #{generator_forward.7} parent=0 // pred_fallthru
    _
  // Predicated region
  $region6: #{generator_forward.7} parent=0 // pred_check
    _
  $region7: #{generator_forward.7} parent=0 // pred_check_branch
    %12 = sbr.rel (0) target = $region9
  $region8: #{generator_forward.7} parent=0 // pred_region
    _
  $region9: #{generator_forward.7} parent=0 // pred_fallthru
    _
  // Predicated region
  $region10: #{generator_forward.7} parent=0 // pred_check
    _
  $region11: #{generator_forward.7} parent=0 // pred_check_branch
    %14 = sbr.rel (0) target = $region13
  $region12: #{generator_forward.7} parent=0 // pred_region
    _
  $region13: #{generator_forward.7} parent=0 // pred_fallthru
    _
  // Predicated region
  $region14: #{generator_forward.7} parent=0 // pred_check
    _
  $region15: #{generator_forward.7} parent=0 // pred_check_branch
    %16 = sbr.rel (0) target = $region17
  $region16: #{generator_forward.7} parent=0 // pred_region
    _
  $region17: #{generator_forward.7} parent=0 // pred_fallthru
    _
  %v18 = vld [vmem:[%s0] sm:$0xff]
  %v19 = vld [vmem:[%s0 + $0x8] sm:$0xff]
  %v20 = vld [vmem:[%s0 + $0x10] sm:$0xff]
  %v21 = vld [vmem:[%s0 + $0x18] sm:$0xff]
  %22 = vadd.xlane.f32.xlu0 %v18
  %v23 = vpop.xlane.xlu0 %22
  %24 = vadd.xlane.f32.xlu0 %v19
  %v25 = vpop.xlane.xlu0 %24
  %26 = vadd.xlane.f32.xlu0 %v20
  %v27 = vpop.xlane.xlu0 %26
  %28 = vadd.xlane.f32.xlu0 %v21
  %v29 = vpop.xlane.xlu0 %28
  %v30 = vmul.f32 %v23, 0.0078125
  %v31 = vmul.f32 %v25, 0.0078125
  %v32 = vmul.f32 %v27, 0.0078125
  %v33 = vmul.f32 %v29, 0.0078125
  %v34 = vmul.f32 %v18, %v18
  %v35 = vmul.f32 %v19, %v19
  %v36 = vmul.f32 %v20, %v20
  %v37 = vmul.f32 %v21, %v21
  %38 = vadd.xlane.f32.xlu0 %v34
  %v39 = vpop.xlane.xlu0 %38
  %40 = vadd.xlane.f32.xlu0 %v35
  %v41 = vpop.xlane.xlu0 %40
  %42 = vadd.xlane.f32.xlu0 %v36
  %v43 = vpop.xlane.xlu0 %42
  %44 = vadd.xlane.f32.xlu0 %v37
  %v45 = vpop.xlane.xlu0 %44
  %v46 = vmul.f32 %v39, 0.0078125
  %v47 = vmul.f32 %v41, 0.0078125
  %v48 = vmul.f32 %v43, 0.0078125
  %v49 = vmul.f32 %v45, 0.0078125
  %v50 = vmul.f32 %v30, %v30
  %v51 = vmul.f32 %v31, %v31
  %v52 = vmul.f32 %v32, %v32
  %v53 = vmul.f32 %v33, %v33
  %v54 = vsub.f32 %v46, %v50
  %v55 = vsub.f32 %v47, %v51
  %v56 = vsub.f32 %v48, %v52
  %v57 = vsub.f32 %v49, %v53
  %v58 = vmax.f32 %v54, 0.0
  %v59 = vmax.f32 %v55, 0.0
  %v60 = vmax.f32 %v56, 0.0
  %v61 = vmax.f32 %v57, 0.0
  %v62 = vld [vmem:[%s1] sm:$0xff]
  %v63 = vld [vmem:[%s1 + $0x8] sm:$0xff]
  %v64 = vld [vmem:[%s1 + $0x10] sm:$0xff]
  %v65 = vld [vmem:[%s1 + $0x18] sm:$0xff]
  %v66 = vadd.f32 %v58, 1e-05
  %v67 = vadd.f32 %v59, 1e-05
  %v68 = vadd.f32 %v60, 1e-05
  %v69 = vadd.f32 %v61, 1e-05
  %v70 = vrsqrt.pop %v66
  %v71 = vrsqrt.pop %v67
  %v72 = vrsqrt.pop %v68
  %v73 = vrsqrt.pop %v69
  %v74 = vmul.f32 %v62, %v70
  %v75 = vmul.f32 %v63, %v71
  %v76 = vmul.f32 %v64, %v72
  %v77 = vmul.f32 %v65, %v73
  %v78 = vld [vmem:[%s2] sm:$0xff]
  %v79 = vld [vmem:[%s2 + $0x8] sm:$0xff]
  %v80 = vld [vmem:[%s2 + $0x10] sm:$0xff]
  %v81 = vld [vmem:[%s2 + $0x18] sm:$0xff]
  %v82 = vmul.f32 %v30, %v74
  %v83 = vmul.f32 %v31, %v75
  %v84 = vmul.f32 %v32, %v76
  %v85 = vmul.f32 %v33, %v77
  %v86 = vsub.f32 %v78, %v82
  %v87 = vsub.f32 %v79, %v83
  %v88 = vsub.f32 %v80, %v84
  %v89 = vsub.f32 %v81, %v85
  %91 = vset.pattern.permute.xlu0 0
  %92 = vperm.xlu0 %91, %v74
  %v93 = vpop.permute.xlu0 %92
  %96 = vset.pattern.permute.xlu0 0
  %97 = vperm.xlu0 %96, %v75
  %v98 = vpop.permute.xlu0 %97
  %101 = vset.pattern.permute.xlu0 0
  %102 = vperm.xlu0 %101, %v76
  %v103 = vpop.permute.xlu0 %102
  %106 = vset.pattern.permute.xlu0 0
  %107 = vperm.xlu0 %106, %v77
  %v108 = vpop.permute.xlu0 %107
  %v110 = vmul.f32 %v18, %v93
  %v111 = vmul.f32 %v19, %v98
  %v112 = vmul.f32 %v20, %v103
  %v113 = vmul.f32 %v21, %v108
  %115 = vset.pattern.permute.xlu0 0
  %116 = vperm.xlu0 %115, %v86
  %v117 = vpop.permute.xlu0 %116
  %120 = vset.pattern.permute.xlu0 0
  %121 = vperm.xlu0 %120, %v87
  %v122 = vpop.permute.xlu0 %121
  %125 = vset.pattern.permute.xlu0 0
  %126 = vperm.xlu0 %125, %v88
  %v127 = vpop.permute.xlu0 %126
  %130 = vset.pattern.permute.xlu0 0
  %131 = vperm.xlu0 %130, %v89
  %v132 = vpop.permute.xlu0 %131
  %v134 = vadd.f32 %v110, %v117
  %v135 = vadd.f32 %v111, %v122
  %v136 = vadd.f32 %v112, %v127
  %v137 = vadd.f32 %v113, %v132
  %v138 = vmax.f32 %v134, 0.0
  %v139 = vmax.f32 %v135, 0.0
  %v140 = vmax.f32 %v136, 0.0
  %v141 = vmax.f32 %v137, 0.0
  %v142 = vpack.c.bf16 %v139, %v138
  %v143 = vpack.c.bf16 %v141, %v140
  %v144 = vld [vmem:[%s3] sm:$0xf]
  %v145 = vld [vmem:[%s3 + $0x4] sm:$0xf]
  %v146 = vld [vmem:[%s3 + $0x8] sm:$0xf]
  %v147 = vld [vmem:[%s3 + $0xc] sm:$0xf]
  %v148 = vld [vmem:[%s3 + $0x10] sm:$0xf]
  %v149 = vld [vmem:[%s3 + $0x14] sm:$0xf]
  %v150 = vld [vmem:[%s3 + $0x18] sm:$0xf]
  %v151 = vld [vmem:[%s3 + $0x1c] sm:$0xf]
  %v152 = vld [vmem:[%s3 + $0x20] sm:$0xf]
  %v153 = vld [vmem:[%s3 + $0x24] sm:$0xf]
  %v154 = vld [vmem:[%s3 + $0x28] sm:$0xf]
  %v155 = vld [vmem:[%s3 + $0x2c] sm:$0xf]
  %v156 = vld [vmem:[%s3 + $0x30] sm:$0xf]
  %v157 = vld [vmem:[%s3 + $0x34] sm:$0xf]
  %v158 = vld [vmem:[%s3 + $0x38] sm:$0xf]
  %v159 = vld [vmem:[%s3 + $0x3c] sm:$0xf]
  %v160 = vld [vmem:[%s3 + $0x40] sm:$0xf]
  %v161 = vld [vmem:[%s3 + $0x44] sm:$0xf]
  %v162 = vld [vmem:[%s3 + $0x48] sm:$0xf]
  %v163 = vld [vmem:[%s3 + $0x4c] sm:$0xf]
  %v164 = vld [vmem:[%s3 + $0x50] sm:$0xf]
  %v165 = vld [vmem:[%s3 + $0x54] sm:$0xf]
  %v166 = vld [vmem:[%s3 + $0x58] sm:$0xf]
  %v167 = vld [vmem:[%s3 + $0x5c] sm:$0xf]
  %v168 = vld [vmem:[%s3 + $0x60] sm:$0xf]
  %v169 = vld [vmem:[%s3 + $0x64] sm:$0xf]
  %v170 = vld [vmem:[%s3 + $0x68] sm:$0xf]
  %v171 = vld [vmem:[%s3 + $0x6c] sm:$0xf]
  %v172 = vld [vmem:[%s3 + $0x70] sm:$0xf]
  %v173 = vld [vmem:[%s3 + $0x74] sm:$0xf]
  %v174 = vld [vmem:[%s3 + $0x78] sm:$0xf]
  %v175 = vld [vmem:[%s3 + $0x7c] sm:$0xf]
  %v208 = vunpack.c.l.b16 %v144
  %v209 = vunpack.c.l.b16 %v145
  %v210 = vunpack.c.l.b16 %v146
  %v211 = vunpack.c.l.b16 %v147
  %v212 = vunpack.c.l.b16 %v148
  %v213 = vunpack.c.l.b16 %v149
  %v214 = vunpack.c.l.b16 %v150
  %v215 = vunpack.c.l.b16 %v151
  %v216 = vunpack.c.l.b16 %v152
  %v217 = vunpack.c.l.b16 %v153
  %v218 = vunpack.c.l.b16 %v154
  %v219 = vunpack.c.l.b16 %v155
  %v220 = vunpack.c.l.b16 %v156
  %v221 = vunpack.c.l.b16 %v157
  %v222 = vunpack.c.l.b16 %v158
  %v223 = vunpack.c.l.b16 %v159
  %v224 = vunpack.c.l.b16 %v160
  %v225 = vunpack.c.l.b16 %v161
  %v226 = vunpack.c.l.b16 %v162
  %v227 = vunpack.c.l.b16 %v163
  %v228 = vunpack.c.l.b16 %v164
  %v229 = vunpack.c.l.b16 %v165
  %v230 = vunpack.c.l.b16 %v166
  %v231 = vunpack.c.l.b16 %v167
  %v232 = vunpack.c.l.b16 %v168
  %v233 = vunpack.c.l.b16 %v169
  %v234 = vunpack.c.l.b16 %v170
  %v235 = vunpack.c.l.b16 %v171
  %v236 = vunpack.c.l.b16 %v172
  %v237 = vunpack.c.l.b16 %v173
  %v238 = vunpack.c.l.b16 %v174
  %v239 = vunpack.c.l.b16 %v175
  %v240 = vpack.c.b16 %v209, %v208
  %v241 = vpack.c.b16 %v211, %v210
  %v242 = vpack.c.b16 %v213, %v212
  %v243 = vpack.c.b16 %v215, %v214
  %v244 = vpack.c.b16 %v217, %v216
  %v245 = vpack.c.b16 %v219, %v218
  %v246 = vpack.c.b16 %v221, %v220
  %v247 = vpack.c.b16 %v223, %v222
  %v248 = vpack.c.b16 %v225, %v224
  %v249 = vpack.c.b16 %v227, %v226
  %v250 = vpack.c.b16 %v229, %v228
  %v251 = vpack.c.b16 %v231, %v230
  %v252 = vpack.c.b16 %v233, %v232
  %v253 = vpack.c.b16 %v235, %v234
  %v254 = vpack.c.b16 %v237, %v236
  %v255 = vpack.c.b16 %v239, %v238
  %vm256 = vcmask 261120
  %v258 = vsel %vm256, %v240, 0
  %v261 = vsel %vm256, %v241, 0
  %v264 = vsel %vm256, %v242, 0
  %v267 = vsel %vm256, %v243, 0
  %v270 = vsel %vm256, %v244, 0
  %v273 = vsel %vm256, %v245, 0
  %v276 = vsel %vm256, %v246, 0
  %v279 = vsel %vm256, %v247, 0
  %v282 = vsel %vm256, %v248, 0
  %v285 = vsel %vm256, %v249, 0
  %v288 = vsel %vm256, %v250, 0
  %v291 = vsel %vm256, %v251, 0
  %v294 = vsel %vm256, %v252, 0
  %v297 = vsel %vm256, %v253, 0
  %v300 = vsel %vm256, %v254, 0
  %v303 = vsel %vm256, %v255, 0
  %305 = vmatprep.subr.bf16.mxu0 0
  %306 = vmatpush1.bf16.msra.mxu0 0
  %307 = vmatprep.subr.bf16.mxu0 0
  %308 = vmatpush1.bf16.msra.mxu0 0
  %309 = vmatprep.subr.bf16.mxu0 0
  %310 = vmatpush1.bf16.msra.mxu0 0
  %311 = vmatprep.subr.bf16.mxu0 0
  %312 = vmatpush1.bf16.msra.mxu0 0
  %313 = vmatprep.subr.bf16.mxu0 0
  %314 = vmatpush1.bf16.msra.mxu0 0
  %315 = vmatprep.subr.bf16.mxu0 0
  %316 = vmatpush1.bf16.msra.mxu0 0
  %317 = vmatprep.subr.bf16.mxu0 0
  %318 = vmatpush1.bf16.msra.mxu0 %v143
  %319 = vmatprep.subr.bf16.mxu0 0
  %320 = vmatpush1.bf16.msra.mxu0 %v142
  %321 = vmatprep.subr.bf16.mxu0 0
  %322 = vmatpush2.bf16.msra.mxu0 0
  %323 = vmatprep.subr.bf16.mxu0 0
  %324 = vmatpush2.bf16.msra.mxu0 0
  %325 = vmatprep.subr.bf16.mxu0 0
  %326 = vmatpush2.bf16.msra.mxu0 0
  %327 = vmatprep.subr.bf16.mxu0 0
  %328 = vmatpush2.bf16.msra.mxu0 0
  %329 = vmatprep.subr.bf16.mxu0 0
  %330 = vmatpush2.bf16.msra.mxu0 0
  %331 = vmatprep.subr.bf16.mxu0 0
  %332 = vmatpush2.bf16.msra.mxu0 0
  %333 = vmatprep.subr.bf16.mxu0 0
  %334 = vmatpush2.bf16.msra.mxu0 0
  %335 = vmatprep.subr.bf16.mxu0 0
  %336 = vmatpush2.bf16.msra.mxu0 0
  %337 = vmatprep.mubr.bf16.mxu0 0
  %338 = vmatmul.mubr.bf16.gmra.mxu0 %v258
  %v339 = vpop.f32.mrf.mxu0
  %v340 = vadd.f32 0.0, %v339
  %v341 = vpop.f32.mrf.mxu0
  %v342 = vpop.f32.mrf.mxu0
  %v343 = vadd.f32 0.0, %v342
  %v344 = vpop.f32.mrf.mxu0
  %345 = vmatprep.mubr.bf16.mxu0 0
  %346 = vmatmul.mubr.bf16.gmra.mxu0 %v261
  %v347 = vpop.f32.mrf.mxu0
  %v348 = vadd.f32 0.0, %v347
  %v349 = vpop.f32.mrf.mxu0
  %v350 = vpop.f32.mrf.mxu0
  %v351 = vadd.f32 0.0, %v350
  %v352 = vpop.f32.mrf.mxu0
  %353 = vmatprep.mubr.bf16.mxu0 0
  %354 = vmatmul.mubr.bf16.gmra.mxu0 %v264
  %v355 = vpop.f32.mrf.mxu0
  %v356 = vadd.f32 0.0, %v355
  %v357 = vpop.f32.mrf.mxu0
  %v358 = vpop.f32.mrf.mxu0
  %v359 = vadd.f32 0.0, %v358
  %v360 = vpop.f32.mrf.mxu0
  %361 = vmatprep.mubr.bf16.mxu0 0
  %362 = vmatmul.mubr.bf16.gmra.mxu0 %v267
  %v363 = vpop.f32.mrf.mxu0
  %v364 = vadd.f32 0.0, %v363
  %v365 = vpop.f32.mrf.mxu0
  %v366 = vpop.f32.mrf.mxu0
  %v367 = vadd.f32 0.0, %v366
  %v368 = vpop.f32.mrf.mxu0
  %369 = vmatprep.mubr.bf16.mxu0 0
  %370 = vmatmul.mubr.bf16.gmra.mxu0 %v270
  %v371 = vpop.f32.mrf.mxu0
  %v372 = vadd.f32 0.0, %v371
  %v373 = vpop.f32.mrf.mxu0
  %v374 = vpop.f32.mrf.mxu0
  %v375 = vadd.f32 0.0, %v374
  %v376 = vpop.f32.mrf.mxu0
  %377 = vmatprep.mubr.bf16.mxu0 0
  %378 = vmatmul.mubr.bf16.gmra.mxu0 %v273
  %v379 = vpop.f32.mrf.mxu0
  %v380 = vadd.f32 0.0, %v379
  %v381 = vpop.f32.mrf.mxu0
  %v382 = vpop.f32.mrf.mxu0
  %v383 = vadd.f32 0.0, %v382
  %v384 = vpop.f32.mrf.mxu0
  %385 = vmatprep.mubr.bf16.mxu0 0
  %386 = vmatmul.mubr.bf16.gmra.mxu0 %v276
  %v387 = vpop.f32.mrf.mxu0
  %v388 = vadd.f32 0.0, %v387
  %v389 = vpop.f32.mrf.mxu0
  %v390 = vpop.f32.mrf.mxu0
  %v391 = vadd.f32 0.0, %v390
  %v392 = vpop.f32.mrf.mxu0
  %393 = vmatprep.mubr.bf16.mxu0 0
  %394 = vmatmul.mubr.bf16.gmra.mxu0 %v279
  %v395 = vpop.f32.mrf.mxu0
  %v396 = vadd.f32 0.0, %v395
  %v397 = vpop.f32.mrf.mxu0
  %v398 = vpop.f32.mrf.mxu0
  %v399 = vadd.f32 0.0, %v398
  %v400 = vpop.f32.mrf.mxu0
  %401 = vmatprep.mubr.bf16.mxu0 0
  %402 = vmatmul.mubr.bf16.gmra.mxu0 %v282
  %v403 = vpop.f32.mrf.mxu0
  %v404 = vadd.f32 0.0, %v403
  %v405 = vpop.f32.mrf.mxu0
  %v406 = vpop.f32.mrf.mxu0
  %v407 = vadd.f32 0.0, %v406
  %v408 = vpop.f32.mrf.mxu0
  %409 = vmatprep.mubr.bf16.mxu0 0
  %410 = vmatmul.mubr.bf16.gmra.mxu0 %v285
  %v411 = vpop.f32.mrf.mxu0
  %v412 = vadd.f32 0.0, %v411
  %v413 = vpop.f32.mrf.mxu0
  %v414 = vpop.f32.mrf.mxu0
  %v415 = vadd.f32 0.0, %v414
  %v416 = vpop.f32.mrf.mxu0
  %417 = vmatprep.mubr.bf16.mxu0 0
  %418 = vmatmul.mubr.bf16.gmra.mxu0 %v288
  %v419 = vpop.f32.mrf.mxu0
  %v420 = vadd.f32 0.0, %v419
  %v421 = vpop.f32.mrf.mxu0
  %v422 = vpop.f32.mrf.mxu0
  %v423 = vadd.f32 0.0, %v422
  %v424 = vpop.f32.mrf.mxu0
  %425 = vmatprep.mubr.bf16.mxu0 0
  %426 = vmatmul.mubr.bf16.gmra.mxu0 %v291
  %v427 = vpop.f32.mrf.mxu0
  %v428 = vadd.f32 0.0, %v427
  %v429 = vpop.f32.mrf.mxu0
  %v430 = vpop.f32.mrf.mxu0
  %v431 = vadd.f32 0.0, %v430
  %v432 = vpop.f32.mrf.mxu0
  %433 = vmatprep.mubr.bf16.mxu0 0
  %434 = vmatmul.mubr.bf16.gmra.mxu0 %v294
  %v435 = vpop.f32.mrf.mxu0
  %v436 = vadd.f32 0.0, %v435
  %v437 = vpop.f32.mrf.mxu0
  %v438 = vpop.f32.mrf.mxu0
  %v439 = vadd.f32 0.0, %v438
  %v440 = vpop.f32.mrf.mxu0
  %441 = vmatprep.mubr.bf16.mxu0 0
  %442 = vmatmul.mubr.bf16.gmra.mxu0 %v297
  %v443 = vpop.f32.mrf.mxu0
  %v444 = vadd.f32 0.0, %v443
  %v445 = vpop.f32.mrf.mxu0
  %v446 = vpop.f32.mrf.mxu0
  %v447 = vadd.f32 0.0, %v446
  %v448 = vpop.f32.mrf.mxu0
  %449 = vmatprep.mubr.bf16.mxu0 0
  %450 = vmatmul.mubr.bf16.gmra.mxu0 %v300
  %v451 = vpop.f32.mrf.mxu0
  %v452 = vadd.f32 0.0, %v451
  %v453 = vpop.f32.mrf.mxu0
  %v454 = vpop.f32.mrf.mxu0
  %v455 = vadd.f32 0.0, %v454
  %v456 = vpop.f32.mrf.mxu0
  %457 = vmatprep.mubr.bf16.mxu0 0
  %458 = vmatmul.mubr.bf16.gmra.mxu0 %v303
  %v459 = vpop.f32.mrf.mxu0
  %v460 = vadd.f32 0.0, %v459
  %v461 = vpop.f32.mrf.mxu0
  %v462 = vpop.f32.mrf.mxu0
  %v463 = vadd.f32 0.0, %v462
  %v464 = vpop.f32.mrf.mxu0
  %465 = vdwg.mxu0
  %466 = vst [vmem:[%s4] sm:$0xff] %v340
  %467 = vst [vmem:[%s4 + $0x8] sm:$0xff] %v343
  %468 = vst [vmem:[%s4 + $0x10] sm:$0xff] %v348
  %469 = vst [vmem:[%s4 + $0x18] sm:$0xff] %v351
  %470 = vst [vmem:[%s4 + $0x20] sm:$0xff] %v356
  %471 = vst [vmem:[%s4 + $0x28] sm:$0xff] %v359
  %472 = vst [vmem:[%s4 + $0x30] sm:$0xff] %v364
  %473 = vst [vmem:[%s4 + $0x38] sm:$0xff] %v367
  %474 = vst [vmem:[%s4 + $0x40] sm:$0xff] %v372
  %475 = vst [vmem:[%s4 + $0x48] sm:$0xff] %v375
  %476 = vst [vmem:[%s4 + $0x50] sm:$0xff] %v380
  %477 = vst [vmem:[%s4 + $0x58] sm:$0xff] %v383
  %478 = vst [vmem:[%s4 + $0x60] sm:$0xff] %v388
  %479 = vst [vmem:[%s4 + $0x68] sm:$0xff] %v391
  %480 = vst [vmem:[%s4 + $0x70] sm:$0xff] %v396
  %481 = vst [vmem:[%s4 + $0x78] sm:$0xff] %v399
  %482 = vst [vmem:[%s4 + $0x80] sm:$0xff] %v404
  %483 = vst [vmem:[%s4 + $0x88] sm:$0xff] %v407
  %484 = vst [vmem:[%s4 + $0x90] sm:$0xff] %v412
  %485 = vst [vmem:[%s4 + $0x98] sm:$0xff] %v415
  %486 = vst [vmem:[%s4 + $0xa0] sm:$0xff] %v420
  %487 = vst [vmem:[%s4 + $0xa8] sm:$0xff] %v423
  %488 = vst [vmem:[%s4 + $0xb0] sm:$0xff] %v428
  %489 = vst [vmem:[%s4 + $0xb8] sm:$0xff] %v431
  %490 = vst [vmem:[%s4 + $0xc0] sm:$0xff] %v436
  %491 = vst [vmem:[%s4 + $0xc8] sm:$0xff] %v439
  %492 = vst [vmem:[%s4 + $0xd0] sm:$0xff] %v444
  %493 = vst [vmem:[%s4 + $0xd8] sm:$0xff] %v447
  %494 = vst [vmem:[%s4 + $0xe0] sm:$0xff] %v452
  %495 = vst [vmem:[%s4 + $0xe8] sm:$0xff] %v455
  %496 = vst [vmem:[%s4 + $0xf0] sm:$0xff] %v460
  %497 = vst [vmem:[%s4 + $0xf8] sm:$0xff] %v463
  // Predicated region
  $region18: #{generator_forward.7} parent=0 // pred_check
    _
  $region19: #{generator_forward.7} parent=0 // pred_check_branch
    %499 = sbr.rel (0) target = $region21
  $region20: #{generator_forward.7} parent=0 // pred_region
    _
  $region21: #{generator_forward.7} parent=0 // pred_fallthru
    _
  // Predicated region
  $region22: #{generator_forward.7} parent=0 // pred_check
    _
  $region23: #{generator_forward.7} parent=0 // pred_check_branch
    %501 = sbr.rel (0) target = $region25
  $region24: #{generator_forward.7} parent=0 // pred_region
    _
  $region25: #{generator_forward.7} parent=0 // pred_fallthru
    _

// kernel: generator_forward.8
$region0: #{generator_forward.8}
  #allocation0 [shape = 'u32[]', space=smem, size = 0x4, offset = 0x4, fixed_abs, tag = 'smem constant byte address 0x4 - core index']
  #allocation1 [shape = 'u32[144,128]{1,0:T(1,128)}', space=vmem, size = 0x12000, scoped, tag = 'internal scratch']
  %s0 = inlined_call_operand.vmem [shape: f32[16,512], index: 0, kind: input, shape index: {}]
  %s1 = inlined_call_operand.vmem [shape: f32[16,1], index: 1, kind: input, shape index: {}]
  %s2 = inlined_call_operand.vmem [shape: f32[16,1], index: 2, kind: input, shape index: {}]
  %s3 = inlined_call_operand.vmem [shape: bf16[128,16], index: 3, kind: input, shape index: {}]
  %s4 = inlined_call_operand.vmem [shape: f32[128,512], index: 4, kind: output, shape index: {}]
  %s5 = sld [smem:[#allocation0]]
  $region26: #{generator_forward.8} parent=0
    _
  %s7 = ssub.s32 1, %s5
  %s8 = scalar_select 0, %s7, %s5
  // Predicated region
  $region2: #{generator_forward.8} parent=0 // pred_check
    _
  $region3: #{generator_forward.8} parent=0 // pred_check_branch
    %10 = sbr.rel (0) target = $region5
  $region4: #{generator_forward.8} parent=0 // pred_region
    _
  $region5: #{generator_forward.8} parent=0 // pred_fallthru
    _
  // Predicated region
  $region6: #{generator_forward.8} parent=0 // pred_check
    _
  $region7: #{generator_forward.8} parent=0 // pred_check_branch
    %12 = sbr.rel (0) target = $region9
  $region8: #{generator_forward.8} parent=0 // pred_region
    _
  $region9: #{generator_forward.8} parent=0 // pred_fallthru
    _
  // Predicated region
  $region10: #{generator_forward.8} parent=0 // pred_check
    _
  $region11: #{generator_forward.8} parent=0 // pred_check_branch
    %14 = sbr.rel (0) target = $region13
  $region12: #{generator_forward.8} parent=0 // pred_region
    _
  $region13: #{generator_forward.8} parent=0 // pred_fallthru
    _
  // Predicated region
  $region14: #{generator_forward.8} parent=0 // pred_check
    _
  $region15: #{generator_forward.8} parent=0 // pred_check_branch
    %16 = sbr.rel (0) target = $region17
  $region16: #{generator_forward.8} parent=0 // pred_region
    _
  $region17: #{generator_forward.8} parent=0 // pred_fallthru
    _
  %v18 = vld [vmem:[%s0] sm:$0xff]
  %v19 = vld [vmem:[%s0 + $0x8] sm:$0xff]
  %v20 = vld [vmem:[%s0 + $0x10] sm:$0xff]
  %v21 = vld [vmem:[%s0 + $0x18] sm:$0xff]
  %v22 = vld [vmem:[%s0 + $0x20] sm:$0xff]
  %v23 = vld [vmem:[%s0 + $0x28] sm:$0xff]
  %v24 = vld [vmem:[%s0 + $0x30] sm:$0xff]
  %v25 = vld [vmem:[%s0 + $0x38] sm:$0xff]
  %v26 = vadd.f32 %v18, %v19
  %v27 = vadd.f32 %v26, %v20
  %v28 = vadd.f32 %v27, %v21
  %29 = vadd.xlane.f32.xlu0 %v28
  %v30 = vpop.xlane.xlu0 %29
  %v31 = vadd.f32 %v22, %v23
  %v32 = vadd.f32 %v31, %v24
  %v33 = vadd.f32 %v32, %v25
  %34 = vadd.xlane.f32.xlu0 %v33
  %v35 = vpop.xlane.xlu0 %34
  %v36 = vmul.f32 %v30, 0.001953125
  %v37 = vmul.f32 %v35, 0.001953125
  %v38 = vmul.f32 %v18, %v18
  %v39 = vmul.f32 %v19, %v19
  %v40 = vmul.f32 %v20, %v20
  %v41 = vmul.f32 %v21, %v21
  %v42 = vmul.f32 %v22, %v22
  %v43 = vmul.f32 %v23, %v23
  %v44 = vmul.f32 %v24, %v24
  %v45 = vmul.f32 %v25, %v25
  %v46 = vadd.f32 %v38, %v39
  %v47 = vadd.f32 %v46, %v40
  %v48 = vadd.f32 %v47, %v41
  %49 = vadd.xlane.f32.xlu0 %v48
  %v50 = vpop.xlane.xlu0 %49
  %v51 = vadd.f32 %v42, %v43
  %v52 = vadd.f32 %v51, %v44
  %v53 = vadd.f32 %v52, %v45
  %54 = vadd.xlane.f32.xlu0 %v53
  %v55 = vpop.xlane.xlu0 %54
  %v56 = vmul.f32 %v50, 0.001953125
  %v57 = vmul.f32 %v55, 0.001953125
  %v58 = vmul.f32 %v36, %v36
  %v59 = vmul.f32 %v37, %v37
  %v60 = vsub.f32 %v56, %v58
  %v61 = vsub.f32 %v57, %v59
  %v62 = vmax.f32 %v60, 0.0
  %v63 = vmax.f32 %v61, 0.0
  %v64 = vld [vmem:[%s1] sm:$0xff]
  %v65 = vld [vmem:[%s1 + $0x8] sm:$0xff]
  %v66 = vadd.f32 %v62, 1e-05
  %v67 = vadd.f32 %v63, 1e-05
  %v68 = vrsqrt.pop %v66
  %v69 = vrsqrt.pop %v67
  %v70 = vmul.f32 %v64, %v68
  %v71 = vmul.f32 %v65, %v69
  %v72 = vld [vmem:[%s2] sm:$0xff]
  %v73 = vld [vmem:[%s2 + $0x8] sm:$0xff]
  %v74 = vmul.f32 %v36, %v70
  %v75 = vmul.f32 %v37, %v71
  %v76 = vsub.f32 %v72, %v74
  %v77 = vsub.f32 %v73, %v75
  %79 = vset.pattern.permute.xlu0 0
  %80 = vperm.xlu0 %79, %v70
  %v81 = vpop.permute.xlu0 %80
  %84 = vset.pattern.permute.xlu0 0
  %85 = vperm.xlu0 %84, %v71
  %v86 = vpop.permute.xlu0 %85
  %v88 = vmul.f32 %v18, %v81
  %v89 = vmul.f32 %v19, %v81
  %v90 = vmul.f32 %v20, %v81
  %v91 = vmul.f32 %v21, %v81
  %v92 = vmul.f32 %v22, %v86
  %v93 = vmul.f32 %v23, %v86
  %v94 = vmul.f32 %v24, %v86
  %v95 = vmul.f32 %v25, %v86
  %97 = vset.pattern.permute.xlu0 0
  %98 = vperm.xlu0 %97, %v76
  %v99 = vpop.permute.xlu0 %98
  %102 = vset.pattern.permute.xlu0 0
  %103 = vperm.xlu0 %102, %v77
  %v104 = vpop.permute.xlu0 %103
  %v106 = vadd.f32 %v88, %v99
  %v107 = vadd.f32 %v89, %v99
  %v108 = vadd.f32 %v90, %v99
  %v109 = vadd.f32 %v91, %v99
  %v110 = vadd.f32 %v92, %v104
  %v111 = vadd.f32 %v93, %v104
  %v112 = vadd.f32 %v94, %v104
  %v113 = vadd.f32 %v95, %v104
  %v114 = vmax.f32 %v106, 0.0
  %v115 = vmax.f32 %v107, 0.0
  %v116 = vmax.f32 %v108, 0.0
  %v117 = vmax.f32 %v109, 0.0
  %v118 = vmax.f32 %v110, 0.0
  %v119 = vmax.f32 %v111, 0.0
  %v120 = vmax.f32 %v112, 0.0
  %v121 = vmax.f32 %v113, 0.0
  %v122 = vpack.c.bf16 %v118, %v114
  %v123 = vpack.c.bf16 %v119, %v115
  %v124 = vpack.c.bf16 %v120, %v116
  %v125 = vpack.c.bf16 %v121, %v117
  %v126 = vld [vmem:[%s3] sm:$0xf]
  %v127 = vld [vmem:[%s3 + $0x4] sm:$0xf]
  %v128 = vld [vmem:[%s3 + $0x8] sm:$0xf]
  %v129 = vld [vmem:[%s3 + $0xc] sm:$0xf]
  %v130 = vld [vmem:[%s3 + $0x10] sm:$0xf]
  %v131 = vld [vmem:[%s3 + $0x14] sm:$0xf]
  %v132 = vld [vmem:[%s3 + $0x18] sm:$0xf]
  %v133 = vld [vmem:[%s3 + $0x1c] sm:$0xf]
  %v134 = vld [vmem:[%s3 + $0x20] sm:$0xf]
  %v135 = vld [vmem:[%s3 + $0x24] sm:$0xf]
  %v136 = vld [vmem:[%s3 + $0x28] sm:$0xf]
  %v137 = vld [vmem:[%s3 + $0x2c] sm:$0xf]
  %v138 = vld [vmem:[%s3 + $0x30] sm:$0xf]
  %v139 = vld [vmem:[%s3 + $0x34] sm:$0xf]
  %v140 = vld [vmem:[%s3 + $0x38] sm:$0xf]
  %v141 = vld [vmem:[%s3 + $0x3c] sm:$0xf]
  %v158 = vunpack.c.l.b16 %v126
  %v159 = vunpack.c.l.b16 %v127
  %v160 = vunpack.c.l.b16 %v128
  %v161 = vunpack.c.l.b16 %v129
  %v162 = vunpack.c.l.b16 %v130
  %v163 = vunpack.c.l.b16 %v131
  %v164 = vunpack.c.l.b16 %v132
  %v165 = vunpack.c.l.b16 %v133
  %v166 = vunpack.c.l.b16 %v134
  %v167 = vunpack.c.l.b16 %v135
  %v168 = vunpack.c.l.b16 %v136
  %v169 = vunpack.c.l.b16 %v137
  %v170 = vunpack.c.l.b16 %v138
  %v171 = vunpack.c.l.b16 %v139
  %v172 = vunpack.c.l.b16 %v140
  %v173 = vunpack.c.l.b16 %v141
  %v174 = vpack.c.b16 %v159, %v158
  %v175 = vpack.c.b16 %v161, %v160
  %v176 = vpack.c.b16 %v163, %v162
  %v177 = vpack.c.b16 %v165, %v164
  %v178 = vpack.c.b16 %v167, %v166
  %v179 = vpack.c.b16 %v169, %v168
  %v180 = vpack.c.b16 %v171, %v170
  %v181 = vpack.c.b16 %v173, %v172
  %vm182 = vcmask 130048
  %v184 = vsel %vm182, %v174, 0
  %v187 = vsel %vm182, %v175, 0
  %v190 = vsel %vm182, %v176, 0
  %v193 = vsel %vm182, %v177, 0
  %v196 = vsel %vm182, %v178, 0
  %v199 = vsel %vm182, %v179, 0
  %v202 = vsel %vm182, %v180, 0
  %v205 = vsel %vm182, %v181, 0
  %207 = vmatprep.subr.bf16.mxu0 0
  %208 = vmatpush1.bf16.msra.mxu0 0
  %209 = vmatprep.subr.bf16.mxu0 0
  %210 = vmatpush1.bf16.msra.mxu0 0
  %211 = vmatprep.subr.bf16.mxu0 0
  %212 = vmatpush1.bf16.msra.mxu0 0
  %213 = vmatprep.subr.bf16.mxu0 0
  %214 = vmatpush1.bf16.msra.mxu0 0
  %215 = vmatprep.subr.bf16.mxu0 0
  %216 = vmatpush1.bf16.msra.mxu0 0
  %217 = vmatprep.subr.bf16.mxu0 0
  %218 = vmatpush1.bf16.msra.mxu0 0
  %219 = vmatprep.subr.bf16.mxu0 0
  %220 = vmatpush1.bf16.msra.mxu0 0
  %221 = vmatprep.subr.bf16.mxu0 %v123
  %222 = vmatpush1.bf16.msra.mxu0 %v122
  %223 = vmatprep.subr.bf16.mxu0 0
  %224 = vmatpush2.bf16.msra.mxu0 0
  %225 = vmatprep.subr.bf16.mxu0 0
  %226 = vmatpush2.bf16.msra.mxu0 0
  %227 = vmatprep.subr.bf16.mxu0 0
  %228 = vmatpush2.bf16.msra.mxu0 0
  %229 = vmatprep.subr.bf16.mxu0 0
  %230 = vmatpush2.bf16.msra.mxu0 0
  %231 = vmatprep.subr.bf16.mxu0 0
  %232 = vmatpush2.bf16.msra.mxu0 0
  %233 = vmatprep.subr.bf16.mxu0 0
  %234 = vmatpush2.bf16.msra.mxu0 0
  %235 = vmatprep.subr.bf16.mxu0 0
  %236 = vmatpush2.bf16.msra.mxu0 0
  %237 = vmatprep.subr.bf16.mxu0 0
  %238 = vmatpush2.bf16.msra.mxu0 0
  %239 = vmatprep.mubr.bf16.mxu0 0
  %240 = vmatmul.mubr.bf16.gmra.mxu0 %v184
  %v241 = vpop.f32.mrf.mxu0
  %v242 = vadd.f32 0.0, %v241
  %v243 = vpop.f32.mrf.mxu0
  %v244 = vadd.f32 0.0, %v243
  %v245 = vpop.f32.mrf.mxu0
  %v246 = vadd.f32 0.0, %v245
  %v247 = vpop.f32.mrf.mxu0
  %v248 = vadd.f32 0.0, %v247
  %249 = vmatprep.mubr.bf16.mxu0 0
  %250 = vmatmul.mubr.bf16.gmra.mxu0 %v187
  %v251 = vpop.f32.mrf.mxu0
  %v252 = vadd.f32 0.0, %v251
  %v253 = vpop.f32.mrf.mxu0
  %v254 = vadd.f32 0.0, %v253
  %v255 = vpop.f32.mrf.mxu0
  %v256 = vadd.f32 0.0, %v255
  %v257 = vpop.f32.mrf.mxu0
  %v258 = vadd.f32 0.0, %v257
  %259 = vmatprep.mubr.bf16.mxu0 0
  %260 = vmatmul.mubr.bf16.gmra.mxu0 %v190
  %v261 = vpop.f32.mrf.mxu0
  %v262 = vadd.f32 0.0, %v261
  %v263 = vpop.f32.mrf.mxu0
  %v264 = vadd.f32 0.0, %v263
  %v265 = vpop.f32.mrf.mxu0
  %v266 = vadd.f32 0.0, %v265
  %v267 = vpop.f32.mrf.mxu0
  %v268 = vadd.f32 0.0, %v267
  %269 = vmatprep.mubr.bf16.mxu0 0
  %270 = vmatmul.mubr.bf16.gmra.mxu0 %v193
  %v271 = vpop.f32.mrf.mxu0
  %v272 = vadd.f32 0.0, %v271
  %v273 = vpop.f32.mrf.mxu0
  %v274 = vadd.f32 0.0, %v273
  %v275 = vpop.f32.mrf.mxu0
  %v276 = vadd.f32 0.0, %v275
  %v277 = vpop.f32.mrf.mxu0
  %v278 = vadd.f32 0.0, %v277
  %279 = vmatprep.mubr.bf16.mxu0 0
  %280 = vmatmul.mubr.bf16.gmra.mxu0 %v196
  %v281 = vpop.f32.mrf.mxu0
  %v282 = vadd.f32 0.0, %v281
  %v283 = vpop.f32.mrf.mxu0
  %v284 = vadd.f32 0.0, %v283
  %v285 = vpop.f32.mrf.mxu0
  %v286 = vadd.f32 0.0, %v285
  %v287 = vpop.f32.mrf.mxu0
  %v288 = vadd.f32 0.0, %v287
  %289 = vmatprep.mubr.bf16.mxu0 0
  %290 = vmatmul.mubr.bf16.gmra.mxu0 %v199
  %v291 = vpop.f32.mrf.mxu0
  %v292 = vadd.f32 0.0, %v291
  %v293 = vpop.f32.mrf.mxu0
  %v294 = vadd.f32 0.0, %v293
  %v295 = vpop.f32.mrf.mxu0
  %v296 = vadd.f32 0.0, %v295
  %v297 = vpop.f32.mrf.mxu0
  %v298 = vadd.f32 0.0, %v297
  %299 = vmatprep.mubr.bf16.mxu0 0
  %300 = vmatmul.mubr.bf16.gmra.mxu0 %v202
  %v301 = vpop.f32.mrf.mxu0
  %v302 = vadd.f32 0.0, %v301
  %v303 = vpop.f32.mrf.mxu0
  %v304 = vadd.f32 0.0, %v303
  %v305 = vpop.f32.mrf.mxu0
  %v306 = vadd.f32 0.0, %v305
  %v307 = vpop.f32.mrf.mxu0
  %v308 = vadd.f32 0.0, %v307
  %309 = vmatprep.mubr.bf16.mxu0 0
  %310 = vmatmul.mubr.bf16.gmra.mxu0 %v205
  %v311 = vpop.f32.mrf.mxu0
  %v312 = vadd.f32 0.0, %v311
  %v313 = vpop.f32.mrf.mxu0
  %v314 = vadd.f32 0.0, %v313
  %v315 = vpop.f32.mrf.mxu0
  %v316 = vadd.f32 0.0, %v315
  %v317 = vpop.f32.mrf.mxu0
  %v318 = vadd.f32 0.0, %v317
  %319 = vdwg.mxu0
  %320 = vmatprep.subr.bf16.mxu0 0
  %321 = vmatpush1.bf16.msra.mxu0 0
  %322 = vmatprep.subr.bf16.mxu0 0
  %323 = vmatpush1.bf16.msra.mxu0 0
  %324 = vmatprep.subr.bf16.mxu0 0
  %325 = vmatpush1.bf16.msra.mxu0 0
  %326 = vmatprep.subr.bf16.mxu0 0
  %327 = vmatpush1.bf16.msra.mxu0 0
  %328 = vmatprep.subr.bf16.mxu0 0
  %329 = vmatpush1.bf16.msra.mxu0 0
  %330 = vmatprep.subr.bf16.mxu0 0
  %331 = vmatpush1.bf16.msra.mxu0 0
  %332 = vmatprep.subr.bf16.mxu0 0
  %333 = vmatpush1.bf16.msra.mxu0 0
  %334 = vmatprep.subr.bf16.mxu0 %v125
  %335 = vmatpush1.bf16.msra.mxu0 %v124
  %336 = vmatprep.subr.bf16.mxu0 0
  %337 = vmatpush2.bf16.msra.mxu0 0
  %338 = vmatprep.subr.bf16.mxu0 0
  %339 = vmatpush2.bf16.msra.mxu0 0
  %340 = vmatprep.subr.bf16.mxu0 0
  %341 = vmatpush2.bf16.msra.mxu0 0
  %342 = vmatprep.subr.bf16.mxu0 0
  %343 = vmatpush2.bf16.msra.mxu0 0
  %344 = vmatprep.subr.bf16.mxu0 0
  %345 = vmatpush2.bf16.msra.mxu0 0
  %346 = vmatprep.subr.bf16.mxu0 0
  %347 = vmatpush2.bf16.msra.mxu0 0
  %348 = vmatprep.subr.bf16.mxu0 0
  %349 = vmatpush2.bf16.msra.mxu0 0
  %350 = vmatprep.subr.bf16.mxu0 0
  %351 = vmatpush2.bf16.msra.mxu0 0
  %352 = vmatprep.mubr.bf16.mxu0 0
  %353 = vmatmul.mubr.bf16.gmra.mxu0 %v184
  %v354 = vpop.f32.mrf.mxu0
  %v355 = vadd.f32 0.0, %v354
  %v356 = vpop.f32.mrf.mxu0
  %v357 = vadd.f32 0.0, %v356
  %v358 = vpop.f32.mrf.mxu0
  %v359 = vadd.f32 0.0, %v358
  %v360 = vpop.f32.mrf.mxu0
  %v361 = vadd.f32 0.0, %v360
  %362 = vmatprep.mubr.bf16.mxu0 0
  %363 = vmatmul.mubr.bf16.gmra.mxu0 %v187
  %v364 = vpop.f32.mrf.mxu0
  %v365 = vadd.f32 0.0, %v364
  %v366 = vpop.f32.mrf.mxu0
  %v367 = vadd.f32 0.0, %v366
  %v368 = vpop.f32.mrf.mxu0
  %v369 = vadd.f32 0.0, %v368
  %v370 = vpop.f32.mrf.mxu0
  %v371 = vadd.f32 0.0, %v370
  %372 = vmatprep.mubr.bf16.mxu0 0
  %373 = vmatmul.mubr.bf16.gmra.mxu0 %v190
  %v374 = vpop.f32.mrf.mxu0
  %v375 = vadd.f32 0.0, %v374
  %v376 = vpop.f32.mrf.mxu0
  %v377 = vadd.f32 0.0, %v376
  %v378 = vpop.f32.mrf.mxu0
  %v379 = vadd.f32 0.0, %v378
  %v380 = vpop.f32.mrf.mxu0
  %v381 = vadd.f32 0.0, %v380
  %382 = vmatprep.mubr.bf16.mxu0 0
  %383 = vmatmul.mubr.bf16.gmra.mxu0 %v193
  %v384 = vpop.f32.mrf.mxu0
  %v385 = vadd.f32 0.0, %v384
  %v386 = vpop.f32.mrf.mxu0
  %v387 = vadd.f32 0.0, %v386
  %v388 = vpop.f32.mrf.mxu0
  %v389 = vadd.f32 0.0, %v388
  %v390 = vpop.f32.mrf.mxu0
  %v391 = vadd.f32 0.0, %v390
  %392 = vmatprep.mubr.bf16.mxu0 0
  %393 = vmatmul.mubr.bf16.gmra.mxu0 %v196
  %v394 = vpop.f32.mrf.mxu0
  %v395 = vadd.f32 0.0, %v394
  %v396 = vpop.f32.mrf.mxu0
  %v397 = vadd.f32 0.0, %v396
  %v398 = vpop.f32.mrf.mxu0
  %v399 = vadd.f32 0.0, %v398
  %v400 = vpop.f32.mrf.mxu0
  %v401 = vadd.f32 0.0, %v400
  %402 = vmatprep.mubr.bf16.mxu0 0
  %403 = vmatmul.mubr.bf16.gmra.mxu0 %v199
  %v404 = vpop.f32.mrf.mxu0
  %v405 = vadd.f32 0.0, %v404
  %v406 = vpop.f32.mrf.mxu0
  %v407 = vadd.f32 0.0, %v406
  %v408 = vpop.f32.mrf.mxu0
  %v409 = vadd.f32 0.0, %v408
  %v410 = vpop.f32.mrf.mxu0
  %v411 = vadd.f32 0.0, %v410
  %412 = vmatprep.mubr.bf16.mxu0 0
  %413 = vmatmul.mubr.bf16.gmra.mxu0 %v202
  %v414 = vpop.f32.mrf.mxu0
  %v415 = vadd.f32 0.0, %v414
  %v416 = vpop.f32.mrf.mxu0
  %v417 = vadd.f32 0.0, %v416
  %v418 = vpop.f32.mrf.mxu0
  %v419 = vadd.f32 0.0, %v418
  %v420 = vpop.f32.mrf.mxu0
  %v421 = vadd.f32 0.0, %v420
  %422 = vmatprep.mubr.bf16.mxu0 0
  %423 = vmatmul.mubr.bf16.gmra.mxu0 %v205
  %v424 = vpop.f32.mrf.mxu0
  %v425 = vadd.f32 0.0, %v424
  %v426 = vpop.f32.mrf.mxu0
  %v427 = vadd.f32 0.0, %v426
  %v428 = vpop.f32.mrf.mxu0
  %v429 = vadd.f32 0.0, %v428
  %v430 = vpop.f32.mrf.mxu0
  %v431 = vadd.f32 0.0, %v430
  %432 = vdwg.mxu0
  %433 = vst [vmem:[%s4] sm:$0xff] %v242
  %434 = vst [vmem:[%s4 + $0x8] sm:$0xff] %v244
  %435 = vst [vmem:[%s4 + $0x10] sm:$0xff] %v355
  %436 = vst [vmem:[%s4 + $0x18] sm:$0xff] %v357
  %437 = vst [vmem:[%s4 + $0x20] sm:$0xff] %v246
  %438 = vst [vmem:[%s4 + $0x28] sm:$0xff] %v248
  %439 = vst [vmem:[%s4 + $0x30] sm:$0xff] %v359
  %440 = vst [vmem:[%s4 + $0x38] sm:$0xff] %v361
  %441 = vst [vmem:[%s4 + $0x40] sm:$0xff] %v252
  %442 = vst [vmem:[%s4 + $0x48] sm:$0xff] %v254
  %443 = vst [vmem:[%s4 + $0x50] sm:$0xff] %v365
  %444 = vst [vmem:[%s4 + $0x58] sm:$0xff] %v367
  %445 = vst [vmem:[%s4 + $0x60] sm:$0xff] %v256
  %446 = vst [vmem:[%s4 + $0x68] sm:$0xff] %v258
  %447 = vst [vmem:[%s4 + $0x70] sm:$0xff] %v369
  %448 = vst [vmem:[%s4 + $0x78] sm:$0xff] %v371
  %449 = vst [vmem:[%s4 + $0x80] sm:$0xff] %v262
  %450 = vst [vmem:[%s4 + $0x88] sm:$0xff] %v264
  %451 = vst [vmem:[%s4 + $0x90] sm:$0xff] %v375
  %452 = vst [vmem:[%s4 + $0x98] sm:$0xff] %v377
  %453 = vst [vmem:[%s4 + $0xa0] sm:$0xff] %v266
  %454 = vst [vmem:[%s4 + $0xa8] sm:$0xff] %v268
  %455 = vst [vmem:[%s4 + $0xb0] sm:$0xff] %v379
  %456 = vst [vmem:[%s4 + $0xb8] sm:$0xff] %v381
  %457 = vst [vmem:[%s4 + $0xc0] sm:$0xff] %v272
  %458 = vst [vmem:[%s4 + $0xc8] sm:$0xff] %v274
  %459 = vst [vmem:[%s4 + $0xd0] sm:$0xff] %v385
  %460 = vst [vmem:[%s4 + $0xd8] sm:$0xff] %v387
  %461 = vst [vmem:[%s4 + $0xe0] sm:$0xff] %v276
  %462 = vst [vmem:[%s4 + $0xe8] sm:$0xff] %v278
  %463 = vst [vmem:[%s4 + $0xf0] sm:$0xff] %v389
  %464 = vst [vmem:[%s4 + $0xf8] sm:$0xff] %v391
  %465 = vst [vmem:[%s4 + $0x100] sm:$0xff] %v282
  %466 = vst [vmem:[%s4 + $0x108] sm:$0xff] %v284
  %467 = vst [vmem:[%s4 + $0x110] sm:$0xff] %v395
  %468 = vst [vmem:[%s4 + $0x118] sm:$0xff] %v397
  %469 = vst [vmem:[%s4 + $0x120] sm:$0xff] %v286
  %470 = vst [vmem:[%s4 + $0x128] sm:$0xff] %v288
  %471 = vst [vmem:[%s4 + $0x130] sm:$0xff] %v399
  %472 = vst [vmem:[%s4 + $0x138] sm:$0xff] %v401
  %473 = vst [vmem:[%s4 + $0x140] sm:$0xff] %v292
  %474 = vst [vmem:[%s4 + $0x148] sm:$0xff] %v294
  %475 = vst [vmem:[%s4 + $0x150] sm:$0xff] %v405
  %476 = vst [vmem:[%s4 + $0x158] sm:$0xff] %v407
  %477 = vst [vmem:[%s4 + $0x160] sm:$0xff] %v296
  %478 = vst [vmem:[%s4 + $0x168] sm:$0xff] %v298
  %479 = vst [vmem:[%s4 + $0x170] sm:$0xff] %v409
  %480 = vst [vmem:[%s4 + $0x178] sm:$0xff] %v411
  %481 = vst [vmem:[%s4 + $0x180] sm:$0xff] %v302
  %482 = vst [vmem:[%s4 + $0x188] sm:$0xff] %v304
  %483 = vst [vmem:[%s4 + $0x190] sm:$0xff] %v415
  %484 = vst [vmem:[%s4 + $0x198] sm:$0xff] %v417
  %485 = vst [vmem:[%s4 + $0x1a0] sm:$0xff] %v306
  %486 = vst [vmem:[%s4 + $0x1a8] sm:$0xff] %v308
  %487 = vst [vmem:[%s4 + $0x1b0] sm:$0xff] %v419
  %488 = vst [vmem:[%s4 + $0x1b8] sm:$0xff] %v421
  %489 = vst [vmem:[%s4 + $0x1c0] sm:$0xff] %v312
  %490 = vst [vmem:[%s4 + $0x1c8] sm:$0xff] %v314
  %491 = vst [vmem:[%s4 + $0x1d0] sm:$0xff] %v425
  %492 = vst [vmem:[%s4 + $0x1d8] sm:$0xff] %v427
  %493 = vst [vmem:[%s4 + $0x1e0] sm:$0xff] %v316
  %494 = vst [vmem:[%s4 + $0x1e8] sm:$0xff] %v318
  %495 = vst [vmem:[%s4 + $0x1f0] sm:$0xff] %v429
  %496 = vst [vmem:[%s4 + $0x1f8] sm:$0xff] %v431
  // Predicated region
  $region18: #{generator_forward.8} parent=0 // pred_check
    _
  $region19: #{generator_forward.8} parent=0 // pred_check_branch
    %498 = sbr.rel (0) target = $region21
  $region20: #{generator_forward.8} parent=0 // pred_region
    _
  $region21: #{generator_forward.8} parent=0 // pred_fallthru
    _
  // Predicated region
  $region22: #{generator_forward.8} parent=0 // pred_check
    _
  $region23: #{generator_forward.8} parent=0 // pred_check_branch
    %500 = sbr.rel (0) target = $region25
  $region24: #{generator_forward.8} parent=0 // pred_region
    _
  $region25: #{generator_forward.8} parent=0 // pred_fallthru
    _

// kernel: generator_forward.9
$region0: #{generator_forward.9}
  #allocation0 [shape = 'u32[]', space=smem, size = 0x4, offset = 0x4, fixed_abs, tag = 'smem constant byte address 0x4 - core index']
  #allocation1 [shape = 'u32[144,128]{1,0:T(1,128)}', space=vmem, size = 0x12000, scoped, tag = 'internal scratch']
  %s0 = inlined_call_operand.vmem [shape: f32[8,2048], index: 0, kind: input, shape index: {}]
  %s1 = inlined_call_operand.vmem [shape: f32[8,1], index: 1, kind: input, shape index: {}]
  %s2 = inlined_call_operand.vmem [shape: f32[8,1], index: 2, kind: input, shape index: {}]
  %s3 = inlined_call_operand.vmem [shape: bf16[48,8], index: 3, kind: input, shape index: {}]
  %s4 = inlined_call_operand.vmem [shape: f32[48,2048], index: 4, kind: output, shape index: {}]
  %s5 = sld [smem:[#allocation0]]
  $region26: #{generator_forward.9} parent=0
    _
  %s7 = ssub.s32 1, %s5
  %s8 = scalar_select 0, %s7, %s5
  // Predicated region
  $region2: #{generator_forward.9} parent=0 // pred_check
    _
  $region3: #{generator_forward.9} parent=0 // pred_check_branch
    %10 = sbr.rel (0) target = $region5
  $region4: #{generator_forward.9} parent=0 // pred_region
    _
  $region5: #{generator_forward.9} parent=0 // pred_fallthru
    _
  // Predicated region
  $region6: #{generator_forward.9} parent=0 // pred_check
    _
  $region7: #{generator_forward.9} parent=0 // pred_check_branch
    %12 = sbr.rel (0) target = $region9
  $region8: #{generator_forward.9} parent=0 // pred_region
    _
  $region9: #{generator_forward.9} parent=0 // pred_fallthru
    _
  // Predicated region
  $region10: #{generator_forward.9} parent=0 // pred_check
    _
  $region11: #{generator_forward.9} parent=0 // pred_check_branch
    %14 = sbr.rel (0) target = $region13
  $region12: #{generator_forward.9} parent=0 // pred_region
    _
  $region13: #{generator_forward.9} parent=0 // pred_fallthru
    _
  // Predicated region
  $region14: #{generator_forward.9} parent=0 // pred_check
    _
  $region15: #{generator_forward.9} parent=0 // pred_check_branch
    %16 = sbr.rel (0) target = $region17
  $region16: #{generator_forward.9} parent=0 // pred_region
    _
  $region17: #{generator_forward.9} parent=0 // pred_fallthru
    _
  %v18 = vld [vmem:[%s0] sm:$0xff]
  %v19 = vld [vmem:[%s0 + $0x8] sm:$0xff]
  %v20 = vld [vmem:[%s0 + $0x10] sm:$0xff]
  %v21 = vld [vmem:[%s0 + $0x18] sm:$0xff]
  %v22 = vld [vmem:[%s0 + $0x20] sm:$0xff]
  %v23 = vld [vmem:[%s0 + $0x28] sm:$0xff]
  %v24 = vld [vmem:[%s0 + $0x30] sm:$0xff]
  %v25 = vld [vmem:[%s0 + $0x38] sm:$0xff]
  %v26 = vld [vmem:[%s0 + $0x40] sm:$0xff]
  %v27 = vld [vmem:[%s0 + $0x48] sm:$0xff]
  %v28 = vld [vmem:[%s0 + $0x50] sm:$0xff]
  %v29 = vld [vmem:[%s0 + $0x58] sm:$0xff]
  %v30 = vld [vmem:[%s0 + $0x60] sm:$0xff]
  %v31 = vld [vmem:[%s0 + $0x68] sm:$0xff]
  %v32 = vld [vmem:[%s0 + $0x70] sm:$0xff]
  %v33 = vld [vmem:[%s0 + $0x78] sm:$0xff]
  %v34 = vadd.f32 %v18, %v19
  %v35 = vadd.f32 %v34, %v20
  %v36 = vadd.f32 %v35, %v21
  %v37 = vadd.f32 %v36, %v22
  %v38 = vadd.f32 %v37, %v23
  %v39 = vadd.f32 %v38, %v24
  %v40 = vadd.f32 %v39, %v25
  %v41 = vadd.f32 %v40, %v26
  %v42 = vadd.f32 %v41, %v27
  %v43 = vadd.f32 %v42, %v28
  %v44 = vadd.f32 %v43, %v29
  %v45 = vadd.f32 %v44, %v30
  %v46 = vadd.f32 %v45, %v31
  %v47 = vadd.f32 %v46, %v32
  %v48 = vadd.f32 %v47, %v33
  %49 = vadd.xlane.f32.xlu0 %v48
  %v50 = vpop.xlane.xlu0 %49
  %v51 = vmul.f32 %v50, 0.00048828125
  %v52 = vmul.f32 %v18, %v18
  %v53 = vmul.f32 %v19, %v19
  %v54 = vmul.f32 %v20, %v20
  %v55 = vmul.f32 %v21, %v21
  %v56 = vmul.f32 %v22, %v22
  %v57 = vmul.f32 %v23, %v23
  %v58 = vmul.f32 %v24, %v24
  %v59 = vmul.f32 %v25, %v25
  %v60 = vmul.f32 %v26, %v26
  %v61 = vmul.f32 %v27, %v27
  %v62 = vmul.f32 %v28, %v28
  %v63 = vmul.f32 %v29, %v29
  %v64 = vmul.f32 %v30, %v30
  %v65 = vmul.f32 %v31, %v31
  %v66 = vmul.f32 %v32, %v32
  %v67 = vmul.f32 %v33, %v33
  %v68 = vadd.f32 %v52, %v53
  %v69 = vadd.f32 %v68, %v54
  %v70 = vadd.f32 %v69, %v55
  %v71 = vadd.f32 %v70, %v56
  %v72 = vadd.f32 %v71, %v57
  %v73 = vadd.f32 %v72, %v58
  %v74 = vadd.f32 %v73, %v59
  %v75 = vadd.f32 %v74, %v60
  %v76 = vadd.f32 %v75, %v61
  %v77 = vadd.f32 %v76, %v62
  %v78 = vadd.f32 %v77, %v63
  %v79 = vadd.f32 %v78, %v64
  %v80 = vadd.f32 %v79, %v65
  %v81 = vadd.f32 %v80, %v66
  %v82 = vadd.f32 %v81, %v67
  %83 = vadd.xlane.f32.xlu0 %v82
  %v84 = vpop.xlane.xlu0 %83
  %v85 = vmul.f32 %v84, 0.00048828125
  %v86 = vmul.f32 %v51, %v51
  %v87 = vsub.f32 %v85, %v86
  %v88 = vmax.f32 %v87, 0.0
  %v89 = vld [vmem:[%s1] sm:$0xff]
  %v90 = vadd.f32 %v88, 1e-05
  %v91 = vrsqrt.pop %v90
  %v92 = vmul.f32 %v89, %v91
  %v93 = vld [vmem:[%s2] sm:$0xff]
  %v94 = vmul.f32 %v51, %v92
  %v95 = vsub.f32 %v93, %v94
  %97 = vset.pattern.permute.xlu0 0
  %98 = vperm.xlu0 %97, %v92
  %v99 = vpop.permute.xlu0 %98
  %v101 = vmul.f32 %v18, %v99
  %v102 = vmul.f32 %v19, %v99
  %v103 = vmul.f32 %v20, %v99
  %v104 = vmul.f32 %v21, %v99
  %v105 = vmul.f32 %v22, %v99
  %v106 = vmul.f32 %v23, %v99
  %v107 = vmul.f32 %v24, %v99
  %v108 = vmul.f32 %v25, %v99
  %v109 = vmul.f32 %v26, %v99
  %v110 = vmul.f32 %v27, %v99
  %v111 = vmul.f32 %v28, %v99
  %v112 = vmul.f32 %v29, %v99
  %v113 = vmul.f32 %v30, %v99
  %v114 = vmul.f32 %v31, %v99
  %v115 = vmul.f32 %v32, %v99
  %v116 = vmul.f32 %v33, %v99
  %118 = vset.pattern.permute.xlu0 0
  %119 = vperm.xlu0 %118, %v95
  %v120 = vpop.permute.xlu0 %119
  %v122 = vadd.f32 %v101, %v120
  %v123 = vadd.f32 %v102, %v120
  %v124 = vadd.f32 %v103, %v120
  %v125 = vadd.f32 %v104, %v120
  %v126 = vadd.f32 %v105, %v120
  %v127 = vadd.f32 %v106, %v120
  %v128 = vadd.f32 %v107, %v120
  %v129 = vadd.f32 %v108, %v120
  %v130 = vadd.f32 %v109, %v120
  %v131 = vadd.f32 %v110, %v120
  %v132 = vadd.f32 %v111, %v120
  %v133 = vadd.f32 %v112, %v120
  %v134 = vadd.f32 %v113, %v120
  %v135 = vadd.f32 %v114, %v120
  %v136 = vadd.f32 %v115, %v120
  %v137 = vadd.f32 %v116, %v120
  %v138 = vmax.f32 %v122, 0.0
  %v139 = vmax.f32 %v123, 0.0
  %v140 = vmax.f32 %v124, 0.0
  %v141 = vmax.f32 %v125, 0.0
  %v142 = vmax.f32 %v126, 0.0
  %v143 = vmax.f32 %v127, 0.0
  %v144 = vmax.f32 %v128, 0.0
  %v145 = vmax.f32 %v129, 0.0
  %v146 = vmax.f32 %v130, 0.0
  %v147 = vmax.f32 %v131, 0.0
  %v148 = vmax.f32 %v132, 0.0
  %v149 = vmax.f32 %v133, 0.0
  %v150 = vmax.f32 %v134, 0.0
  %v151 = vmax.f32 %v135, 0.0
  %v152 = vmax.f32 %v136, 0.0
  %v153 = vmax.f32 %v137, 0.0
  %v154 = vpack.c.bf16 %v138, %v138
  %v155 = vpack.c.bf16 %v139, %v139
  %v156 = vpack.c.bf16 %v140, %v140
  %v157 = vpack.c.bf16 %v141, %v141
  %v158 = vpack.c.bf16 %v142, %v142
  %v159 = vpack.c.bf16 %v143, %v143
  %v160 = vpack.c.bf16 %v144, %v144
  %v161 = vpack.c.bf16 %v145, %v145
  %v162 = vpack.c.bf16 %v146, %v146
  %v163 = vpack.c.bf16 %v147, %v147
  %v164 = vpack.c.bf16 %v148, %v148
  %v165 = vpack.c.bf16 %v149, %v149
  %v166 = vpack.c.bf16 %v150, %v150
  %v167 = vpack.c.bf16 %v151, %v151
  %v168 = vpack.c.bf16 %v152, %v152
  %v169 = vpack.c.bf16 %v153, %v153
  %v170 = vld [vmem:[%s3] sm:$0xf]
  %v171 = vld [vmem:[%s3 + $0x4] sm:$0xf]
  %v172 = vld [vmem:[%s3 + $0x8] sm:$0xf]
  %v173 = vld [vmem:[%s3 + $0xc] sm:$0xf]
  %v174 = vld [vmem:[%s3 + $0x10] sm:$0xf]
  %v175 = vld [vmem:[%s3 + $0x14] sm:$0xf]
  %v182 = vunpack.c.l.b16 %v170
  %v183 = vunpack.c.l.b16 %v171
  %v184 = vunpack.c.l.b16 %v172
  %v185 = vunpack.c.l.b16 %v173
  %v186 = vunpack.c.l.b16 %v174
  %v187 = vunpack.c.l.b16 %v175
  %v188 = vpack.c.b16 %v183, %v182
  %v189 = vpack.c.b16 %v185, %v184
  %v190 = vpack.c.b16 %v187, %v186
  %vm191 = vcmask 64512
  %v193 = vsel %vm191, %v188, 0
  %v196 = vsel %vm191, %v189, 0
  %v199 = vsel %vm191, %v190, 0
  %vm201 = vcmask 1043456
  %v203 = vsel %vm201, %v154, 0
  %v206 = vsel %vm201, %v155, 0
  %v209 = vsel %vm201, %v156, 0
  %v212 = vsel %vm201, %v157, 0
  %v215 = vsel %vm201, %v158, 0
  %v218 = vsel %vm201, %v159, 0
  %v221 = vsel %vm201, %v160, 0
  %v224 = vsel %vm201, %v161, 0
  %v227 = vsel %vm201, %v162, 0
  %v230 = vsel %vm201, %v163, 0
  %v233 = vsel %vm201, %v164, 0
  %v236 = vsel %vm201, %v165, 0
  %v239 = vsel %vm201, %v166, 0
  %v242 = vsel %vm201, %v167, 0
  %v245 = vsel %vm201, %v168, 0
  %v248 = vsel %vm201, %v169, 0
  %250 = vmatprep.subr.bf16.mxu0 0
  %251 = vmatpush1.bf16.msra.mxu0 0
  %252 = vmatprep.subr.bf16.mxu0 0
  %253 = vmatpush1.bf16.msra.mxu0 0
  %254 = vmatprep.subr.bf16.mxu0 0
  %255 = vmatpush1.bf16.msra.mxu0 0
  %256 = vmatprep.subr.bf16.mxu0 0
  %257 = vmatpush1.bf16.msra.mxu0 0
  %258 = vmatprep.subr.bf16.mxu0 0
  %259 = vmatpush1.bf16.msra.mxu0 0
  %260 = vmatprep.subr.bf16.mxu0 0
  %261 = vmatpush1.bf16.msra.mxu0 0
  %262 = vmatprep.subr.bf16.mxu0 0
  %263 = vmatpush1.bf16.msra.mxu0 0
  %264 = vmatprep.subr.bf16.mxu0 %v206
  %265 = vmatpush1.bf16.msra.mxu0 %v203
  %266 = vmatprep.subr.bf16.mxu0 0
  %267 = vmatpush2.bf16.msra.mxu0 0
  %268 = vmatprep.subr.bf16.mxu0 0
  %269 = vmatpush2.bf16.msra.mxu0 0
  %270 = vmatprep.subr.bf16.mxu0 0
  %271 = vmatpush2.bf16.msra.mxu0 0
  %272 = vmatprep.subr.bf16.mxu0 0
  %273 = vmatpush2.bf16.msra.mxu0 0
  %274 = vmatprep.subr.bf16.mxu0 0
  %275 = vmatpush2.bf16.msra.mxu0 0
  %276 = vmatprep.subr.bf16.mxu0 0
  %277 = vmatpush2.bf16.msra.mxu0 0
  %278 = vmatprep.subr.bf16.mxu0 0
  %279 = vmatpush2.bf16.msra.mxu0 0
  %280 = vmatprep.subr.bf16.mxu0 0
  %281 = vmatpush2.bf16.msra.mxu0 0
  %282 = vmatprep.mubr.bf16.mxu0 0
  %283 = vmatmul.mubr.bf16.gmra.mxu0 %v193
  %v284 = vpop.f32.mrf.mxu0
  %v285 = vadd.f32 0.0, %v284
  %v286 = vpop.f32.mrf.mxu0
  %v287 = vadd.f32 0.0, %v286
  %v288 = vpop.f32.mrf.mxu0
  %v289 = vadd.f32 0.0, %v288
  %v290 = vpop.f32.mrf.mxu0
  %v291 = vadd.f32 0.0, %v290
  %292 = vmatprep.mubr.bf16.mxu0 0
  %293 = vmatmul.mubr.bf16.gmra.mxu0 %v196
  %v294 = vpop.f32.mrf.mxu0
  %v295 = vadd.f32 0.0, %v294
  %v296 = vpop.f32.mrf.mxu0
  %v297 = vadd.f32 0.0, %v296
  %v298 = vpop.f32.mrf.mxu0
  %v299 = vadd.f32 0.0, %v298
  %v300 = vpop.f32.mrf.mxu0
  %v301 = vadd.f32 0.0, %v300
  %302 = vmatprep.mubr.bf16.mxu0 0
  %303 = vmatmul.mubr.bf16.gmra.mxu0 %v199
  %v304 = vpop.f32.mrf.mxu0
  %v305 = vadd.f32 0.0, %v304
  %v306 = vpop.f32.mrf.mxu0
  %v307 = vadd.f32 0.0, %v306
  %v308 = vpop.f32.mrf.mxu0
  %v309 = vadd.f32 0.0, %v308
  %v310 = vpop.f32.mrf.mxu0
  %v311 = vadd.f32 0.0, %v310
  %312 = vdwg.mxu0
  %313 = vmatprep.subr.bf16.mxu0 0
  %314 = vmatpush1.bf16.msra.mxu0 0
  %315 = vmatprep.subr.bf16.mxu0 0
  %316 = vmatpush1.bf16.msra.mxu0 0
  %317 = vmatprep.subr.bf16.mxu0 0
  %318 = vmatpush1.bf16.msra.mxu0 0
  %319 = vmatprep.subr.bf16.mxu0 0
  %320 = vmatpush1.bf16.msra.mxu0 0
  %321 = vmatprep.subr.bf16.mxu0 0
  %322 = vmatpush1.bf16.msra.mxu0 0
  %323 = vmatprep.subr.bf16.mxu0 0
  %324 = vmatpush1.bf16.msra.mxu0 0
  %325 = vmatprep.subr.bf16.mxu0 0
  %326 = vmatpush1.bf16.msra.mxu0 0
  %327 = vmatprep.subr.bf16.mxu0 %v212
  %328 = vmatpush1.bf16.msra.mxu0 %v209
  %329 = vmatprep.subr.bf16.mxu0 0
  %330 = vmatpush2.bf16.msra.mxu0 0
  %331 = vmatprep.subr.bf16.mxu0 0
  %332 = vmatpush2.bf16.msra.mxu0 0
  %333 = vmatprep.subr.bf16.mxu0 0
  %334 = vmatpush2.bf16.msra.mxu0 0
  %335 = vmatprep.subr.bf16.mxu0 0
  %336 = vmatpush2.bf16.msra.mxu0 0
  %337 = vmatprep.subr.bf16.mxu0 0
  %338 = vmatpush2.bf16.msra.mxu0 0
  %339 = vmatprep.subr.bf16.mxu0 0
  %340 = vmatpush2.bf16.msra.mxu0 0
  %341 = vmatprep.subr.bf16.mxu0 0
  %342 = vmatpush2.bf16.msra.mxu0 0
  %343 = vmatprep.subr.bf16.mxu0 0
  %344 = vmatpush2.bf16.msra.mxu0 0
  %345 = vmatprep.mubr.bf16.mxu0 0
  %346 = vmatmul.mubr.bf16.gmra.mxu0 %v193
  %v347 = vpop.f32.mrf.mxu0
  %v348 = vadd.f32 0.0, %v347
  %v349 = vpop.f32.mrf.mxu0
  %v350 = vadd.f32 0.0, %v349
  %v351 = vpop.f32.mrf.mxu0
  %v352 = vadd.f32 0.0, %v351
  %v353 = vpop.f32.mrf.mxu0
  %v354 = vadd.f32 0.0, %v353
  %355 = vmatprep.mubr.bf16.mxu0 0
  %356 = vmatmul.mubr.bf16.gmra.mxu0 %v196
  %v357 = vpop.f32.mrf.mxu0
  %v358 = vadd.f32 0.0, %v357
  %v359 = vpop.f32.mrf.mxu0
  %v360 = vadd.f32 0.0, %v359
  %v361 = vpop.f32.mrf.mxu0
  %v362 = vadd.f32 0.0, %v361
  %v363 = vpop.f32.mrf.mxu0
  %v364 = vadd.f32 0.0, %v363
  %365 = vmatprep.mubr.bf16.mxu0 0
  %366 = vmatmul.mubr.bf16.gmra.mxu0 %v199
  %v367 = vpop.f32.mrf.mxu0
  %v368 = vadd.f32 0.0, %v367
  %v369 = vpop.f32.mrf.mxu0
  %v370 = vadd.f32 0.0, %v369
  %v371 = vpop.f32.mrf.mxu0
  %v372 = vadd.f32 0.0, %v371
  %v373 = vpop.f32.mrf.mxu0
  %v374 = vadd.f32 0.0, %v373
  %375 = vdwg.mxu0
  %376 = vmatprep.subr.bf16.mxu0 0
  %377 = vmatpush1.bf16.msra.mxu0 0
  %378 = vmatprep.subr.bf16.mxu0 0
  %379 = vmatpush1.bf16.msra.mxu0 0
  %380 = vmatprep.subr.bf16.mxu0 0
  %381 = vmatpush1.bf16.msra.mxu0 0
  %382 = vmatprep.subr.bf16.mxu0 0
  %383 = vmatpush1.bf16.msra.mxu0 0
  %384 = vmatprep.subr.bf16.mxu0 0
  %385 = vmatpush1.bf16.msra.mxu0 0
  %386 = vmatprep.subr.bf16.mxu0 0
  %387 = vmatpush1.bf16.msra.mxu0 0
  %388 = vmatprep.subr.bf16.mxu0 0
  %389 = vmatpush1.bf16.msra.mxu0 0
  %390 = vmatprep.subr.bf16.mxu0 %v218
  %391 = vmatpush1.bf16.msra.mxu0 %v215
  %392 = vmatprep.subr.bf16.mxu0 0
  %393 = vmatpush2.bf16.msra.mxu0 0
  %394 = vmatprep.subr.bf16.mxu0 0
  %395 = vmatpush2.bf16.msra.mxu0 0
  %396 = vmatprep.subr.bf16.mxu0 0
  %397 = vmatpush2.bf16.msra.mxu0 0
  %398 = vmatprep.subr.bf16.mxu0 0
  %399 = vmatpush2.bf16.msra.mxu0 0
  %400 = vmatprep.subr.bf16.mxu0 0
  %401 = vmatpush2.bf16.msra.mxu0 0
  %402 = vmatprep.subr.bf16.mxu0 0
  %403 = vmatpush2.bf16.msra.mxu0 0
  %404 = vmatprep.subr.bf16.mxu0 0
  %405 = vmatpush2.bf16.msra.mxu0 0
  %406 = vmatprep.subr.bf16.mxu0 0
  %407 = vmatpush2.bf16.msra.mxu0 0
  %408 = vmatprep.mubr.bf16.mxu0 0
  %409 = vmatmul.mubr.bf16.gmra.mxu0 %v193
  %v410 = vpop.f32.mrf.mxu0
  %v411 = vadd.f32 0.0, %v410
  %v412 = vpop.f32.mrf.mxu0
  %v413 = vadd.f32 0.0, %v412
  %v414 = vpop.f32.mrf.mxu0
  %v415 = vadd.f32 0.0, %v414
  %v416 = vpop.f32.mrf.mxu0
  %v417 = vadd.f32 0.0, %v416
  %418 = vmatprep.mubr.bf16.mxu0 0
  %419 = vmatmul.mubr.bf16.gmra.mxu0 %v196
  %v420 = vpop.f32.mrf.mxu0
  %v421 = vadd.f32 0.0, %v420
  %v422 = vpop.f32.mrf.mxu0
  %v423 = vadd.f32 0.0, %v422
  %v424 = vpop.f32.mrf.mxu0
  %v425 = vadd.f32 0.0, %v424
  %v426 = vpop.f32.mrf.mxu0
  %v427 = vadd.f32 0.0, %v426
  %428 = vmatprep.mubr.bf16.mxu0 0
  %429 = vmatmul.mubr.bf16.gmra.mxu0 %v199
  %v430 = vpop.f32.mrf.mxu0
  %v431 = vadd.f32 0.0, %v430
  %v432 = vpop.f32.mrf.mxu0
  %v433 = vadd.f32 0.0, %v432
  %v434 = vpop.f32.mrf.mxu0
  %v435 = vadd.f32 0.0, %v434
  %v436 = vpop.f32.mrf.mxu0
  %v437 = vadd.f32 0.0, %v436
  %438 = vdwg.mxu0
  %439 = vmatprep.subr.bf16.mxu0 0
  %440 = vmatpush1.bf16.msra.mxu0 0
  %441 = vmatprep.subr.bf16.mxu0 0
  %442 = vmatpush1.bf16.msra.mxu0 0
  %443 = vmatprep.subr.bf16.mxu0 0
  %444 = vmatpush1.bf16.msra.mxu0 0
  %445 = vmatprep.subr.bf16.mxu0 0
  %446 = vmatpush1.bf16.msra.mxu0 0
  %447 = vmatprep.subr.bf16.mxu0 0
  %448 = vmatpush1.bf16.msra.mxu0 0
  %449 = vmatprep.subr.bf16.mxu0 0
  %450 = vmatpush1.bf16.msra.mxu0 0
  %451 = vmatprep.subr.bf16.mxu0 0
  %452 = vmatpush1.bf16.msra.mxu0 0
  %453 = vmatprep.subr.bf16.mxu0 %v224
  %454 = vmatpush1.bf16.msra.mxu0 %v221
  %455 = vmatprep.subr.bf16.mxu0 0
  %456 = vmatpush2.bf16.msra.mxu0 0
  %457 = vmatprep.subr.bf16.mxu0 0
  %458 = vmatpush2.bf16.msra.mxu0 0
  %459 = vmatprep.subr.bf16.mxu0 0
  %460 = vmatpush2.bf16.msra.mxu0 0
  %461 = vmatprep.subr.bf16.mxu0 0
  %462 = vmatpush2.bf16.msra.mxu0 0
  %463 = vmatprep.subr.bf16.mxu0 0
  %464 = vmatpush2.bf16.msra.mxu0 0
  %465 = vmatprep.subr.bf16.mxu0 0
  %466 = vmatpush2.bf16.msra.mxu0 0
  %467 = vmatprep.subr.bf16.mxu0 0
  %468 = vmatpush2.bf16.msra.mxu0 0
  %469 = vmatprep.subr.bf16.mxu0 0
  %470 = vmatpush2.bf16.msra.mxu0 0
  %471 = vmatprep.mubr.bf16.mxu0 0
  %472 = vmatmul.mubr.bf16.gmra.mxu0 %v193
  %v473 = vpop.f32.mrf.mxu0
  %v474 = vadd.f32 0.0, %v473
  %v475 = vpop.f32.mrf.mxu0
  %v476 = vadd.f32 0.0, %v475
  %v477 = vpop.f32.mrf.mxu0
  %v478 = vadd.f32 0.0, %v477
  %v479 = vpop.f32.mrf.mxu0
  %v480 = vadd.f32 0.0, %v479
  %481 = vmatprep.mubr.bf16.mxu0 0
  %482 = vmatmul.mubr.bf16.gmra.mxu0 %v196
  %v483 = vpop.f32.mrf.mxu0
  %v484 = vadd.f32 0.0, %v483
  %v485 = vpop.f32.mrf.mxu0
  %v486 = vadd.f32 0.0, %v485
  %v487 = vpop.f32.mrf.mxu0
  %v488 = vadd.f32 0.0, %v487
  %v489 = vpop.f32.mrf.mxu0
  %v490 = vadd.f32 0.0, %v489
  %491 = vmatprep.mubr.bf16.mxu0 0
  %492 = vmatmul.mubr.bf16.gmra.mxu0 %v199
  %v493 = vpop.f32.mrf.mxu0
  %v494 = vadd.f32 0.0, %v493
  %v495 = vpop.f32.mrf.mxu0
  %v496 = vadd.f32 0.0, %v495
  %v497 = vpop.f32.mrf.mxu0
  %v498 = vadd.f32 0.0, %v497
  %v499 = vpop.f32.mrf.mxu0
  %v500 = vadd.f32 0.0, %v499
  %501 = vdwg.mxu0
  %502 = vmatprep.subr.bf16.mxu0 0
  %503 = vmatpush1.bf16.msra.mxu0 0
  %504 = vmatprep.subr.bf16.mxu0 0
  %505 = vmatpush1.bf16.msra.mxu0 0
  %506 = vmatprep.subr.bf16.mxu0 0
  %507 = vmatpush1.bf16.msra.mxu0 0
  %508 = vmatprep.subr.bf16.mxu0 0
  %509 = vmatpush1.bf16.msra.mxu0 0
  %510 = vmatprep.subr.bf16.mxu0 0
  %511 = vmatpush1.bf16.msra.mxu0 0
  %512 = vmatprep.subr.bf16.mxu0 0
  %513 = vmatpush1.bf16.msra.mxu0 0
  %514 = vmatprep.subr.bf16.mxu0 0
  %515 = vmatpush1.bf16.msra.mxu0 0
  %516 = vmatprep.subr.bf16.mxu0 %v230
  %517 = vmatpush1.bf16.msra.mxu0 %v227
  %518 = vmatprep.subr.bf16.mxu0 0
  %519 = vmatpush2.bf16.msra.mxu0 0
  %520 = vmatprep.subr.bf16.mxu0 0
  %521 = vmatpush2.bf16.msra.mxu0 0
  %522 = vmatprep.subr.bf16.mxu0 0
  %523 = vmatpush2.bf16.msra.mxu0 0
  %524 = vmatprep.subr.bf16.mxu0 0
  %525 = vmatpush2.bf16.msra.mxu0 0
  %526 = vmatprep.subr.bf16.mxu0 0
  %527 = vmatpush2.bf16.msra.mxu0 0
  %528 = vmatprep.subr.bf16.mxu0 0
  %529 = vmatpush2.bf16.msra.mxu0 0
  %530 = vmatprep.subr.bf16.mxu0 0
  %531 = vmatpush2.bf16.msra.mxu0 0
  %532 = vmatprep.subr.bf16.mxu0 0
  %533 = vmatpush2.bf16.msra.mxu0 0
  %534 = vmatprep.mubr.bf16.mxu0 0
  %535 = vmatmul.mubr.bf16.gmra.mxu0 %v193
  %v536 = vpop.f32.mrf.mxu0
  %v537 = vadd.f32 0.0, %v536
  %v538 = vpop.f32.mrf.mxu0
  %v539 = vadd.f32 0.0, %v538
  %v540 = vpop.f32.mrf.mxu0
  %v541 = vadd.f32 0.0, %v540
  %v542 = vpop.f32.mrf.mxu0
  %v543 = vadd.f32 0.0, %v542
  %544 = vmatprep.mubr.bf16.mxu0 0
  %545 = vmatmul.mubr.bf16.gmra.mxu0 %v196
  %v546 = vpop.f32.mrf.mxu0
  %v547 = vadd.f32 0.0, %v546
  %v548 = vpop.f32.mrf.mxu0
  %v549 = vadd.f32 0.0, %v548
  %v550 = vpop.f32.mrf.mxu0
  %v551 = vadd.f32 0.0, %v550
  %v552 = vpop.f32.mrf.mxu0
  %v553 = vadd.f32 0.0, %v552
  %554 = vmatprep.mubr.bf16.mxu0 0
  %555 = vmatmul.mubr.bf16.gmra.mxu0 %v199
  %v556 = vpop.f32.mrf.mxu0
  %v557 = vadd.f32 0.0, %v556
  %v558 = vpop.f32.mrf.mxu0
  %v559 = vadd.f32 0.0, %v558
  %v560 = vpop.f32.mrf.mxu0
  %v561 = vadd.f32 0.0, %v560
  %v562 = vpop.f32.mrf.mxu0
  %v563 = vadd.f32 0.0, %v562
  %564 = vdwg.mxu0
  %565 = vmatprep.subr.bf16.mxu0 0
  %566 = vmatpush1.bf16.msra.mxu0 0
  %567 = vmatprep.subr.bf16.mxu0 0
  %568 = vmatpush1.bf16.msra.mxu0 0
  %569 = vmatprep.subr.bf16.mxu0 0
  %570 = vmatpush1.bf16.msra.mxu0 0
  %571 = vmatprep.subr.bf16.mxu0 0
  %572 = vmatpush1.bf16.msra.mxu0 0
  %573 = vmatprep.subr.bf16.mxu0 0
  %574 = vmatpush1.bf16.msra.mxu0 0
  %575 = vmatprep.subr.bf16.mxu0 0
  %576 = vmatpush1.bf16.msra.mxu0 0
  %577 = vmatprep.subr.bf16.mxu0 0
  %578 = vmatpush1.bf16.msra.mxu0 0
  %579 = vmatprep.subr.bf16.mxu0 %v236
  %580 = vmatpush1.bf16.msra.mxu0 %v233
  %581 = vmatprep.subr.bf16.mxu0 0
  %582 = vmatpush2.bf16.msra.mxu0 0
  %583 = vmatprep.subr.bf16.mxu0 0
  %584 = vmatpush2.bf16.msra.mxu0 0
  %585 = vmatprep.subr.bf16.mxu0 0
  %586 = vmatpush2.bf16.msra.mxu0 0
  %587 = vmatprep.subr.bf16.mxu0 0
  %588 = vmatpush2.bf16.msra.mxu0 0
  %589 = vmatprep.subr.bf16.mxu0 0
  %590 = vmatpush2.bf16.msra.mxu0 0
  %591 = vmatprep.subr.bf16.mxu0 0
  %592 = vmatpush2.bf16.msra.mxu0 0
  %593 = vmatprep.subr.bf16.mxu0 0
  %594 = vmatpush2.bf16.msra.mxu0 0
  %595 = vmatprep.subr.bf16.mxu0 0
  %596 = vmatpush2.bf16.msra.mxu0 0
  %597 = vmatprep.mubr.bf16.mxu0 0
  %598 = vmatmul.mubr.bf16.gmra.mxu0 %v193
  %v599 = vpop.f32.mrf.mxu0
  %v600 = vadd.f32 0.0, %v599
  %v601 = vpop.f32.mrf.mxu0
  %v602 = vadd.f32 0.0, %v601
  %v603 = vpop.f32.mrf.mxu0
  %v604 = vadd.f32 0.0, %v603
  %v605 = vpop.f32.mrf.mxu0
  %v606 = vadd.f32 0.0, %v605
  %607 = vmatprep.mubr.bf16.mxu0 0
  %608 = vmatmul.mubr.bf16.gmra.mxu0 %v196
  %v609 = vpop.f32.mrf.mxu0
  %v610 = vadd.f32 0.0, %v609
  %v611 = vpop.f32.mrf.mxu0
  %v612 = vadd.f32 0.0, %v611
  %v613 = vpop.f32.mrf.mxu0
  %v614 = vadd.f32 0.0, %v613
  %v615 = vpop.f32.mrf.mxu0
  %v616 = vadd.f32 0.0, %v615
  %617 = vmatprep.mubr.bf16.mxu0 0
  %618 = vmatmul.mubr.bf16.gmra.mxu0 %v199
  %v619 = vpop.f32.mrf.mxu0
  %v620 = vadd.f32 0.0, %v619
  %v621 = vpop.f32.mrf.mxu0
  %v622 = vadd.f32 0.0, %v621
  %v623 = vpop.f32.mrf.mxu0
  %v624 = vadd.f32 0.0, %v623
  %v625 = vpop.f32.mrf.mxu0
  %v626 = vadd.f32 0.0, %v625
  %627 = vdwg.mxu0
  %628 = vmatprep.subr.bf16.mxu0 0
  %629 = vmatpush1.bf16.msra.mxu0 0
  %630 = vmatprep.subr.bf16.mxu0 0
  %631 = vmatpush1.bf16.msra.mxu0 0
  %632 = vmatprep.subr.bf16.mxu0 0
  %633 = vmatpush1.bf16.msra.mxu0 0
  %634 = vmatprep.subr.bf16.mxu0 0
  %635 = vmatpush1.bf16.msra.mxu0 0
  %636 = vmatprep.subr.bf16.mxu0 0
  %637 = vmatpush1.bf16.msra.mxu0 0
  %638 = vmatprep.subr.bf16.mxu0 0
  %639 = vmatpush1.bf16.msra.mxu0 0
  %640 = vmatprep.subr.bf16.mxu0 0
  %641 = vmatpush1.bf16.msra.mxu0 0
  %642 = vmatprep.subr.bf16.mxu0 %v242
  %643 = vmatpush1.bf16.msra.mxu0 %v239
  %644 = vmatprep.subr.bf16.mxu0 0
  %645 = vmatpush2.bf16.msra.mxu0 0
  %646 = vmatprep.subr.bf16.mxu0 0
  %647 = vmatpush2.bf16.msra.mxu0 0
  %648 = vmatprep.subr.bf16.mxu0 0
  %649 = vmatpush2.bf16.msra.mxu0 0
  %650 = vmatprep.subr.bf16.mxu0 0
  %651 = vmatpush2.bf16.msra.mxu0 0
  %652 = vmatprep.subr.bf16.mxu0 0
  %653 = vmatpush2.bf16.msra.mxu0 0
  %654 = vmatprep.subr.bf16.mxu0 0
  %655 = vmatpush2.bf16.msra.mxu0 0
  %656 = vmatprep.subr.bf16.mxu0 0
  %657 = vmatpush2.bf16.msra.mxu0 0
  %658 = vmatprep.subr.bf16.mxu0 0
  %659 = vmatpush2.bf16.msra.mxu0 0
  %660 = vmatprep.mubr.bf16.mxu0 0
  %661 = vmatmul.mubr.bf16.gmra.mxu0 %v193
  %v662 = vpop.f32.mrf.mxu0
  %v663 = vadd.f32 0.0, %v662
  %v664 = vpop.f32.mrf.mxu0
  %v665 = vadd.f32 0.0, %v664
  %v666 = vpop.f32.mrf.mxu0
  %v667 = vadd.f32 0.0, %v666
  %v668 = vpop.f32.mrf.mxu0
  %v669 = vadd.f32 0.0, %v668
  %670 = vmatprep.mubr.bf16.mxu0 0
  %671 = vmatmul.mubr.bf16.gmra.mxu0 %v196
  %v672 = vpop.f32.mrf.mxu0
  %v673 = vadd.f32 0.0, %v672
  %v674 = vpop.f32.mrf.mxu0
  %v675 = vadd.f32 0.0, %v674
  %v676 = vpop.f32.mrf.mxu0
  %v677 = vadd.f32 0.0, %v676
  %v678 = vpop.f32.mrf.mxu0
  %v679 = vadd.f32 0.0, %v678
  %680 = vmatprep.mubr.bf16.mxu0 0
  %681 = vmatmul.mubr.bf16.gmra.mxu0 %v199
  %v682 = vpop.f32.mrf.mxu0
  %v683 = vadd.f32 0.0, %v682
  %v684 = vpop.f32.mrf.mxu0
  %v685 = vadd.f32 0.0, %v684
  %v686 = vpop.f32.mrf.mxu0
  %v687 = vadd.f32 0.0, %v686
  %v688 = vpop.f32.mrf.mxu0
  %v689 = vadd.f32 0.0, %v688
  %690 = vdwg.mxu0
  %691 = vmatprep.subr.bf16.mxu0 0
  %692 = vmatpush1.bf16.msra.mxu0 0
  %693 = vmatprep.subr.bf16.mxu0 0
  %694 = vmatpush1.bf16.msra.mxu0 0
  %695 = vmatprep.subr.bf16.mxu0 0
  %696 = vmatpush1.bf16.msra.mxu0 0
  %697 = vmatprep.subr.bf16.mxu0 0
  %698 = vmatpush1.bf16.msra.mxu0 0
  %699 = vmatprep.subr.bf16.mxu0 0
  %700 = vmatpush1.bf16.msra.mxu0 0
  %701 = vmatprep.subr.bf16.mxu0 0
  %702 = vmatpush1.bf16.msra.mxu0 0
  %703 = vmatprep.subr.bf16.mxu0 0
  %704 = vmatpush1.bf16.msra.mxu0 0
  %705 = vmatprep.subr.bf16.mxu0 %v248
  %706 = vmatpush1.bf16.msra.mxu0 %v245
  %707 = vmatprep.subr.bf16.mxu0 0
  %708 = vmatpush2.bf16.msra.mxu0 0
  %709 = vmatprep.subr.bf16.mxu0 0
  %710 = vmatpush2.bf16.msra.mxu0 0
  %711 = vmatprep.subr.bf16.mxu0 0
  %712 = vmatpush2.bf16.msra.mxu0 0
  %713 = vmatprep.subr.bf16.mxu0 0
  %714 = vmatpush2.bf16.msra.mxu0 0
  %715 = vmatprep.subr.bf16.mxu0 0
  %716 = vmatpush2.bf16.msra.mxu0 0
  %717 = vmatprep.subr.bf16.mxu0 0
  %718 = vmatpush2.bf16.msra.mxu0 0
  %719 = vmatprep.subr.bf16.mxu0 0
  %720 = vmatpush2.bf16.msra.mxu0 0
  %721 = vmatprep.subr.bf16.mxu0 0
  %722 = vmatpush2.bf16.msra.mxu0 0
  %723 = vmatprep.mubr.bf16.mxu0 0
  %724 = vmatmul.mubr.bf16.gmra.mxu0 %v193
  %v725 = vpop.f32.mrf.mxu0
  %v726 = vadd.f32 0.0, %v725
  %v727 = vpop.f32.mrf.mxu0
  %v728 = vadd.f32 0.0, %v727
  %v729 = vpop.f32.mrf.mxu0
  %v730 = vadd.f32 0.0, %v729
  %v731 = vpop.f32.mrf.mxu0
  %v732 = vadd.f32 0.0, %v731
  %733 = vmatprep.mubr.bf16.mxu0 0
  %734 = vmatmul.mubr.bf16.gmra.mxu0 %v196
  %v735 = vpop.f32.mrf.mxu0
  %v736 = vadd.f32 0.0, %v735
  %v737 = vpop.f32.mrf.mxu0
  %v738 = vadd.f32 0.0, %v737
  %v739 = vpop.f32.mrf.mxu0
  %v740 = vadd.f32 0.0, %v739
  %v741 = vpop.f32.mrf.mxu0
  %v742 = vadd.f32 0.0, %v741
  %743 = vmatprep.mubr.bf16.mxu0 0
  %744 = vmatmul.mubr.bf16.gmra.mxu0 %v199
  %v745 = vpop.f32.mrf.mxu0
  %v746 = vadd.f32 0.0, %v745
  %v747 = vpop.f32.mrf.mxu0
  %v748 = vadd.f32 0.0, %v747
  %v749 = vpop.f32.mrf.mxu0
  %v750 = vadd.f32 0.0, %v749
  %v751 = vpop.f32.mrf.mxu0
  %v752 = vadd.f32 0.0, %v751
  %753 = vdwg.mxu0
  %754 = vst [vmem:[%s4] sm:$0xff] %v285
  %755 = vst [vmem:[%s4 + $0x8] sm:$0xff] %v287
  %756 = vst [vmem:[%s4 + $0x10] sm:$0xff] %v348
  %757 = vst [vmem:[%s4 + $0x18] sm:$0xff] %v350
  %758 = vst [vmem:[%s4 + $0x20] sm:$0xff] %v411
  %759 = vst [vmem:[%s4 + $0x28] sm:$0xff] %v413
  %760 = vst [vmem:[%s4 + $0x30] sm:$0xff] %v474
  %761 = vst [vmem:[%s4 + $0x38] sm:$0xff] %v476
  %762 = vst [vmem:[%s4 + $0x40] sm:$0xff] %v537
  %763 = vst [vmem:[%s4 + $0x48] sm:$0xff] %v539
  %764 = vst [vmem:[%s4 + $0x50] sm:$0xff] %v600
  %765 = vst [vmem:[%s4 + $0x58] sm:$0xff] %v602
  %766 = vst [vmem:[%s4 + $0x60] sm:$0xff] %v663
  %767 = vst [vmem:[%s4 + $0x68] sm:$0xff] %v665
  %768 = vst [vmem:[%s4 + $0x70] sm:$0xff] %v726
  %769 = vst [vmem:[%s4 + $0x78] sm:$0xff] %v728
  %770 = vst [vmem:[%s4 + $0x80] sm:$0xff] %v289
  %771 = vst [vmem:[%s4 + $0x88] sm:$0xff] %v291
  %772 = vst [vmem:[%s4 + $0x90] sm:$0xff] %v352
  %773 = vst [vmem:[%s4 + $0x98] sm:$0xff] %v354
  %774 = vst [vmem:[%s4 + $0xa0] sm:$0xff] %v415
  %775 = vst [vmem:[%s4 + $0xa8] sm:$0xff] %v417
  %776 = vst [vmem:[%s4 + $0xb0] sm:$0xff] %v478
  %777 = vst [vmem:[%s4 + $0xb8] sm:$0xff] %v480
  %778 = vst [vmem:[%s4 + $0xc0] sm:$0xff] %v541
  %779 = vst [vmem:[%s4 + $0xc8] sm:$0xff] %v543
  %780 = vst [vmem:[%s4 + $0xd0] sm:$0xff] %v604
  %781 = vst [vmem:[%s4 + $0xd8] sm:$0xff] %v606
  %782 = vst [vmem:[%s4 + $0xe0] sm:$0xff] %v667
  %783 = vst [vmem:[%s4 + $0xe8] sm:$0xff] %v669
  %784 = vst [vmem:[%s4 + $0xf0] sm:$0xff] %v730
  %785 = vst [vmem:[%s4 + $0xf8] sm:$0xff] %v732
  %786 = vst [vmem:[%s4 + $0x100] sm:$0xff] %v295
  %787 = vst [vmem:[%s4 + $0x108] sm:$0xff] %v297
  %788 = vst [vmem:[%s4 + $0x110] sm:$0xff] %v358
  %789 = vst [vmem:[%s4 + $0x118] sm:$0xff] %v360
  %790 = vst [vmem:[%s4 + $0x120] sm:$0xff] %v421
  %791 = vst [vmem:[%s4 + $0x128] sm:$0xff] %v423
  %792 = vst [vmem:[%s4 + $0x130] sm:$0xff] %v484
  %793 = vst [vmem:[%s4 + $0x138] sm:$0xff] %v486
  %794 = vst [vmem:[%s4 + $0x140] sm:$0xff] %v547
  %795 = vst [vmem:[%s4 + $0x148] sm:$0xff] %v549
  %796 = vst [vmem:[%s4 + $0x150] sm:$0xff] %v610
  %797 = vst [vmem:[%s4 + $0x158] sm:$0xff] %v612
  %798 = vst [vmem:[%s4 + $0x160] sm:$0xff] %v673
  %799 = vst [vmem:[%s4 + $0x168] sm:$0xff] %v675
  %800 = vst [vmem:[%s4 + $0x170] sm:$0xff] %v736
  %801 = vst [vmem:[%s4 + $0x178] sm:$0xff] %v738
  %802 = vst [vmem:[%s4 + $0x180] sm:$0xff] %v299
  %803 = vst [vmem:[%s4 + $0x188] sm:$0xff] %v301
  %804 = vst [vmem:[%s4 + $0x190] sm:$0xff] %v362
  %805 = vst [vmem:[%s4 + $0x198] sm:$0xff] %v364
  %806 = vst [vmem:[%s4 + $0x1a0] sm:$0xff] %v425
  %807 = vst [vmem:[%s4 + $0x1a8] sm:$0xff] %v427
  %808 = vst [vmem:[%s4 + $0x1b0] sm:$0xff] %v488
  %809 = vst [vmem:[%s4 + $0x1b8] sm:$0xff] %v490
  %810 = vst [vmem:[%s4 + $0x1c0] sm:$0xff] %v551
  %811 = vst [vmem:[%s4 + $0x1c8] sm:$0xff] %v553
  %812 = vst [vmem:[%s4 + $0x1d0] sm:$0xff] %v614
  %813 = vst [vmem:[%s4 + $0x1d8] sm:$0xff] %v616
  %814 = vst [vmem:[%s4 + $0x1e0] sm:$0xff] %v677
  %815 = vst [vmem:[%s4 + $0x1e8] sm:$0xff] %v679
  %816 = vst [vmem:[%s4 + $0x1f0] sm:$0xff] %v740
  %817 = vst [vmem:[%s4 + $0x1f8] sm:$0xff] %v742
  %818 = vst [vmem:[%s4 + $0x200] sm:$0xff] %v305
  %819 = vst [vmem:[%s4 + $0x208] sm:$0xff] %v307
  %820 = vst [vmem:[%s4 + $0x210] sm:$0xff] %v368
  %821 = vst [vmem:[%s4 + $0x218] sm:$0xff] %v370
  %822 = vst [vmem:[%s4 + $0x220] sm:$0xff] %v431
  %823 = vst [vmem:[%s4 + $0x228] sm:$0xff] %v433
  %824 = vst [vmem:[%s4 + $0x230] sm:$0xff] %v494
  %825 = vst [vmem:[%s4 + $0x238] sm:$0xff] %v496
  %826 = vst [vmem:[%s4 + $0x240] sm:$0xff] %v557
  %827 = vst [vmem:[%s4 + $0x248] sm:$0xff] %v559
  %828 = vst [vmem:[%s4 + $0x250] sm:$0xff] %v620
  %829 = vst [vmem:[%s4 + $0x258] sm:$0xff] %v622
  %830 = vst [vmem:[%s4 + $0x260] sm:$0xff] %v683
  %831 = vst [vmem:[%s4 + $0x268] sm:$0xff] %v685
  %832 = vst [vmem:[%s4 + $0x270] sm:$0xff] %v746
  %833 = vst [vmem:[%s4 + $0x278] sm:$0xff] %v748
  %834 = vst [vmem:[%s4 + $0x280] sm:$0xff] %v309
  %835 = vst [vmem:[%s4 + $0x288] sm:$0xff] %v311
  %836 = vst [vmem:[%s4 + $0x290] sm:$0xff] %v372
  %837 = vst [vmem:[%s4 + $0x298] sm:$0xff] %v374
  %838 = vst [vmem:[%s4 + $0x2a0] sm:$0xff] %v435
  %839 = vst [vmem:[%s4 + $0x2a8] sm:$0xff] %v437
  %840 = vst [vmem:[%s4 + $0x2b0] sm:$0xff] %v498
  %841 = vst [vmem:[%s4 + $0x2b8] sm:$0xff] %v500
  %842 = vst [vmem:[%s4 + $0x2c0] sm:$0xff] %v561
  %843 = vst [vmem:[%s4 + $0x2c8] sm:$0xff] %v563
  %844 = vst [vmem:[%s4 + $0x2d0] sm:$0xff] %v624
  %845 = vst [vmem:[%s4 + $0x2d8] sm:$0xff] %v626
  %846 = vst [vmem:[%s4 + $0x2e0] sm:$0xff] %v687
  %847 = vst [vmem:[%s4 + $0x2e8] sm:$0xff] %v689
  %848 = vst [vmem:[%s4 + $0x2f0] sm:$0xff] %v750
  %849 = vst [vmem:[%s4 + $0x2f8] sm:$0xff] %v752
  // Predicated region
  $region18: #{generator_forward.9} parent=0 // pred_check
    _
  $region19: #{generator_forward.9} parent=0 // pred_check_branch
    %851 = sbr.rel (0) target = $region21
  $region20: #{generator_forward.9} parent=0 // pred_region
    _
  $region21: #{generator_forward.9} parent=0 // pred_fallthru
    _
  // Predicated region
  $region22: #{generator_forward.9} parent=0 // pred_check
    _
  $region23: #{generator_forward.9} parent=0 // pred_check_branch
    %853 = sbr.rel (0) target = $region25
  $region24: #{generator_forward.9} parent=0 // pred_region
    _
  $region25: #{generator_forward.9} parent=0 // pred_fallthru
    _

</llo_original>
